<compile_context>
chip_gen: v7x
topology: tpu7x:2x2x1
jax: 0.10.0
libtpu: 0.0.40
codegen_flags: <defaults>
</compile_context>

<pallas_src>
import jax
import jax.numpy as jnp
from jax import lax
from jax.experimental import pallas as pl
from jax.experimental.pallas import tpu as pltpu

CPAD = 128             # channels padded to one full lane tile -> lane-dense stores
CONV_TILE_ROWS = 1024  # pool-output rows per conv grid step


# ----------------------------------------------------------------------------
# Pallas kernels
# ----------------------------------------------------------------------------
def _conv_pool_kernel(p_ref, w_ref, b_ref, o_ref):
    """Fused conv + bias + 2x2 max-pool + ReLU for one tile of pool outputs.

    p_ref: (TB, K)     bf16  stride-2 patches (full 2x2-pool receptive field)
    w_ref: (4, K, 128) bf16  5x5 conv weight embedded at the 4 pool offsets
    b_ref: (1, 128)    f32   bias (zero beyond the real output channels)
    o_ref: (TB, 128)   bf16  ReLU(max_d(conv_d) + bias), lane-dense
    """
    x = p_ref[...]
    acc = jnp.dot(x, w_ref[0], preferred_element_type=jnp.float32)
    for d in range(1, w_ref.shape[0]):
        acc = jnp.maximum(
            acc, jnp.dot(x, w_ref[d], preferred_element_type=jnp.float32))
    o_ref[...] = jnp.maximum(acc + b_ref[...], 0.0).astype(o_ref.dtype)


def _head_kernel(x_ref, w1_ref, b1_ref, w2_ref, b2_ref, o_ref):
    """Fused fc1 + ReLU + fc2 + log_softmax(dim=0) on the whole batch."""
    h = jnp.dot(x_ref[...], w1_ref[...], preferred_element_type=jnp.float32)
    h = jnp.maximum(h + b1_ref[...], 0.0)
    # TODO(synk): F.dropout(p=0.1) is stochastic in training mode; eval-mode identity.
    logits = jnp.dot(h.astype(w2_ref.dtype), w2_ref[...],
                     preferred_element_type=jnp.float32) + b2_ref[...]
    m = jnp.max(logits, axis=0, keepdims=True)            # dim=0, as in the reference
    lse = m + jnp.log(jnp.sum(jnp.exp(logits - m), axis=0, keepdims=True))
    o_ref[...] = (logits - lse).astype(o_ref.dtype)


# ----------------------------------------------------------------------------
# pallas_call wrappers
# ----------------------------------------------------------------------------
def _conv_pool(patches, w, b):
    """patches: (M, K) bf16, w: (4, K, 128) bf16, b: (1, 128) f32 -> (M, 128) bf16."""
    m, k = patches.shape
    tb = min(CONV_TILE_ROWS, m)          # m is always a multiple of 16 here
    return pl.pallas_call(
        _conv_pool_kernel,
        out_shape=jax.ShapeDtypeStruct((m, CPAD), jnp.bfloat16),
        grid_spec=pltpu.PrefetchScalarGridSpec(
            num_scalar_prefetch=0,
            grid=(pl.cdiv(m, tb),),
            in_specs=[
                pl.BlockSpec((tb, k), lambda i: (i, 0)),
                pl.BlockSpec(w.shape, lambda i: (0, 0, 0)),   # weights VMEM-resident
                pl.BlockSpec(b.shape, lambda i: (0, 0)),
            ],
            out_specs=pl.BlockSpec((tb, CPAD), lambda i: (i, 0)),
        ),
        compiler_params=pltpu.CompilerParams(
            dimension_semantics=("parallel",)),  # megacore on v7x; harmless on v5e/v6e
    )(patches, w, b)


_WHOLE_VMEM = pl.BlockSpec(memory_space=pltpu.MemorySpace.VMEM)


def _head(x, w1, b1, w2, b2):
    """Whole batch in one VMEM block: log_softmax(dim=0) couples all batch rows."""
    n = x.shape[0]
    return pl.pallas_call(
        _head_kernel,
        out_shape=jax.ShapeDtypeStruct((n, CPAD), jnp.float32),
        in_specs=[_WHOLE_VMEM] * 5,
        out_specs=_WHOLE_VMEM,
    )(x, w1, b1, w2, b2)


# ----------------------------------------------------------------------------
# Glue: stride-2 patch gather (single fused XLA op, ordering under our control)
# ----------------------------------------------------------------------------
def _pool_patches(x, wh, ww):
    """x: (N, H, W, C) -> (N, Ho, Wo, C*wh*ww) stride-2 patches.

    Feature order is (c, i, j) with the input channel slowest, matching the
    PyTorch (out, in, kh, kw) conv-weight flattening used in pack_params.
    """
    c = x.shape[-1]
    s = wh * ww
    eye = jnp.eye(s, dtype=x.dtype).reshape(wh, ww, 1, s)
    rhs = jnp.tile(eye, (1, 1, 1, c))        # identical identity block per channel group
    return lax.conv_general_dilated(
        x, rhs, window_strides=(2, 2), padding="VALID",
        dimension_numbers=("NHWC", "HWIO", "NHWC"),
        feature_group_count=c)


# ----------------------------------------------------------------------------
# Forward pass
# ----------------------------------------------------------------------------
def net_forward(x_nchw, params):
    """x_nchw: (N, 1, 28, 28) f32 -> (N, 10) f32 log-softmax over dim 0."""
    w1e, b1e, w2e, b2e, wfc1e, bfc1e, wfc2e, bfc2e = params
    n = x_nchw.shape[0]

    # NCHW -> NHWC once; bf16 activations (f32 accumulation inside the kernels).
    x = jnp.transpose(x_nchw, (0, 2, 3, 1)).astype(jnp.bfloat16)       # (N,28,28,1)
    # Pad H 28->30 so the 8x6 pool-window patches give K=48 (8-aligned) for free;
    # the padded rows only ever meet zero entries of the embedded weights.
    x = jnp.pad(x, ((0, 0), (0, 2), (0, 0), (0, 0)))

    # conv1 (1->10, k=5) + maxpool2 + relu  — one fused Pallas call.
    p1 = _pool_patches(x, 8, 6)                                        # (N,12,12,48)
    y1 = _conv_pool(p1.reshape(n * 144, 48), w1e, b1e)                 # (N*144,128)

    # conv2 (10->20, k=5) + dropout2d + maxpool2 + relu — one fused Pallas call.
    # TODO(synk): Dropout2d(p=0.1) is stochastic in training mode; eval-mode identity.
    y1 = y1.reshape(n, 12, 12, CPAD)[..., :10]                         # real channels only
    p2 = _pool_patches(y1, 6, 6)                                       # (N,4,4,360)
    y2 = _conv_pool(p2.reshape(n * 16, 360), w2e, b2e)                 # (N*16,128)

    # fc1 + relu + fc2 + log_softmax(dim=0) — one fused Pallas call.  The PyTorch
    # flatten order and the 128-channel padding are folded into wfc1e.
    out = _head(y2.reshape(n, 16 * CPAD), wfc1e, bfc1e, wfc2e, bfc2e)  # (N,128) f32
    return out[:, :10]


# ----------------------------------------------------------------------------
# Parameters: PyTorch layouts -> kernel layouts (one-time, free at init)
# ----------------------------------------------------------------------------
def _embed_pool_conv_weight(w, wh, ww):
    """(Cout, Cin, 5, 5) -> (4, Cin*wh*ww, 128): the 5x5 kernel placed at the 4
    pool-candidate offsets (dy, dx) inside the stride-2 patch window; output
    channels zero-padded to 128."""
    cout, cin, kh, kw = w.shape
    wt = jnp.transpose(w, (1, 2, 3, 0))                    # (Cin, kh, kw, Cout)
    e = jnp.zeros((4, cin, wh, ww, CPAD), w.dtype)
    for d, (dy, dx) in enumerate(((0, 0), (0, 1), (1, 0), (1, 1))):
        e = e.at[d, :, dy:dy + kh, dx:dx + kw, :cout].set(wt)
    return e.reshape(4, cin * wh * ww, CPAD)


def _pad_bias(b):
    return jnp.zeros((1, CPAD), jnp.float32).at[0, :b.shape[0]].set(b)


def pack_params(w1, b1, w2, b2, wfc1, bfc1, wfc2, bfc2):
    """One-time transform of PyTorch-layout parameters into kernel layouts."""
    w1e = _embed_pool_conv_weight(w1, 8, 6).astype(jnp.bfloat16)       # (4, 48, 128)
    w2e = _embed_pool_conv_weight(w2, 6, 6).astype(jnp.bfloat16)       # (4, 360, 128)
    # fc1: fold the PyTorch (C=20, H=4, W=4) flatten order and the 128-channel
    # padding of the conv2 output into the weight: kernel row index = p*128 + c.
    wf1 = jnp.transpose(wfc1.reshape(50, 20, 16), (2, 1, 0))           # (p, c, o)
    wfc1e = jnp.zeros((16, CPAD, CPAD), jnp.float32).at[:, :20, :50].set(wf1)
    wfc1e = wfc1e.reshape(16 * CPAD, CPAD).astype(jnp.bfloat16)        # (2048, 128)
    wfc2e = jnp.zeros((CPAD, CPAD), jnp.float32).at[:50, :10].set(wfc2.T)
    wfc2e = wfc2e.astype(jnp.bfloat16)                                 # (128, 128)
    return (w1e, _pad_bias(b1), w2e, _pad_bias(b2),
            wfc1e, _pad_bias(bfc1), wfc2e, _pad_bias(bfc2))


def init_params(key):
    ks = jax.random.split(key, 8)
    s = 0.1
    w1 = s * jax.random.normal(ks[0], (10, 1, 5, 5), jnp.float32)   # PyTorch layouts
    b1 = s * jax.random.normal(ks[1], (10,), jnp.float32)
    w2 = s * jax.random.normal(ks[2], (20, 10, 5, 5), jnp.float32)
    b2 = s * jax.random.normal(ks[3], (20,), jnp.float32)
    wfc1 = s * jax.random.normal(ks[4], (50, 320), jnp.float32)
    bfc1 = s * jax.random.normal(ks[5], (50,), jnp.float32)
    wfc2 = s * jax.random.normal(ks[6], (10, 50), jnp.float32)
    bfc2 = s * jax.random.normal(ks[7], (10,), jnp.float32)
    return pack_params(w1, b1, w2, b2, wfc1, bfc1, wfc2, bfc2)


if __name__ == "__main__":
    key = jax.random.PRNGKey(0)
    k_x, k_p = jax.random.split(key)
    # fc1 = Linear(320, 50) pins the input to 1x28x28 single channel; batch=2.
    x = jax.random.normal(k_x, (2, 1, 28, 28), jnp.float32)
    params = init_params(k_p)

    out = jax.jit(net_forward)(x, params)
    out = jax.block_until_ready(out)
    assert out.shape == (2, 10) and out.dtype == jnp.float32
    print("KERNEL_OK")
</pallas_src>

<mosaic_0001>
module attributes {stable_mosaic.version = 11 : i64} {
  func.func @_conv_pool_kernel(%arg0: i32, %arg1: memref<288x48xbf16, #tpu.memory_space<vmem>>, %arg2: memref<4x48x128xbf16, #tpu.memory_space<vmem>>, %arg3: memref<1x128xf32, #tpu.memory_space<vmem>>, %arg4: memref<288x128xbf16, #tpu.memory_space<vmem>>) attributes {dimension_semantics = [#tpu.dimension_semantics<parallel>], iteration_bounds = array<i64: 1>, scalar_prefetch = 0 : i64, scratch_operands = 0 : i64, tpu.core_type = #tpu.core_type<tc>, window_params = [{transform_indices = @transform_0, window_bounds = array<i64: 288, 48>}, {pipeline_mode = #tpu.pipeline_mode<synchronous>, transform_indices = @transform_1, window_bounds = array<i64: 4, 48, 128>}, {pipeline_mode = #tpu.pipeline_mode<synchronous>, transform_indices = @transform_2, window_bounds = array<i64: 1, 128>}, {transform_indices = @transform_3, window_bounds = array<i64: 288, 128>}]} {
    %c0 = arith.constant 0 : index
    %c0_0 = arith.constant 0 : index
    %0 = vector.load %arg1[%c0, %c0_0] : memref<288x48xbf16, #tpu.memory_space<vmem>>, vector<288x48xbf16>
    %c0_1 = arith.constant 0 : index
    %c0_2 = arith.constant 0 : index
    %c0_3 = arith.constant 0 : index
    %1 = vector.load %arg2[%c0_1, %c0_2, %c0_3] : memref<4x48x128xbf16, #tpu.memory_space<vmem>>, vector<1x48x128xbf16>
    %2 = vector.shape_cast %1 : vector<1x48x128xbf16> to vector<48x128xbf16>
    %cst = arith.constant dense<0.000000e+00> : vector<288x128xf32>
    %3 = tpu.matmul %0, %2, %cst {dimension_numbers = #tpu.dot_dimension_numbers<[1], [0], [0], [1], [0, 0, 1, 1], [], []>} : vector<288x48xbf16>, vector<48x128xbf16>, vector<288x128xf32> -> vector<288x128xf32>
    %c1 = arith.constant 1 : index
    %c0_4 = arith.constant 0 : index
    %c0_5 = arith.constant 0 : index
    %4 = vector.load %arg2[%c1, %c0_4, %c0_5] : memref<4x48x128xbf16, #tpu.memory_space<vmem>>, vector<1x48x128xbf16>
    %5 = vector.shape_cast %4 : vector<1x48x128xbf16> to vector<48x128xbf16>
    %cst_6 = arith.constant dense<0.000000e+00> : vector<288x128xf32>
    %6 = tpu.matmul %0, %5, %cst_6 {dimension_numbers = #tpu.dot_dimension_numbers<[1], [0], [0], [1], [0, 0, 1, 1], [], []>} : vector<288x48xbf16>, vector<48x128xbf16>, vector<288x128xf32> -> vector<288x128xf32>
    %7 = arith.maximumf %3, %6 : vector<288x128xf32>
    %c2 = arith.constant 2 : index
    %c0_7 = arith.constant 0 : index
    %c0_8 = arith.constant 0 : index
    %8 = vector.load %arg2[%c2, %c0_7, %c0_8] : memref<4x48x128xbf16, #tpu.memory_space<vmem>>, vector<1x48x128xbf16>
    %9 = vector.shape_cast %8 : vector<1x48x128xbf16> to vector<48x128xbf16>
    %cst_9 = arith.constant dense<0.000000e+00> : vector<288x128xf32>
    %10 = tpu.matmul %0, %9, %cst_9 {dimension_numbers = #tpu.dot_dimension_numbers<[1], [0], [0], [1], [0, 0, 1, 1], [], []>} : vector<288x48xbf16>, vector<48x128xbf16>, vector<288x128xf32> -> vector<288x128xf32>
    %11 = arith.maximumf %7, %10 : vector<288x128xf32>
    %c3 = arith.constant 3 : index
    %c0_10 = arith.constant 0 : index
    %c0_11 = arith.constant 0 : index
    %12 = vector.load %arg2[%c3, %c0_10, %c0_11] : memref<4x48x128xbf16, #tpu.memory_space<vmem>>, vector<1x48x128xbf16>
    %13 = vector.shape_cast %12 : vector<1x48x128xbf16> to vector<48x128xbf16>
    %cst_12 = arith.constant dense<0.000000e+00> : vector<288x128xf32>
    %14 = tpu.matmul %0, %13, %cst_12 {dimension_numbers = #tpu.dot_dimension_numbers<[1], [0], [0], [1], [0, 0, 1, 1], [], []>} : vector<288x48xbf16>, vector<48x128xbf16>, vector<288x128xf32> -> vector<288x128xf32>
    %15 = arith.maximumf %11, %14 : vector<288x128xf32>
    %c0_13 = arith.constant 0 : index
    %c0_14 = arith.constant 0 : index
    %16 = vector.load %arg3[%c0_13, %c0_14] : memref<1x128xf32, #tpu.memory_space<vmem>>, vector<1x128xf32>
    %17 = vector.broadcast %16 : vector<1x128xf32> to vector<288x128xf32>
    %18 = arith.addf %15, %17 : vector<288x128xf32>
    %cst_15 = arith.constant 0.000000e+00 : f32
    %19 = vector.broadcast %cst_15 : f32 to vector<288x128xf32>
    %20 = arith.maximumf %18, %19 : vector<288x128xf32>
    %21 = arith.truncf %20 : vector<288x128xf32> to vector<288x128xbf16>
    %c0_16 = arith.constant 0 : index
    %c0_17 = arith.constant 0 : index
    %22 = vector.load %arg4[%c0_16, %c0_17] : memref<288x128xbf16, #tpu.memory_space<vmem>>, vector<288x128xbf16>
    tpu.vector_store %arg4[%c0_16, %c0_17], %21 {strides = array<i32>} : memref<288x128xbf16, #tpu.memory_space<vmem>>, vector<288x128xbf16>,
    return
  }
  func.func @transform_0(%arg0: i32) -> (i32, i32) {
    %c0_i32 = arith.constant 0 : i32
    %c0_i32_0 = arith.constant 0 : i32
    return %arg0, %c0_i32 : i32, i32
  }
  func.func @transform_1(%arg0: i32) -> (i32, i32, i32) {
    %c0_i32 = arith.constant 0 : i32
    %c0_i32_0 = arith.constant 0 : i32
    %c0_i32_1 = arith.constant 0 : i32
    %c0_i32_2 = arith.constant 0 : i32
    return %c0_i32, %c0_i32_0, %c0_i32_1 : i32, i32, i32
  }
  func.func @transform_2(%arg0: i32) -> (i32, i32) {
    %c0_i32 = arith.constant 0 : i32
    %c0_i32_0 = arith.constant 0 : i32
    %c0_i32_1 = arith.constant 0 : i32
    return %c0_i32, %c0_i32_0 : i32, i32
  }
  func.func @transform_3(%arg0: i32) -> (i32, i32) {
    %c0_i32 = arith.constant 0 : i32
    %c0_i32_0 = arith.constant 0 : i32
    return %arg0, %c0_i32 : i32, i32
  }
}

module attributes {stable_mosaic.version = 11 : i64} {
  func.func @_head_kernel(%arg0: memref<2x2048xbf16, #tpu.memory_space<vmem>>, %arg1: memref<2048x128xbf16, #tpu.memory_space<vmem>>, %arg2: memref<1x128xf32, #tpu.memory_space<vmem>>, %arg3: memref<128x128xbf16, #tpu.memory_space<vmem>>, %arg4: memref<1x128xf32, #tpu.memory_space<vmem>>, %arg5: memref<2x128xf32, #tpu.memory_space<vmem>>) attributes {dimension_semantics = [], scalar_prefetch = 0 : i64, scratch_operands = 0 : i64, tpu.core_type = #tpu.core_type<tc>} {
    %c0 = arith.constant 0 : index
    %c0_0 = arith.constant 0 : index
    %0 = vector.load %arg0[%c0, %c0_0] : memref<2x2048xbf16, #tpu.memory_space<vmem>>, vector<2x2048xbf16>
    %c0_1 = arith.constant 0 : index
    %c0_2 = arith.constant 0 : index
    %1 = vector.load %arg1[%c0_1, %c0_2] : memref<2048x128xbf16, #tpu.memory_space<vmem>>, vector<2048x128xbf16>
    %cst = arith.constant dense<0.000000e+00> : vector<2x128xf32>
    %2 = tpu.matmul %0, %1, %cst {dimension_numbers = #tpu.dot_dimension_numbers<[1], [0], [0], [1], [0, 0, 1, 1], [], []>} : vector<2x2048xbf16>, vector<2048x128xbf16>, vector<2x128xf32> -> vector<2x128xf32>
    %c0_3 = arith.constant 0 : index
    %c0_4 = arith.constant 0 : index
    %3 = vector.load %arg2[%c0_3, %c0_4] : memref<1x128xf32, #tpu.memory_space<vmem>>, vector<1x128xf32>
    %4 = vector.broadcast %3 : vector<1x128xf32> to vector<2x128xf32>
    %5 = arith.addf %2, %4 : vector<2x128xf32>
    %cst_5 = arith.constant 0.000000e+00 : f32
    %6 = vector.broadcast %cst_5 : f32 to vector<2x128xf32>
    %7 = arith.maximumf %5, %6 : vector<2x128xf32>
    %8 = arith.truncf %7 : vector<2x128xf32> to vector<2x128xbf16>
    %c0_6 = arith.constant 0 : index
    %c0_7 = arith.constant 0 : index
    %9 = vector.load %arg3[%c0_6, %c0_7] : memref<128x128xbf16, #tpu.memory_space<vmem>>, vector<128x128xbf16>
    %cst_8 = arith.constant dense<0.000000e+00> : vector<2x128xf32>
    %10 = tpu.matmul %8, %9, %cst_8 {dimension_numbers = #tpu.dot_dimension_numbers<[1], [0], [0], [1], [0, 0, 1, 1], [], []>} : vector<2x128xbf16>, vector<128x128xbf16>, vector<2x128xf32> -> vector<2x128xf32>
    %c0_9 = arith.constant 0 : index
    %c0_10 = arith.constant 0 : index
    %11 = vector.load %arg4[%c0_9, %c0_10] : memref<1x128xf32, #tpu.memory_space<vmem>>, vector<1x128xf32>
    %12 = vector.broadcast %11 : vector<1x128xf32> to vector<2x128xf32>
    %13 = arith.addf %10, %12 : vector<2x128xf32>
    %cst_11 = arith.constant dense<0xFF800000> : vector<128xf32>
    %14 = vector.multi_reduction <maximumf>, %13, %cst_11 [0] : vector<2x128xf32> to vector<128xf32>
    %15 = vector.shape_cast %14 : vector<128xf32> to vector<1x128xf32>
    %16 = vector.broadcast %15 : vector<1x128xf32> to vector<2x128xf32>
    %17 = arith.subf %13, %16 : vector<2x128xf32>
    %18 = math.exp %17 : vector<2x128xf32>
    %cst_12 = arith.constant dense<0.000000e+00> : vector<128xf32>
    %19 = vector.multi_reduction <add>, %18, %cst_12 [0] : vector<2x128xf32> to vector<128xf32>
    %20 = vector.shape_cast %19 : vector<128xf32> to vector<1x128xf32>
    %21 = math.log %20 : vector<1x128xf32>
    %22 = arith.addf %15, %21 : vector<1x128xf32>
    %23 = vector.broadcast %22 : vector<1x128xf32> to vector<2x128xf32>
    %24 = arith.subf %13, %23 : vector<2x128xf32>
    %c0_13 = arith.constant 0 : index
    %c0_14 = arith.constant 0 : index
    %25 = vector.load %arg5[%c0_13, %c0_14] : memref<2x128xf32, #tpu.memory_space<vmem>>, vector<2x128xf32>
    tpu.vector_store %arg5[%c0_13, %c0_14], %24 {strides = array<i32>} : memref<2x128xf32, #tpu.memory_space<vmem>>, vector<2x128xf32>,
    return
  }
}

module attributes {stable_mosaic.version = 11 : i64} {
  func.func @_conv_pool_kernel(%arg0: i32, %arg1: memref<32x360xbf16, #tpu.memory_space<vmem>>, %arg2: memref<4x360x128xbf16, #tpu.memory_space<vmem>>, %arg3: memref<1x128xf32, #tpu.memory_space<vmem>>, %arg4: memref<32x128xbf16, #tpu.memory_space<vmem>>) attributes {dimension_semantics = [#tpu.dimension_semantics<parallel>], iteration_bounds = array<i64: 1>, scalar_prefetch = 0 : i64, scratch_operands = 0 : i64, tpu.core_type = #tpu.core_type<tc>, window_params = [{transform_indices = @transform_0, window_bounds = array<i64: 32, 360>}, {pipeline_mode = #tpu.pipeline_mode<synchronous>, transform_indices = @transform_1, window_bounds = array<i64: 4, 360, 128>}, {pipeline_mode = #tpu.pipeline_mode<synchronous>, transform_indices = @transform_2, window_bounds = array<i64: 1, 128>}, {transform_indices = @transform_3, window_bounds = array<i64: 32, 128>}]} {
    %c0 = arith.constant 0 : index
    %c0_0 = arith.constant 0 : index
    %0 = vector.load %arg1[%c0, %c0_0] : memref<32x360xbf16, #tpu.memory_space<vmem>>, vector<32x360xbf16>
    %c0_1 = arith.constant 0 : index
    %c0_2 = arith.constant 0 : index
    %c0_3 = arith.constant 0 : index
    %1 = vector.load %arg2[%c0_1, %c0_2, %c0_3] : memref<4x360x128xbf16, #tpu.memory_space<vmem>>, vector<1x360x128xbf16>
    %2 = vector.shape_cast %1 : vector<1x360x128xbf16> to vector<360x128xbf16>
    %cst = arith.constant dense<0.000000e+00> : vector<32x128xf32>
    %3 = tpu.matmul %0, %2, %cst {dimension_numbers = #tpu.dot_dimension_numbers<[1], [0], [0], [1], [0, 0, 1, 1], [], []>} : vector<32x360xbf16>, vector<360x128xbf16>, vector<32x128xf32> -> vector<32x128xf32>
    %c1 = arith.constant 1 : index
    %c0_4 = arith.constant 0 : index
    %c0_5 = arith.constant 0 : index
    %4 = vector.load %arg2[%c1, %c0_4, %c0_5] : memref<4x360x128xbf16, #tpu.memory_space<vmem>>, vector<1x360x128xbf16>
    %5 = vector.shape_cast %4 : vector<1x360x128xbf16> to vector<360x128xbf16>
    %cst_6 = arith.constant dense<0.000000e+00> : vector<32x128xf32>
    %6 = tpu.matmul %0, %5, %cst_6 {dimension_numbers = #tpu.dot_dimension_numbers<[1], [0], [0], [1], [0, 0, 1, 1], [], []>} : vector<32x360xbf16>, vector<360x128xbf16>, vector<32x128xf32> -> vector<32x128xf32>
    %7 = arith.maximumf %3, %6 : vector<32x128xf32>
    %c2 = arith.constant 2 : index
    %c0_7 = arith.constant 0 : index
    %c0_8 = arith.constant 0 : index
    %8 = vector.load %arg2[%c2, %c0_7, %c0_8] : memref<4x360x128xbf16, #tpu.memory_space<vmem>>, vector<1x360x128xbf16>
    %9 = vector.shape_cast %8 : vector<1x360x128xbf16> to vector<360x128xbf16>
    %cst_9 = arith.constant dense<0.000000e+00> : vector<32x128xf32>
    %10 = tpu.matmul %0, %9, %cst_9 {dimension_numbers = #tpu.dot_dimension_numbers<[1], [0], [0], [1], [0, 0, 1, 1], [], []>} : vector<32x360xbf16>, vector<360x128xbf16>, vector<32x128xf32> -> vector<32x128xf32>
    %11 = arith.maximumf %7, %10 : vector<32x128xf32>
    %c3 = arith.constant 3 : index
    %c0_10 = arith.constant 0 : index
    %c0_11 = arith.constant 0 : index
    %12 = vector.load %arg2[%c3, %c0_10, %c0_11] : memref<4x360x128xbf16, #tpu.memory_space<vmem>>, vector<1x360x128xbf16>
    %13 = vector.shape_cast %12 : vector<1x360x128xbf16> to vector<360x128xbf16>
    %cst_12 = arith.constant dense<0.000000e+00> : vector<32x128xf32>
    %14 = tpu.matmul %0, %13, %cst_12 {dimension_numbers = #tpu.dot_dimension_numbers<[1], [0], [0], [1], [0, 0, 1, 1], [], []>} : vector<32x360xbf16>, vector<360x128xbf16>, vector<32x128xf32> -> vector<32x128xf32>
    %15 = arith.maximumf %11, %14 : vector<32x128xf32>
    %c0_13 = arith.constant 0 : index
    %c0_14 = arith.constant 0 : index
    %16 = vector.load %arg3[%c0_13, %c0_14] : memref<1x128xf32, #tpu.memory_space<vmem>>, vector<1x128xf32>
    %17 = vector.broadcast %16 : vector<1x128xf32> to vector<32x128xf32>
    %18 = arith.addf %15, %17 : vector<32x128xf32>
    %cst_15 = arith.constant 0.000000e+00 : f32
    %19 = vector.broadcast %cst_15 : f32 to vector<32x128xf32>
    %20 = arith.maximumf %18, %19 : vector<32x128xf32>
    %21 = arith.truncf %20 : vector<32x128xf32> to vector<32x128xbf16>
    %c0_16 = arith.constant 0 : index
    %c0_17 = arith.constant 0 : index
    %22 = vector.load %arg4[%c0_16, %c0_17] : memref<32x128xbf16, #tpu.memory_space<vmem>>, vector<32x128xbf16>
    tpu.vector_store %arg4[%c0_16, %c0_17], %21 {strides = array<i32>} : memref<32x128xbf16, #tpu.memory_space<vmem>>, vector<32x128xbf16>,
    return
  }
  func.func @transform_0(%arg0: i32) -> (i32, i32) {
    %c0_i32 = arith.constant 0 : i32
    %c0_i32_0 = arith.constant 0 : i32
    return %arg0, %c0_i32 : i32, i32
  }
  func.func @transform_1(%arg0: i32) -> (i32, i32, i32) {
    %c0_i32 = arith.constant 0 : i32
    %c0_i32_0 = arith.constant 0 : i32
    %c0_i32_1 = arith.constant 0 : i32
    %c0_i32_2 = arith.constant 0 : i32
    return %c0_i32, %c0_i32_0, %c0_i32_1 : i32, i32, i32
  }
  func.func @transform_2(%arg0: i32) -> (i32, i32) {
    %c0_i32 = arith.constant 0 : i32
    %c0_i32_0 = arith.constant 0 : i32
    %c0_i32_1 = arith.constant 0 : i32
    return %c0_i32, %c0_i32_0 : i32, i32
  }
  func.func @transform_3(%arg0: i32) -> (i32, i32) {
    %c0_i32 = arith.constant 0 : i32
    %c0_i32_0 = arith.constant 0 : i32
    return %arg0, %c0_i32 : i32, i32
  }
}

</mosaic_0001>

<llo_original>
// kernel: net_forward.3
$region0: #{net_forward.3}
  #allocation0 [shape = 'u32[]', space=smem, size = 0x4, offset = 0x4, fixed_abs, tag = 'smem constant byte address 0x4 - core index']
  #allocation1 [shape = 'u32[144,128]{1,0:T(1,128)}', space=vmem, size = 0x12000, scoped, tag = 'internal scratch']
  %s0 = inlined_call_operand.vmem [shape: bf16[288,48], index: 0, kind: input, shape index: {}]
  %s1 = inlined_call_operand.vmem [shape: bf16[4,48,128], index: 1, kind: input, shape index: {}]
  %s2 = inlined_call_operand.vmem [shape: f32[1,128], index: 2, kind: input, shape index: {}]
  %s3 = inlined_call_operand.vmem [shape: bf16[288,128], index: 3, kind: output, shape index: {}]
  %s4 = sld [smem:[#allocation0]]
  $region22: #{net_forward.3} parent=0
    _
  %s6 = ssub.s32 1, %s4
  %s7 = scalar_select 0, %s6, %s4
  // Predicated region
  $region2: #{net_forward.3} parent=0 // pred_check
    _
  $region3: #{net_forward.3} parent=0 // pred_check_branch
    %9 = sbr.rel (0) target = $region5
  $region4: #{net_forward.3} parent=0 // pred_region
    _
  $region5: #{net_forward.3} parent=0 // pred_fallthru
    _
  // Predicated region
  $region6: #{net_forward.3} parent=0 // pred_check
    _
  $region7: #{net_forward.3} parent=0 // pred_check_branch
    %11 = sbr.rel (0) target = $region9
  $region8: #{net_forward.3} parent=0 // pred_region
    _
  $region9: #{net_forward.3} parent=0 // pred_fallthru
    _
  // Predicated region
  $region10: #{net_forward.3} parent=0 // pred_check
    _
  $region11: #{net_forward.3} parent=0 // pred_check_branch
    %13 = sbr.rel (0) target = $region13
  $region12: #{net_forward.3} parent=0 // pred_region
    _
  $region13: #{net_forward.3} parent=0 // pred_fallthru
    _
  %v15 = vld [vmem:[%s0] sm:$0xf]
  %v16 = vld [vmem:[%s0 + $0x4] sm:$0xf]
  %v17 = vld [vmem:[%s0 + $0x8] sm:$0xf]
  %v18 = vld [vmem:[%s0 + $0xc] sm:$0xf]
  %v19 = vld [vmem:[%s0 + $0x10] sm:$0xf]
  %v20 = vld [vmem:[%s0 + $0x14] sm:$0xf]
  %v21 = vld [vmem:[%s0 + $0x18] sm:$0xf]
  %v22 = vld [vmem:[%s0 + $0x1c] sm:$0xf]
  %v23 = vld [vmem:[%s0 + $0x20] sm:$0xf]
  %v24 = vld [vmem:[%s0 + $0x24] sm:$0xf]
  %v25 = vld [vmem:[%s0 + $0x28] sm:$0xf]
  %v26 = vld [vmem:[%s0 + $0x2c] sm:$0xf]
  %v27 = vld [vmem:[%s0 + $0x30] sm:$0xf]
  %v28 = vld [vmem:[%s0 + $0x34] sm:$0xf]
  %v29 = vld [vmem:[%s0 + $0x38] sm:$0xf]
  %v30 = vld [vmem:[%s0 + $0x3c] sm:$0xf]
  %v31 = vld [vmem:[%s0 + $0x40] sm:$0xf]
  %v32 = vld [vmem:[%s0 + $0x44] sm:$0xf]
  %v33 = vld [vmem:[%s0 + $0x48] sm:$0xf]
  %v34 = vld [vmem:[%s0 + $0x4c] sm:$0xf]
  %v35 = vld [vmem:[%s0 + $0x50] sm:$0xf]
  %v36 = vld [vmem:[%s0 + $0x54] sm:$0xf]
  %v37 = vld [vmem:[%s0 + $0x58] sm:$0xf]
  %v38 = vld [vmem:[%s0 + $0x5c] sm:$0xf]
  %v39 = vld [vmem:[%s0 + $0x60] sm:$0xf]
  %v40 = vld [vmem:[%s0 + $0x64] sm:$0xf]
  %v41 = vld [vmem:[%s0 + $0x68] sm:$0xf]
  %v42 = vld [vmem:[%s0 + $0x6c] sm:$0xf]
  %v43 = vld [vmem:[%s0 + $0x70] sm:$0xf]
  %v44 = vld [vmem:[%s0 + $0x74] sm:$0xf]
  %v45 = vld [vmem:[%s0 + $0x78] sm:$0xf]
  %v46 = vld [vmem:[%s0 + $0x7c] sm:$0xf]
  %v47 = vld [vmem:[%s0 + $0x80] sm:$0xf]
  %v48 = vld [vmem:[%s0 + $0x84] sm:$0xf]
  %v49 = vld [vmem:[%s0 + $0x88] sm:$0xf]
  %v50 = vld [vmem:[%s0 + $0x8c] sm:$0xf]
  %v51 = vld [vmem:[%s1] sm:$0xf]
  %v52 = vld [vmem:[%s1 + $0x4] sm:$0xf]
  %v53 = vld [vmem:[%s1 + $0x8] sm:$0xf]
  %v54 = vld [vmem:[%s1 + $0xc] sm:$0xf]
  %v55 = vld [vmem:[%s1 + $0x10] sm:$0xf]
  %v56 = vld [vmem:[%s1 + $0x14] sm:$0xf]
  %v93 = vunpack.c.l.b16 %v15
  %v94 = vunpack.c.l.b16 %v16
  %v95 = vunpack.c.l.b16 %v17
  %v96 = vunpack.c.l.b16 %v18
  %v97 = vunpack.c.l.b16 %v19
  %v98 = vunpack.c.l.b16 %v20
  %v99 = vunpack.c.l.b16 %v21
  %v100 = vunpack.c.l.b16 %v22
  %v101 = vunpack.c.l.b16 %v23
  %v102 = vunpack.c.l.b16 %v24
  %v103 = vunpack.c.l.b16 %v25
  %v104 = vunpack.c.l.b16 %v26
  %v105 = vunpack.c.l.b16 %v27
  %v106 = vunpack.c.l.b16 %v28
  %v107 = vunpack.c.l.b16 %v29
  %v108 = vunpack.c.l.b16 %v30
  %v109 = vunpack.c.l.b16 %v31
  %v110 = vunpack.c.l.b16 %v32
  %v111 = vunpack.c.l.b16 %v33
  %v112 = vunpack.c.l.b16 %v34
  %v113 = vunpack.c.l.b16 %v35
  %v114 = vunpack.c.l.b16 %v36
  %v115 = vunpack.c.l.b16 %v37
  %v116 = vunpack.c.l.b16 %v38
  %v117 = vunpack.c.l.b16 %v39
  %v118 = vunpack.c.l.b16 %v40
  %v119 = vunpack.c.l.b16 %v41
  %v120 = vunpack.c.l.b16 %v42
  %v121 = vunpack.c.l.b16 %v43
  %v122 = vunpack.c.l.b16 %v44
  %v123 = vunpack.c.l.b16 %v45
  %v124 = vunpack.c.l.b16 %v46
  %v125 = vunpack.c.l.b16 %v47
  %v126 = vunpack.c.l.b16 %v48
  %v127 = vunpack.c.l.b16 %v49
  %v128 = vunpack.c.l.b16 %v50
  %v129 = vpack.c.b16 %v94, %v93
  %v130 = vpack.c.b16 %v96, %v95
  %v131 = vpack.c.b16 %v98, %v97
  %v132 = vpack.c.b16 %v100, %v99
  %v133 = vpack.c.b16 %v102, %v101
  %v134 = vpack.c.b16 %v104, %v103
  %v135 = vpack.c.b16 %v106, %v105
  %v136 = vpack.c.b16 %v108, %v107
  %v137 = vpack.c.b16 %v110, %v109
  %v138 = vpack.c.b16 %v112, %v111
  %v139 = vpack.c.b16 %v114, %v113
  %v140 = vpack.c.b16 %v116, %v115
  %v141 = vpack.c.b16 %v118, %v117
  %v142 = vpack.c.b16 %v120, %v119
  %v143 = vpack.c.b16 %v122, %v121
  %v144 = vpack.c.b16 %v124, %v123
  %v145 = vpack.c.b16 %v126, %v125
  %v146 = vpack.c.b16 %v128, %v127
  %v153 = vunpack.c.l.b16 %v51
  %v154 = vunpack.c.l.b16 %v52
  %v155 = vunpack.c.l.b16 %v53
  %v156 = vunpack.c.l.b16 %v54
  %v157 = vunpack.c.l.b16 %v55
  %v158 = vunpack.c.l.b16 %v56
  %v159 = vpack.c.b16 %v154, %v153
  %v160 = vpack.c.b16 %v156, %v155
  %v161 = vpack.c.b16 %v158, %v157
  %vm165 = vcmask 392192
  %v167 = vsel %vm165, %v129, 0
  %v170 = vsel %vm165, %v130, 0
  %v173 = vsel %vm165, %v131, 0
  %v176 = vsel %vm165, %v132, 0
  %v179 = vsel %vm165, %v133, 0
  %v182 = vsel %vm165, %v134, 0
  %v185 = vsel %vm165, %v135, 0
  %v188 = vsel %vm165, %v136, 0
  %v191 = vsel %vm165, %v137, 0
  %v194 = vsel %vm165, %v138, 0
  %v197 = vsel %vm165, %v139, 0
  %v200 = vsel %vm165, %v140, 0
  %v203 = vsel %vm165, %v141, 0
  %v206 = vsel %vm165, %v142, 0
  %v209 = vsel %vm165, %v143, 0
  %v212 = vsel %vm165, %v144, 0
  %v215 = vsel %vm165, %v145, 0
  %v218 = vsel %vm165, %v146, 0
  %220 = vmatprep.subr.bf16.mxu0 0
  %221 = vmatpush1.bf16.msra.mxu0 %v159
  %222 = vmatprep.subr.bf16.mxu0 0
  %223 = vmatpush1.bf16.msra.mxu0 %v160
  %224 = vmatprep.subr.bf16.mxu0 0
  %225 = vmatpush1.bf16.msra.mxu0 %v161
  %226 = vmatprep.subr.bf16.mxu0 0
  %227 = vmatpush1.bf16.msra.mxu0 0
  %228 = vmatprep.subr.bf16.mxu0 0
  %229 = vmatpush1.bf16.msra.mxu0 0
  %230 = vmatprep.subr.bf16.mxu0 0
  %231 = vmatpush1.bf16.msra.mxu0 0
  %232 = vmatprep.subr.bf16.mxu0 0
  %233 = vmatpush1.bf16.msra.mxu0 0
  %234 = vmatprep.subr.bf16.mxu0 0
  %235 = vmatpush1.bf16.msra.mxu0 0
  %236 = vmatprep.subr.bf16.mxu0 0
  %237 = vmatpush1.bf16.msra.mxu0 0
  %238 = vmatprep.subr.bf16.mxu0 0
  %239 = vmatpush1.bf16.msra.mxu0 0
  %240 = vmatprep.subr.bf16.mxu0 0
  %241 = vmatpush1.bf16.msra.mxu0 0
  %242 = vmatprep.subr.bf16.mxu0 0
  %243 = vmatpush1.bf16.msra.mxu0 0
  %244 = vmatprep.subr.bf16.mxu0 0
  %245 = vmatpush1.bf16.msra.mxu0 0
  %246 = vmatprep.subr.bf16.mxu0 0
  %247 = vmatpush1.bf16.msra.mxu0 0
  %248 = vmatprep.subr.bf16.mxu0 0
  %249 = vmatpush1.bf16.msra.mxu0 0
  %250 = vmatprep.subr.bf16.mxu0 0
  %251 = vmatpush1.bf16.msra.mxu0 0
  %252 = vmatprep.mubr.bf16.mxu0 0
  %253 = vmatmul.mubr.bf16.gmra.mrb[0].mxu0 %v167
  %v254 = vpop.f32.mrb[0].mxu0
  %v255 = vadd.f32 0.0, %v254
  %v256 = vpop.f32.mrb[0].mxu0
  %v257 = vpop.f32.mrb[0].mxu0
  %v258 = vadd.f32 0.0, %v257
  %v259 = vpop.f32.mrb[0].mxu0
  %260 = vmatprep.mubr.bf16.mxu0 0
  %261 = vmatmul.mubr.bf16.gmra.mrb[0].mxu0 %v170
  %v262 = vpop.f32.mrb[0].mxu0
  %v263 = vadd.f32 0.0, %v262
  %v264 = vpop.f32.mrb[0].mxu0
  %v265 = vpop.f32.mrb[0].mxu0
  %v266 = vadd.f32 0.0, %v265
  %v267 = vpop.f32.mrb[0].mxu0
  %268 = vmatprep.mubr.bf16.mxu0 0
  %269 = vmatmul.mubr.bf16.gmra.mrb[0].mxu0 %v173
  %v270 = vpop.f32.mrb[0].mxu0
  %v271 = vadd.f32 0.0, %v270
  %v272 = vpop.f32.mrb[0].mxu0
  %v273 = vpop.f32.mrb[0].mxu0
  %v274 = vadd.f32 0.0, %v273
  %v275 = vpop.f32.mrb[0].mxu0
  %276 = vmatprep.mubr.bf16.mxu0 0
  %277 = vmatmul.mubr.bf16.gmra.mrb[0].mxu0 %v176
  %v278 = vpop.f32.mrb[0].mxu0
  %v279 = vadd.f32 0.0, %v278
  %v280 = vpop.f32.mrb[0].mxu0
  %v281 = vpop.f32.mrb[0].mxu0
  %v282 = vadd.f32 0.0, %v281
  %v283 = vpop.f32.mrb[0].mxu0
  %284 = vmatprep.mubr.bf16.mxu0 0
  %285 = vmatmul.mubr.bf16.gmra.mrb[0].mxu0 %v179
  %v286 = vpop.f32.mrb[0].mxu0
  %v287 = vadd.f32 0.0, %v286
  %v288 = vpop.f32.mrb[0].mxu0
  %v289 = vpop.f32.mrb[0].mxu0
  %v290 = vadd.f32 0.0, %v289
  %v291 = vpop.f32.mrb[0].mxu0
  %292 = vmatprep.mubr.bf16.mxu0 0
  %293 = vmatmul.mubr.bf16.gmra.mrb[0].mxu0 %v182
  %v294 = vpop.f32.mrb[0].mxu0
  %v295 = vadd.f32 0.0, %v294
  %v296 = vpop.f32.mrb[0].mxu0
  %v297 = vpop.f32.mrb[0].mxu0
  %v298 = vadd.f32 0.0, %v297
  %v299 = vpop.f32.mrb[0].mxu0
  %300 = vmatprep.mubr.bf16.mxu0 0
  %301 = vmatmul.mubr.bf16.gmra.mrb[0].mxu0 %v185
  %v302 = vpop.f32.mrb[0].mxu0
  %v303 = vadd.f32 0.0, %v302
  %v304 = vpop.f32.mrb[0].mxu0
  %v305 = vpop.f32.mrb[0].mxu0
  %v306 = vadd.f32 0.0, %v305
  %v307 = vpop.f32.mrb[0].mxu0
  %308 = vmatprep.mubr.bf16.mxu0 0
  %309 = vmatmul.mubr.bf16.gmra.mrb[0].mxu0 %v188
  %v310 = vpop.f32.mrb[0].mxu0
  %v311 = vadd.f32 0.0, %v310
  %v312 = vpop.f32.mrb[0].mxu0
  %v313 = vpop.f32.mrb[0].mxu0
  %v314 = vadd.f32 0.0, %v313
  %v315 = vpop.f32.mrb[0].mxu0
  %316 = vmatprep.mubr.bf16.mxu0 0
  %317 = vmatmul.mubr.bf16.gmra.mrb[0].mxu0 %v191
  %v318 = vpop.f32.mrb[0].mxu0
  %v319 = vadd.f32 0.0, %v318
  %v320 = vpop.f32.mrb[0].mxu0
  %v321 = vpop.f32.mrb[0].mxu0
  %v322 = vadd.f32 0.0, %v321
  %v323 = vpop.f32.mrb[0].mxu0
  %324 = vmatprep.mubr.bf16.mxu0 0
  %325 = vmatmul.mubr.bf16.gmra.mrb[0].mxu0 %v194
  %v326 = vpop.f32.mrb[0].mxu0
  %v327 = vadd.f32 0.0, %v326
  %v328 = vpop.f32.mrb[0].mxu0
  %v329 = vpop.f32.mrb[0].mxu0
  %v330 = vadd.f32 0.0, %v329
  %v331 = vpop.f32.mrb[0].mxu0
  %332 = vmatprep.mubr.bf16.mxu0 0
  %333 = vmatmul.mubr.bf16.gmra.mrb[0].mxu0 %v197
  %v334 = vpop.f32.mrb[0].mxu0
  %v335 = vadd.f32 0.0, %v334
  %v336 = vpop.f32.mrb[0].mxu0
  %v337 = vpop.f32.mrb[0].mxu0
  %v338 = vadd.f32 0.0, %v337
  %v339 = vpop.f32.mrb[0].mxu0
  %340 = vmatprep.mubr.bf16.mxu0 0
  %341 = vmatmul.mubr.bf16.gmra.mrb[0].mxu0 %v200
  %v342 = vpop.f32.mrb[0].mxu0
  %v343 = vadd.f32 0.0, %v342
  %v344 = vpop.f32.mrb[0].mxu0
  %v345 = vpop.f32.mrb[0].mxu0
  %v346 = vadd.f32 0.0, %v345
  %v347 = vpop.f32.mrb[0].mxu0
  %348 = vmatprep.mubr.bf16.mxu0 0
  %349 = vmatmul.mubr.bf16.gmra.mrb[0].mxu0 %v203
  %v350 = vpop.f32.mrb[0].mxu0
  %v351 = vadd.f32 0.0, %v350
  %v352 = vpop.f32.mrb[0].mxu0
  %v353 = vpop.f32.mrb[0].mxu0
  %v354 = vadd.f32 0.0, %v353
  %v355 = vpop.f32.mrb[0].mxu0
  %356 = vmatprep.mubr.bf16.mxu0 0
  %357 = vmatmul.mubr.bf16.gmra.mrb[0].mxu0 %v206
  %v358 = vpop.f32.mrb[0].mxu0
  %v359 = vadd.f32 0.0, %v358
  %v360 = vpop.f32.mrb[0].mxu0
  %v361 = vpop.f32.mrb[0].mxu0
  %v362 = vadd.f32 0.0, %v361
  %v363 = vpop.f32.mrb[0].mxu0
  %364 = vmatprep.mubr.bf16.mxu0 0
  %365 = vmatmul.mubr.bf16.gmra.mrb[0].mxu0 %v209
  %v366 = vpop.f32.mrb[0].mxu0
  %v367 = vadd.f32 0.0, %v366
  %v368 = vpop.f32.mrb[0].mxu0
  %v369 = vpop.f32.mrb[0].mxu0
  %v370 = vadd.f32 0.0, %v369
  %v371 = vpop.f32.mrb[0].mxu0
  %372 = vmatprep.mubr.bf16.mxu0 0
  %373 = vmatmul.mubr.bf16.gmra.mrb[0].mxu0 %v212
  %v374 = vpop.f32.mrb[0].mxu0
  %v375 = vadd.f32 0.0, %v374
  %v376 = vpop.f32.mrb[0].mxu0
  %v377 = vpop.f32.mrb[0].mxu0
  %v378 = vadd.f32 0.0, %v377
  %v379 = vpop.f32.mrb[0].mxu0
  %380 = vmatprep.mubr.bf16.mxu0 0
  %381 = vmatmul.mubr.bf16.gmra.mrb[0].mxu0 %v215
  %v382 = vpop.f32.mrb[0].mxu0
  %v383 = vadd.f32 0.0, %v382
  %v384 = vpop.f32.mrb[0].mxu0
  %v385 = vpop.f32.mrb[0].mxu0
  %v386 = vadd.f32 0.0, %v385
  %v387 = vpop.f32.mrb[0].mxu0
  %388 = vmatprep.mubr.bf16.mxu0 0
  %389 = vmatmul.mubr.bf16.gmra.mrb[0].mxu0 %v218
  %v390 = vpop.f32.mrb[0].mxu0
  %v391 = vadd.f32 0.0, %v390
  %v392 = vpop.f32.mrb[0].mxu0
  %v393 = vpop.f32.mrb[0].mxu0
  %v394 = vadd.f32 0.0, %v393
  %v395 = vpop.f32.mrb[0].mxu0
  %396 = vdwg.mxu0
  %s397 = scalar_lea.vmem %s1, 24
  %v398 = vld [vmem:[%s397] sm:$0xf]
  %v399 = vld [vmem:[%s397 + $0x4] sm:$0xf]
  %v400 = vld [vmem:[%s397 + $0x8] sm:$0xf]
  %v401 = vld [vmem:[%s397 + $0xc] sm:$0xf]
  %v402 = vld [vmem:[%s397 + $0x10] sm:$0xf]
  %v403 = vld [vmem:[%s397 + $0x14] sm:$0xf]
  %v410 = vunpack.c.l.b16 %v398
  %v411 = vunpack.c.l.b16 %v399
  %v412 = vunpack.c.l.b16 %v400
  %v413 = vunpack.c.l.b16 %v401
  %v414 = vunpack.c.l.b16 %v402
  %v415 = vunpack.c.l.b16 %v403
  %v416 = vpack.c.b16 %v411, %v410
  %v417 = vpack.c.b16 %v413, %v412
  %v418 = vpack.c.b16 %v415, %v414
  %422 = vmatprep.subr.bf16.mxu0 0
  %423 = vmatpush1.bf16.msra.mxu0 %v416
  %424 = vmatprep.subr.bf16.mxu0 0
  %425 = vmatpush1.bf16.msra.mxu0 %v417
  %426 = vmatprep.subr.bf16.mxu0 0
  %427 = vmatpush1.bf16.msra.mxu0 %v418
  %428 = vmatprep.subr.bf16.mxu0 0
  %429 = vmatpush1.bf16.msra.mxu0 0
  %430 = vmatprep.subr.bf16.mxu0 0
  %431 = vmatpush1.bf16.msra.mxu0 0
  %432 = vmatprep.subr.bf16.mxu0 0
  %433 = vmatpush1.bf16.msra.mxu0 0
  %434 = vmatprep.subr.bf16.mxu0 0
  %435 = vmatpush1.bf16.msra.mxu0 0
  %436 = vmatprep.subr.bf16.mxu0 0
  %437 = vmatpush1.bf16.msra.mxu0 0
  %438 = vmatprep.subr.bf16.mxu0 0
  %439 = vmatpush1.bf16.msra.mxu0 0
  %440 = vmatprep.subr.bf16.mxu0 0
  %441 = vmatpush1.bf16.msra.mxu0 0
  %442 = vmatprep.subr.bf16.mxu0 0
  %443 = vmatpush1.bf16.msra.mxu0 0
  %444 = vmatprep.subr.bf16.mxu0 0
  %445 = vmatpush1.bf16.msra.mxu0 0
  %446 = vmatprep.subr.bf16.mxu0 0
  %447 = vmatpush1.bf16.msra.mxu0 0
  %448 = vmatprep.subr.bf16.mxu0 0
  %449 = vmatpush1.bf16.msra.mxu0 0
  %450 = vmatprep.subr.bf16.mxu0 0
  %451 = vmatpush1.bf16.msra.mxu0 0
  %452 = vmatprep.subr.bf16.mxu0 0
  %453 = vmatpush1.bf16.msra.mxu0 0
  %454 = vmatprep.mubr.bf16.mxu0 0
  %455 = vmatmul.mubr.bf16.gmra.mrb[0].mxu0 %v167
  %v456 = vpop.f32.mrb[0].mxu0
  %v457 = vadd.f32 0.0, %v456
  %v458 = vpop.f32.mrb[0].mxu0
  %v459 = vpop.f32.mrb[0].mxu0
  %v460 = vadd.f32 0.0, %v459
  %v461 = vpop.f32.mrb[0].mxu0
  %462 = vmatprep.mubr.bf16.mxu0 0
  %463 = vmatmul.mubr.bf16.gmra.mrb[0].mxu0 %v170
  %v464 = vpop.f32.mrb[0].mxu0
  %v465 = vadd.f32 0.0, %v464
  %v466 = vpop.f32.mrb[0].mxu0
  %v467 = vpop.f32.mrb[0].mxu0
  %v468 = vadd.f32 0.0, %v467
  %v469 = vpop.f32.mrb[0].mxu0
  %470 = vmatprep.mubr.bf16.mxu0 0
  %471 = vmatmul.mubr.bf16.gmra.mrb[0].mxu0 %v173
  %v472 = vpop.f32.mrb[0].mxu0
  %v473 = vadd.f32 0.0, %v472
  %v474 = vpop.f32.mrb[0].mxu0
  %v475 = vpop.f32.mrb[0].mxu0
  %v476 = vadd.f32 0.0, %v475
  %v477 = vpop.f32.mrb[0].mxu0
  %478 = vmatprep.mubr.bf16.mxu0 0
  %479 = vmatmul.mubr.bf16.gmra.mrb[0].mxu0 %v176
  %v480 = vpop.f32.mrb[0].mxu0
  %v481 = vadd.f32 0.0, %v480
  %v482 = vpop.f32.mrb[0].mxu0
  %v483 = vpop.f32.mrb[0].mxu0
  %v484 = vadd.f32 0.0, %v483
  %v485 = vpop.f32.mrb[0].mxu0
  %486 = vmatprep.mubr.bf16.mxu0 0
  %487 = vmatmul.mubr.bf16.gmra.mrb[0].mxu0 %v179
  %v488 = vpop.f32.mrb[0].mxu0
  %v489 = vadd.f32 0.0, %v488
  %v490 = vpop.f32.mrb[0].mxu0
  %v491 = vpop.f32.mrb[0].mxu0
  %v492 = vadd.f32 0.0, %v491
  %v493 = vpop.f32.mrb[0].mxu0
  %494 = vmatprep.mubr.bf16.mxu0 0
  %495 = vmatmul.mubr.bf16.gmra.mrb[0].mxu0 %v182
  %v496 = vpop.f32.mrb[0].mxu0
  %v497 = vadd.f32 0.0, %v496
  %v498 = vpop.f32.mrb[0].mxu0
  %v499 = vpop.f32.mrb[0].mxu0
  %v500 = vadd.f32 0.0, %v499
  %v501 = vpop.f32.mrb[0].mxu0
  %502 = vmatprep.mubr.bf16.mxu0 0
  %503 = vmatmul.mubr.bf16.gmra.mrb[0].mxu0 %v185
  %v504 = vpop.f32.mrb[0].mxu0
  %v505 = vadd.f32 0.0, %v504
  %v506 = vpop.f32.mrb[0].mxu0
  %v507 = vpop.f32.mrb[0].mxu0
  %v508 = vadd.f32 0.0, %v507
  %v509 = vpop.f32.mrb[0].mxu0
  %510 = vmatprep.mubr.bf16.mxu0 0
  %511 = vmatmul.mubr.bf16.gmra.mrb[0].mxu0 %v188
  %v512 = vpop.f32.mrb[0].mxu0
  %v513 = vadd.f32 0.0, %v512
  %v514 = vpop.f32.mrb[0].mxu0
  %v515 = vpop.f32.mrb[0].mxu0
  %v516 = vadd.f32 0.0, %v515
  %v517 = vpop.f32.mrb[0].mxu0
  %518 = vmatprep.mubr.bf16.mxu0 0
  %519 = vmatmul.mubr.bf16.gmra.mrb[0].mxu0 %v191
  %v520 = vpop.f32.mrb[0].mxu0
  %v521 = vadd.f32 0.0, %v520
  %v522 = vpop.f32.mrb[0].mxu0
  %v523 = vpop.f32.mrb[0].mxu0
  %v524 = vadd.f32 0.0, %v523
  %v525 = vpop.f32.mrb[0].mxu0
  %526 = vmatprep.mubr.bf16.mxu0 0
  %527 = vmatmul.mubr.bf16.gmra.mrb[0].mxu0 %v194
  %v528 = vpop.f32.mrb[0].mxu0
  %v529 = vadd.f32 0.0, %v528
  %v530 = vpop.f32.mrb[0].mxu0
  %v531 = vpop.f32.mrb[0].mxu0
  %v532 = vadd.f32 0.0, %v531
  %v533 = vpop.f32.mrb[0].mxu0
  %534 = vmatprep.mubr.bf16.mxu0 0
  %535 = vmatmul.mubr.bf16.gmra.mrb[0].mxu0 %v197
  %v536 = vpop.f32.mrb[0].mxu0
  %v537 = vadd.f32 0.0, %v536
  %v538 = vpop.f32.mrb[0].mxu0
  %v539 = vpop.f32.mrb[0].mxu0
  %v540 = vadd.f32 0.0, %v539
  %v541 = vpop.f32.mrb[0].mxu0
  %542 = vmatprep.mubr.bf16.mxu0 0
  %543 = vmatmul.mubr.bf16.gmra.mrb[0].mxu0 %v200
  %v544 = vpop.f32.mrb[0].mxu0
  %v545 = vadd.f32 0.0, %v544
  %v546 = vpop.f32.mrb[0].mxu0
  %v547 = vpop.f32.mrb[0].mxu0
  %v548 = vadd.f32 0.0, %v547
  %v549 = vpop.f32.mrb[0].mxu0
  %550 = vmatprep.mubr.bf16.mxu0 0
  %551 = vmatmul.mubr.bf16.gmra.mrb[0].mxu0 %v203
  %v552 = vpop.f32.mrb[0].mxu0
  %v553 = vadd.f32 0.0, %v552
  %v554 = vpop.f32.mrb[0].mxu0
  %v555 = vpop.f32.mrb[0].mxu0
  %v556 = vadd.f32 0.0, %v555
  %v557 = vpop.f32.mrb[0].mxu0
  %558 = vmatprep.mubr.bf16.mxu0 0
  %559 = vmatmul.mubr.bf16.gmra.mrb[0].mxu0 %v206
  %v560 = vpop.f32.mrb[0].mxu0
  %v561 = vadd.f32 0.0, %v560
  %v562 = vpop.f32.mrb[0].mxu0
  %v563 = vpop.f32.mrb[0].mxu0
  %v564 = vadd.f32 0.0, %v563
  %v565 = vpop.f32.mrb[0].mxu0
  %566 = vmatprep.mubr.bf16.mxu0 0
  %567 = vmatmul.mubr.bf16.gmra.mrb[0].mxu0 %v209
  %v568 = vpop.f32.mrb[0].mxu0
  %v569 = vadd.f32 0.0, %v568
  %v570 = vpop.f32.mrb[0].mxu0
  %v571 = vpop.f32.mrb[0].mxu0
  %v572 = vadd.f32 0.0, %v571
  %v573 = vpop.f32.mrb[0].mxu0
  %574 = vmatprep.mubr.bf16.mxu0 0
  %575 = vmatmul.mubr.bf16.gmra.mrb[0].mxu0 %v212
  %v576 = vpop.f32.mrb[0].mxu0
  %v577 = vadd.f32 0.0, %v576
  %v578 = vpop.f32.mrb[0].mxu0
  %v579 = vpop.f32.mrb[0].mxu0
  %v580 = vadd.f32 0.0, %v579
  %v581 = vpop.f32.mrb[0].mxu0
  %582 = vmatprep.mubr.bf16.mxu0 0
  %583 = vmatmul.mubr.bf16.gmra.mrb[0].mxu0 %v215
  %v584 = vpop.f32.mrb[0].mxu0
  %v585 = vadd.f32 0.0, %v584
  %v586 = vpop.f32.mrb[0].mxu0
  %v587 = vpop.f32.mrb[0].mxu0
  %v588 = vadd.f32 0.0, %v587
  %v589 = vpop.f32.mrb[0].mxu0
  %590 = vmatprep.mubr.bf16.mxu0 0
  %591 = vmatmul.mubr.bf16.gmra.mrb[0].mxu0 %v218
  %v592 = vpop.f32.mrb[0].mxu0
  %v593 = vadd.f32 0.0, %v592
  %v594 = vpop.f32.mrb[0].mxu0
  %v595 = vpop.f32.mrb[0].mxu0
  %v596 = vadd.f32 0.0, %v595
  %v597 = vpop.f32.mrb[0].mxu0
  %598 = vdwg.mxu0
  %v599 = vmax.f32 %v255, %v457
  %v600 = vmax.f32 %v258, %v460
  %v601 = vmax.f32 %v263, %v465
  %v602 = vmax.f32 %v266, %v468
  %v603 = vmax.f32 %v271, %v473
  %v604 = vmax.f32 %v274, %v476
  %v605 = vmax.f32 %v279, %v481
  %v606 = vmax.f32 %v282, %v484
  %v607 = vmax.f32 %v287, %v489
  %v608 = vmax.f32 %v290, %v492
  %v609 = vmax.f32 %v295, %v497
  %v610 = vmax.f32 %v298, %v500
  %v611 = vmax.f32 %v303, %v505
  %v612 = vmax.f32 %v306, %v508
  %v613 = vmax.f32 %v311, %v513
  %v614 = vmax.f32 %v314, %v516
  %v615 = vmax.f32 %v319, %v521
  %v616 = vmax.f32 %v322, %v524
  %v617 = vmax.f32 %v327, %v529
  %v618 = vmax.f32 %v330, %v532
  %v619 = vmax.f32 %v335, %v537
  %v620 = vmax.f32 %v338, %v540
  %v621 = vmax.f32 %v343, %v545
  %v622 = vmax.f32 %v346, %v548
  %v623 = vmax.f32 %v351, %v553
  %v624 = vmax.f32 %v354, %v556
  %v625 = vmax.f32 %v359, %v561
  %v626 = vmax.f32 %v362, %v564
  %v627 = vmax.f32 %v367, %v569
  %v628 = vmax.f32 %v370, %v572
  %v629 = vmax.f32 %v375, %v577
  %v630 = vmax.f32 %v378, %v580
  %v631 = vmax.f32 %v383, %v585
  %v632 = vmax.f32 %v386, %v588
  %v633 = vmax.f32 %v391, %v593
  %v634 = vmax.f32 %v394, %v596
  %s635 = scalar_lea.vmem %s1, 48
  %v636 = vld [vmem:[%s635] sm:$0xf]
  %v637 = vld [vmem:[%s635 + $0x4] sm:$0xf]
  %v638 = vld [vmem:[%s635 + $0x8] sm:$0xf]
  %v639 = vld [vmem:[%s635 + $0xc] sm:$0xf]
  %v640 = vld [vmem:[%s635 + $0x10] sm:$0xf]
  %v641 = vld [vmem:[%s635 + $0x14] sm:$0xf]
  %v648 = vunpack.c.l.b16 %v636
  %v649 = vunpack.c.l.b16 %v637
  %v650 = vunpack.c.l.b16 %v638
  %v651 = vunpack.c.l.b16 %v639
  %v652 = vunpack.c.l.b16 %v640
  %v653 = vunpack.c.l.b16 %v641
  %v654 = vpack.c.b16 %v649, %v648
  %v655 = vpack.c.b16 %v651, %v650
  %v656 = vpack.c.b16 %v653, %v652
  %660 = vmatprep.subr.bf16.mxu0 0
  %661 = vmatpush1.bf16.msra.mxu0 %v654
  %662 = vmatprep.subr.bf16.mxu0 0
  %663 = vmatpush1.bf16.msra.mxu0 %v655
  %664 = vmatprep.subr.bf16.mxu0 0
  %665 = vmatpush1.bf16.msra.mxu0 %v656
  %666 = vmatprep.subr.bf16.mxu0 0
  %667 = vmatpush1.bf16.msra.mxu0 0
  %668 = vmatprep.subr.bf16.mxu0 0
  %669 = vmatpush1.bf16.msra.mxu0 0
  %670 = vmatprep.subr.bf16.mxu0 0
  %671 = vmatpush1.bf16.msra.mxu0 0
  %672 = vmatprep.subr.bf16.mxu0 0
  %673 = vmatpush1.bf16.msra.mxu0 0
  %674 = vmatprep.subr.bf16.mxu0 0
  %675 = vmatpush1.bf16.msra.mxu0 0
  %676 = vmatprep.subr.bf16.mxu0 0
  %677 = vmatpush1.bf16.msra.mxu0 0
  %678 = vmatprep.subr.bf16.mxu0 0
  %679 = vmatpush1.bf16.msra.mxu0 0
  %680 = vmatprep.subr.bf16.mxu0 0
  %681 = vmatpush1.bf16.msra.mxu0 0
  %682 = vmatprep.subr.bf16.mxu0 0
  %683 = vmatpush1.bf16.msra.mxu0 0
  %684 = vmatprep.subr.bf16.mxu0 0
  %685 = vmatpush1.bf16.msra.mxu0 0
  %686 = vmatprep.subr.bf16.mxu0 0
  %687 = vmatpush1.bf16.msra.mxu0 0
  %688 = vmatprep.subr.bf16.mxu0 0
  %689 = vmatpush1.bf16.msra.mxu0 0
  %690 = vmatprep.subr.bf16.mxu0 0
  %691 = vmatpush1.bf16.msra.mxu0 0
  %692 = vmatprep.mubr.bf16.mxu0 0
  %693 = vmatmul.mubr.bf16.gmra.mrb[0].mxu0 %v167
  %v694 = vpop.f32.mrb[0].mxu0
  %v695 = vadd.f32 0.0, %v694
  %v696 = vpop.f32.mrb[0].mxu0
  %v697 = vpop.f32.mrb[0].mxu0
  %v698 = vadd.f32 0.0, %v697
  %v699 = vpop.f32.mrb[0].mxu0
  %700 = vmatprep.mubr.bf16.mxu0 0
  %701 = vmatmul.mubr.bf16.gmra.mrb[0].mxu0 %v170
  %v702 = vpop.f32.mrb[0].mxu0
  %v703 = vadd.f32 0.0, %v702
  %v704 = vpop.f32.mrb[0].mxu0
  %v705 = vpop.f32.mrb[0].mxu0
  %v706 = vadd.f32 0.0, %v705
  %v707 = vpop.f32.mrb[0].mxu0
  %708 = vmatprep.mubr.bf16.mxu0 0
  %709 = vmatmul.mubr.bf16.gmra.mrb[0].mxu0 %v173
  %v710 = vpop.f32.mrb[0].mxu0
  %v711 = vadd.f32 0.0, %v710
  %v712 = vpop.f32.mrb[0].mxu0
  %v713 = vpop.f32.mrb[0].mxu0
  %v714 = vadd.f32 0.0, %v713
  %v715 = vpop.f32.mrb[0].mxu0
  %716 = vmatprep.mubr.bf16.mxu0 0
  %717 = vmatmul.mubr.bf16.gmra.mrb[0].mxu0 %v176
  %v718 = vpop.f32.mrb[0].mxu0
  %v719 = vadd.f32 0.0, %v718
  %v720 = vpop.f32.mrb[0].mxu0
  %v721 = vpop.f32.mrb[0].mxu0
  %v722 = vadd.f32 0.0, %v721
  %v723 = vpop.f32.mrb[0].mxu0
  %724 = vmatprep.mubr.bf16.mxu0 0
  %725 = vmatmul.mubr.bf16.gmra.mrb[0].mxu0 %v179
  %v726 = vpop.f32.mrb[0].mxu0
  %v727 = vadd.f32 0.0, %v726
  %v728 = vpop.f32.mrb[0].mxu0
  %v729 = vpop.f32.mrb[0].mxu0
  %v730 = vadd.f32 0.0, %v729
  %v731 = vpop.f32.mrb[0].mxu0
  %732 = vmatprep.mubr.bf16.mxu0 0
  %733 = vmatmul.mubr.bf16.gmra.mrb[0].mxu0 %v182
  %v734 = vpop.f32.mrb[0].mxu0
  %v735 = vadd.f32 0.0, %v734
  %v736 = vpop.f32.mrb[0].mxu0
  %v737 = vpop.f32.mrb[0].mxu0
  %v738 = vadd.f32 0.0, %v737
  %v739 = vpop.f32.mrb[0].mxu0
  %740 = vmatprep.mubr.bf16.mxu0 0
  %741 = vmatmul.mubr.bf16.gmra.mrb[0].mxu0 %v185
  %v742 = vpop.f32.mrb[0].mxu0
  %v743 = vadd.f32 0.0, %v742
  %v744 = vpop.f32.mrb[0].mxu0
  %v745 = vpop.f32.mrb[0].mxu0
  %v746 = vadd.f32 0.0, %v745
  %v747 = vpop.f32.mrb[0].mxu0
  %748 = vmatprep.mubr.bf16.mxu0 0
  %749 = vmatmul.mubr.bf16.gmra.mrb[0].mxu0 %v188
  %v750 = vpop.f32.mrb[0].mxu0
  %v751 = vadd.f32 0.0, %v750
  %v752 = vpop.f32.mrb[0].mxu0
  %v753 = vpop.f32.mrb[0].mxu0
  %v754 = vadd.f32 0.0, %v753
  %v755 = vpop.f32.mrb[0].mxu0
  %756 = vmatprep.mubr.bf16.mxu0 0
  %757 = vmatmul.mubr.bf16.gmra.mrb[0].mxu0 %v191
  %v758 = vpop.f32.mrb[0].mxu0
  %v759 = vadd.f32 0.0, %v758
  %v760 = vpop.f32.mrb[0].mxu0
  %v761 = vpop.f32.mrb[0].mxu0
  %v762 = vadd.f32 0.0, %v761
  %v763 = vpop.f32.mrb[0].mxu0
  %764 = vmatprep.mubr.bf16.mxu0 0
  %765 = vmatmul.mubr.bf16.gmra.mrb[0].mxu0 %v194
  %v766 = vpop.f32.mrb[0].mxu0
  %v767 = vadd.f32 0.0, %v766
  %v768 = vpop.f32.mrb[0].mxu0
  %v769 = vpop.f32.mrb[0].mxu0
  %v770 = vadd.f32 0.0, %v769
  %v771 = vpop.f32.mrb[0].mxu0
  %772 = vmatprep.mubr.bf16.mxu0 0
  %773 = vmatmul.mubr.bf16.gmra.mrb[0].mxu0 %v197
  %v774 = vpop.f32.mrb[0].mxu0
  %v775 = vadd.f32 0.0, %v774
  %v776 = vpop.f32.mrb[0].mxu0
  %v777 = vpop.f32.mrb[0].mxu0
  %v778 = vadd.f32 0.0, %v777
  %v779 = vpop.f32.mrb[0].mxu0
  %780 = vmatprep.mubr.bf16.mxu0 0
  %781 = vmatmul.mubr.bf16.gmra.mrb[0].mxu0 %v200
  %v782 = vpop.f32.mrb[0].mxu0
  %v783 = vadd.f32 0.0, %v782
  %v784 = vpop.f32.mrb[0].mxu0
  %v785 = vpop.f32.mrb[0].mxu0
  %v786 = vadd.f32 0.0, %v785
  %v787 = vpop.f32.mrb[0].mxu0
  %788 = vmatprep.mubr.bf16.mxu0 0
  %789 = vmatmul.mubr.bf16.gmra.mrb[0].mxu0 %v203
  %v790 = vpop.f32.mrb[0].mxu0
  %v791 = vadd.f32 0.0, %v790
  %v792 = vpop.f32.mrb[0].mxu0
  %v793 = vpop.f32.mrb[0].mxu0
  %v794 = vadd.f32 0.0, %v793
  %v795 = vpop.f32.mrb[0].mxu0
  %796 = vmatprep.mubr.bf16.mxu0 0
  %797 = vmatmul.mubr.bf16.gmra.mrb[0].mxu0 %v206
  %v798 = vpop.f32.mrb[0].mxu0
  %v799 = vadd.f32 0.0, %v798
  %v800 = vpop.f32.mrb[0].mxu0
  %v801 = vpop.f32.mrb[0].mxu0
  %v802 = vadd.f32 0.0, %v801
  %v803 = vpop.f32.mrb[0].mxu0
  %804 = vmatprep.mubr.bf16.mxu0 0
  %805 = vmatmul.mubr.bf16.gmra.mrb[0].mxu0 %v209
  %v806 = vpop.f32.mrb[0].mxu0
  %v807 = vadd.f32 0.0, %v806
  %v808 = vpop.f32.mrb[0].mxu0
  %v809 = vpop.f32.mrb[0].mxu0
  %v810 = vadd.f32 0.0, %v809
  %v811 = vpop.f32.mrb[0].mxu0
  %812 = vmatprep.mubr.bf16.mxu0 0
  %813 = vmatmul.mubr.bf16.gmra.mrb[0].mxu0 %v212
  %v814 = vpop.f32.mrb[0].mxu0
  %v815 = vadd.f32 0.0, %v814
  %v816 = vpop.f32.mrb[0].mxu0
  %v817 = vpop.f32.mrb[0].mxu0
  %v818 = vadd.f32 0.0, %v817
  %v819 = vpop.f32.mrb[0].mxu0
  %820 = vmatprep.mubr.bf16.mxu0 0
  %821 = vmatmul.mubr.bf16.gmra.mrb[0].mxu0 %v215
  %v822 = vpop.f32.mrb[0].mxu0
  %v823 = vadd.f32 0.0, %v822
  %v824 = vpop.f32.mrb[0].mxu0
  %v825 = vpop.f32.mrb[0].mxu0
  %v826 = vadd.f32 0.0, %v825
  %v827 = vpop.f32.mrb[0].mxu0
  %828 = vmatprep.mubr.bf16.mxu0 0
  %829 = vmatmul.mubr.bf16.gmra.mrb[0].mxu0 %v218
  %v830 = vpop.f32.mrb[0].mxu0
  %v831 = vadd.f32 0.0, %v830
  %v832 = vpop.f32.mrb[0].mxu0
  %v833 = vpop.f32.mrb[0].mxu0
  %v834 = vadd.f32 0.0, %v833
  %v835 = vpop.f32.mrb[0].mxu0
  %836 = vdwg.mxu0
  %v837 = vmax.f32 %v599, %v695
  %v838 = vmax.f32 %v600, %v698
  %v839 = vmax.f32 %v601, %v703
  %v840 = vmax.f32 %v602, %v706
  %v841 = vmax.f32 %v603, %v711
  %v842 = vmax.f32 %v604, %v714
  %v843 = vmax.f32 %v605, %v719
  %v844 = vmax.f32 %v606, %v722
  %v845 = vmax.f32 %v607, %v727
  %v846 = vmax.f32 %v608, %v730
  %v847 = vmax.f32 %v609, %v735
  %v848 = vmax.f32 %v610, %v738
  %v849 = vmax.f32 %v611, %v743
  %v850 = vmax.f32 %v612, %v746
  %v851 = vmax.f32 %v613, %v751
  %v852 = vmax.f32 %v614, %v754
  %v853 = vmax.f32 %v615, %v759
  %v854 = vmax.f32 %v616, %v762
  %v855 = vmax.f32 %v617, %v767
  %v856 = vmax.f32 %v618, %v770
  %v857 = vmax.f32 %v619, %v775
  %v858 = vmax.f32 %v620, %v778
  %v859 = vmax.f32 %v621, %v783
  %v860 = vmax.f32 %v622, %v786
  %v861 = vmax.f32 %v623, %v791
  %v862 = vmax.f32 %v624, %v794
  %v863 = vmax.f32 %v625, %v799
  %v864 = vmax.f32 %v626, %v802
  %v865 = vmax.f32 %v627, %v807
  %v866 = vmax.f32 %v628, %v810
  %v867 = vmax.f32 %v629, %v815
  %v868 = vmax.f32 %v630, %v818
  %v869 = vmax.f32 %v631, %v823
  %v870 = vmax.f32 %v632, %v826
  %v871 = vmax.f32 %v633, %v831
  %v872 = vmax.f32 %v634, %v834
  %s873 = scalar_lea.vmem %s1, 72
  %v874 = vld [vmem:[%s873] sm:$0xf]
  %v875 = vld [vmem:[%s873 + $0x4] sm:$0xf]
  %v876 = vld [vmem:[%s873 + $0x8] sm:$0xf]
  %v877 = vld [vmem:[%s873 + $0xc] sm:$0xf]
  %v878 = vld [vmem:[%s873 + $0x10] sm:$0xf]
  %v879 = vld [vmem:[%s873 + $0x14] sm:$0xf]
  %v886 = vunpack.c.l.b16 %v874
  %v887 = vunpack.c.l.b16 %v875
  %v888 = vunpack.c.l.b16 %v876
  %v889 = vunpack.c.l.b16 %v877
  %v890 = vunpack.c.l.b16 %v878
  %v891 = vunpack.c.l.b16 %v879
  %v892 = vpack.c.b16 %v887, %v886
  %v893 = vpack.c.b16 %v889, %v888
  %v894 = vpack.c.b16 %v891, %v890
  %898 = vmatprep.subr.bf16.mxu0 0
  %899 = vmatpush1.bf16.msra.mxu0 %v892
  %900 = vmatprep.subr.bf16.mxu0 0
  %901 = vmatpush1.bf16.msra.mxu0 %v893
  %902 = vmatprep.subr.bf16.mxu0 0
  %903 = vmatpush1.bf16.msra.mxu0 %v894
  %904 = vmatprep.subr.bf16.mxu0 0
  %905 = vmatpush1.bf16.msra.mxu0 0
  %906 = vmatprep.subr.bf16.mxu0 0
  %907 = vmatpush1.bf16.msra.mxu0 0
  %908 = vmatprep.subr.bf16.mxu0 0
  %909 = vmatpush1.bf16.msra.mxu0 0
  %910 = vmatprep.subr.bf16.mxu0 0
  %911 = vmatpush1.bf16.msra.mxu0 0
  %912 = vmatprep.subr.bf16.mxu0 0
  %913 = vmatpush1.bf16.msra.mxu0 0
  %914 = vmatprep.subr.bf16.mxu0 0
  %915 = vmatpush1.bf16.msra.mxu0 0
  %916 = vmatprep.subr.bf16.mxu0 0
  %917 = vmatpush1.bf16.msra.mxu0 0
  %918 = vmatprep.subr.bf16.mxu0 0
  %919 = vmatpush1.bf16.msra.mxu0 0
  %920 = vmatprep.subr.bf16.mxu0 0
  %921 = vmatpush1.bf16.msra.mxu0 0
  %922 = vmatprep.subr.bf16.mxu0 0
  %923 = vmatpush1.bf16.msra.mxu0 0
  %924 = vmatprep.subr.bf16.mxu0 0
  %925 = vmatpush1.bf16.msra.mxu0 0
  %926 = vmatprep.subr.bf16.mxu0 0
  %927 = vmatpush1.bf16.msra.mxu0 0
  %928 = vmatprep.subr.bf16.mxu0 0
  %929 = vmatpush1.bf16.msra.mxu0 0
  %930 = vmatprep.mubr.bf16.mxu0 0
  %931 = vmatmul.mubr.bf16.gmra.mrb[0].mxu0 %v167
  %v932 = vpop.f32.mrb[0].mxu0
  %v933 = vadd.f32 0.0, %v932
  %v934 = vpop.f32.mrb[0].mxu0
  %v935 = vpop.f32.mrb[0].mxu0
  %v936 = vadd.f32 0.0, %v935
  %v937 = vpop.f32.mrb[0].mxu0
  %938 = vmatprep.mubr.bf16.mxu0 0
  %939 = vmatmul.mubr.bf16.gmra.mrb[0].mxu0 %v170
  %v940 = vpop.f32.mrb[0].mxu0
  %v941 = vadd.f32 0.0, %v940
  %v942 = vpop.f32.mrb[0].mxu0
  %v943 = vpop.f32.mrb[0].mxu0
  %v944 = vadd.f32 0.0, %v943
  %v945 = vpop.f32.mrb[0].mxu0
  %946 = vmatprep.mubr.bf16.mxu0 0
  %947 = vmatmul.mubr.bf16.gmra.mrb[0].mxu0 %v173
  %v948 = vpop.f32.mrb[0].mxu0
  %v949 = vadd.f32 0.0, %v948
  %v950 = vpop.f32.mrb[0].mxu0
  %v951 = vpop.f32.mrb[0].mxu0
  %v952 = vadd.f32 0.0, %v951
  %v953 = vpop.f32.mrb[0].mxu0
  %954 = vmatprep.mubr.bf16.mxu0 0
  %955 = vmatmul.mubr.bf16.gmra.mrb[0].mxu0 %v176
  %v956 = vpop.f32.mrb[0].mxu0
  %v957 = vadd.f32 0.0, %v956
  %v958 = vpop.f32.mrb[0].mxu0
  %v959 = vpop.f32.mrb[0].mxu0
  %v960 = vadd.f32 0.0, %v959
  %v961 = vpop.f32.mrb[0].mxu0
  %962 = vmatprep.mubr.bf16.mxu0 0
  %963 = vmatmul.mubr.bf16.gmra.mrb[0].mxu0 %v179
  %v964 = vpop.f32.mrb[0].mxu0
  %v965 = vadd.f32 0.0, %v964
  %v966 = vpop.f32.mrb[0].mxu0
  %v967 = vpop.f32.mrb[0].mxu0
  %v968 = vadd.f32 0.0, %v967
  %v969 = vpop.f32.mrb[0].mxu0
  %970 = vmatprep.mubr.bf16.mxu0 0
  %971 = vmatmul.mubr.bf16.gmra.mrb[0].mxu0 %v182
  %v972 = vpop.f32.mrb[0].mxu0
  %v973 = vadd.f32 0.0, %v972
  %v974 = vpop.f32.mrb[0].mxu0
  %v975 = vpop.f32.mrb[0].mxu0
  %v976 = vadd.f32 0.0, %v975
  %v977 = vpop.f32.mrb[0].mxu0
  %978 = vmatprep.mubr.bf16.mxu0 0
  %979 = vmatmul.mubr.bf16.gmra.mrb[0].mxu0 %v185
  %v980 = vpop.f32.mrb[0].mxu0
  %v981 = vadd.f32 0.0, %v980
  %v982 = vpop.f32.mrb[0].mxu0
  %v983 = vpop.f32.mrb[0].mxu0
  %v984 = vadd.f32 0.0, %v983
  %v985 = vpop.f32.mrb[0].mxu0
  %986 = vmatprep.mubr.bf16.mxu0 0
  %987 = vmatmul.mubr.bf16.gmra.mrb[0].mxu0 %v188
  %v988 = vpop.f32.mrb[0].mxu0
  %v989 = vadd.f32 0.0, %v988
  %v990 = vpop.f32.mrb[0].mxu0
  %v991 = vpop.f32.mrb[0].mxu0
  %v992 = vadd.f32 0.0, %v991
  %v993 = vpop.f32.mrb[0].mxu0
  %994 = vmatprep.mubr.bf16.mxu0 0
  %995 = vmatmul.mubr.bf16.gmra.mrb[0].mxu0 %v191
  %v996 = vpop.f32.mrb[0].mxu0
  %v997 = vadd.f32 0.0, %v996
  %v998 = vpop.f32.mrb[0].mxu0
  %v999 = vpop.f32.mrb[0].mxu0
  %v1000 = vadd.f32 0.0, %v999
  %v1001 = vpop.f32.mrb[0].mxu0
  %1002 = vmatprep.mubr.bf16.mxu0 0
  %1003 = vmatmul.mubr.bf16.gmra.mrb[0].mxu0 %v194
  %v1004 = vpop.f32.mrb[0].mxu0
  %v1005 = vadd.f32 0.0, %v1004
  %v1006 = vpop.f32.mrb[0].mxu0
  %v1007 = vpop.f32.mrb[0].mxu0
  %v1008 = vadd.f32 0.0, %v1007
  %v1009 = vpop.f32.mrb[0].mxu0
  %1010 = vmatprep.mubr.bf16.mxu0 0
  %1011 = vmatmul.mubr.bf16.gmra.mrb[0].mxu0 %v197
  %v1012 = vpop.f32.mrb[0].mxu0
  %v1013 = vadd.f32 0.0, %v1012
  %v1014 = vpop.f32.mrb[0].mxu0
  %v1015 = vpop.f32.mrb[0].mxu0
  %v1016 = vadd.f32 0.0, %v1015
  %v1017 = vpop.f32.mrb[0].mxu0
  %1018 = vmatprep.mubr.bf16.mxu0 0
  %1019 = vmatmul.mubr.bf16.gmra.mrb[0].mxu0 %v200
  %v1020 = vpop.f32.mrb[0].mxu0
  %v1021 = vadd.f32 0.0, %v1020
  %v1022 = vpop.f32.mrb[0].mxu0
  %v1023 = vpop.f32.mrb[0].mxu0
  %v1024 = vadd.f32 0.0, %v1023
  %v1025 = vpop.f32.mrb[0].mxu0
  %1026 = vmatprep.mubr.bf16.mxu0 0
  %1027 = vmatmul.mubr.bf16.gmra.mrb[0].mxu0 %v203
  %v1028 = vpop.f32.mrb[0].mxu0
  %v1029 = vadd.f32 0.0, %v1028
  %v1030 = vpop.f32.mrb[0].mxu0
  %v1031 = vpop.f32.mrb[0].mxu0
  %v1032 = vadd.f32 0.0, %v1031
  %v1033 = vpop.f32.mrb[0].mxu0
  %1034 = vmatprep.mubr.bf16.mxu0 0
  %1035 = vmatmul.mubr.bf16.gmra.mrb[0].mxu0 %v206
  %v1036 = vpop.f32.mrb[0].mxu0
  %v1037 = vadd.f32 0.0, %v1036
  %v1038 = vpop.f32.mrb[0].mxu0
  %v1039 = vpop.f32.mrb[0].mxu0
  %v1040 = vadd.f32 0.0, %v1039
  %v1041 = vpop.f32.mrb[0].mxu0
  %1042 = vmatprep.mubr.bf16.mxu0 0
  %1043 = vmatmul.mubr.bf16.gmra.mrb[0].mxu0 %v209
  %v1044 = vpop.f32.mrb[0].mxu0
  %v1045 = vadd.f32 0.0, %v1044
  %v1046 = vpop.f32.mrb[0].mxu0
  %v1047 = vpop.f32.mrb[0].mxu0
  %v1048 = vadd.f32 0.0, %v1047
  %v1049 = vpop.f32.mrb[0].mxu0
  %1050 = vmatprep.mubr.bf16.mxu0 0
  %1051 = vmatmul.mubr.bf16.gmra.mrb[0].mxu0 %v212
  %v1052 = vpop.f32.mrb[0].mxu0
  %v1053 = vadd.f32 0.0, %v1052
  %v1054 = vpop.f32.mrb[0].mxu0
  %v1055 = vpop.f32.mrb[0].mxu0
  %v1056 = vadd.f32 0.0, %v1055
  %v1057 = vpop.f32.mrb[0].mxu0
  %1058 = vmatprep.mubr.bf16.mxu0 0
  %1059 = vmatmul.mubr.bf16.gmra.mrb[0].mxu0 %v215
  %v1060 = vpop.f32.mrb[0].mxu0
  %v1061 = vadd.f32 0.0, %v1060
  %v1062 = vpop.f32.mrb[0].mxu0
  %v1063 = vpop.f32.mrb[0].mxu0
  %v1064 = vadd.f32 0.0, %v1063
  %v1065 = vpop.f32.mrb[0].mxu0
  %1066 = vmatprep.mubr.bf16.mxu0 0
  %1067 = vmatmul.mubr.bf16.gmra.mrb[0].mxu0 %v218
  %v1068 = vpop.f32.mrb[0].mxu0
  %v1069 = vadd.f32 0.0, %v1068
  %v1070 = vpop.f32.mrb[0].mxu0
  %v1071 = vpop.f32.mrb[0].mxu0
  %v1072 = vadd.f32 0.0, %v1071
  %v1073 = vpop.f32.mrb[0].mxu0
  %1074 = vdwg.mxu0
  %v1075 = vmax.f32 %v837, %v933
  %v1076 = vmax.f32 %v838, %v936
  %v1077 = vmax.f32 %v839, %v941
  %v1078 = vmax.f32 %v840, %v944
  %v1079 = vmax.f32 %v841, %v949
  %v1080 = vmax.f32 %v842, %v952
  %v1081 = vmax.f32 %v843, %v957
  %v1082 = vmax.f32 %v844, %v960
  %v1083 = vmax.f32 %v845, %v965
  %v1084 = vmax.f32 %v846, %v968
  %v1085 = vmax.f32 %v847, %v973
  %v1086 = vmax.f32 %v848, %v976
  %v1087 = vmax.f32 %v849, %v981
  %v1088 = vmax.f32 %v850, %v984
  %v1089 = vmax.f32 %v851, %v989
  %v1090 = vmax.f32 %v852, %v992
  %v1091 = vmax.f32 %v853, %v997
  %v1092 = vmax.f32 %v854, %v1000
  %v1093 = vmax.f32 %v855, %v1005
  %v1094 = vmax.f32 %v856, %v1008
  %v1095 = vmax.f32 %v857, %v1013
  %v1096 = vmax.f32 %v858, %v1016
  %v1097 = vmax.f32 %v859, %v1021
  %v1098 = vmax.f32 %v860, %v1024
  %v1099 = vmax.f32 %v861, %v1029
  %v1100 = vmax.f32 %v862, %v1032
  %v1101 = vmax.f32 %v863, %v1037
  %v1102 = vmax.f32 %v864, %v1040
  %v1103 = vmax.f32 %v865, %v1045
  %v1104 = vmax.f32 %v866, %v1048
  %v1105 = vmax.f32 %v867, %v1053
  %v1106 = vmax.f32 %v868, %v1056
  %v1107 = vmax.f32 %v869, %v1061
  %v1108 = vmax.f32 %v870, %v1064
  %v1109 = vmax.f32 %v871, %v1069
  %v1110 = vmax.f32 %v872, %v1072
  %v1111 = vld [vmem:[%s2] sm:$0x1]
  %v1113 = vlaneseq
  %v1114 = vshrl.u32 %v1113, 7
  %v1115 = vsub.s32 0, %v1114
  %v1116 = vrot.slane %v1111, %v1115
  %v1118 = vadd.f32 %v1075, %v1116
  %v1119 = vadd.f32 %v1076, %v1116
  %v1120 = vadd.f32 %v1077, %v1116
  %v1121 = vadd.f32 %v1078, %v1116
  %v1122 = vadd.f32 %v1079, %v1116
  %v1123 = vadd.f32 %v1080, %v1116
  %v1124 = vadd.f32 %v1081, %v1116
  %v1125 = vadd.f32 %v1082, %v1116
  %v1126 = vadd.f32 %v1083, %v1116
  %v1127 = vadd.f32 %v1084, %v1116
  %v1128 = vadd.f32 %v1085, %v1116
  %v1129 = vadd.f32 %v1086, %v1116
  %v1130 = vadd.f32 %v1087, %v1116
  %v1131 = vadd.f32 %v1088, %v1116
  %v1132 = vadd.f32 %v1089, %v1116
  %v1133 = vadd.f32 %v1090, %v1116
  %v1134 = vadd.f32 %v1091, %v1116
  %v1135 = vadd.f32 %v1092, %v1116
  %v1136 = vadd.f32 %v1093, %v1116
  %v1137 = vadd.f32 %v1094, %v1116
  %v1138 = vadd.f32 %v1095, %v1116
  %v1139 = vadd.f32 %v1096, %v1116
  %v1140 = vadd.f32 %v1097, %v1116
  %v1141 = vadd.f32 %v1098, %v1116
  %v1142 = vadd.f32 %v1099, %v1116
  %v1143 = vadd.f32 %v1100, %v1116
  %v1144 = vadd.f32 %v1101, %v1116
  %v1145 = vadd.f32 %v1102, %v1116
  %v1146 = vadd.f32 %v1103, %v1116
  %v1147 = vadd.f32 %v1104, %v1116
  %v1148 = vadd.f32 %v1105, %v1116
  %v1149 = vadd.f32 %v1106, %v1116
  %v1150 = vadd.f32 %v1107, %v1116
  %v1151 = vadd.f32 %v1108, %v1116
  %v1152 = vadd.f32 %v1109, %v1116
  %v1153 = vadd.f32 %v1110, %v1116
  %v1154 = vmax.f32 %v1118, 0.0
  %v1155 = vmax.f32 %v1119, 0.0
  %v1156 = vmax.f32 %v1120, 0.0
  %v1157 = vmax.f32 %v1121, 0.0
  %v1158 = vmax.f32 %v1122, 0.0
  %v1159 = vmax.f32 %v1123, 0.0
  %v1160 = vmax.f32 %v1124, 0.0
  %v1161 = vmax.f32 %v1125, 0.0
  %v1162 = vmax.f32 %v1126, 0.0
  %v1163 = vmax.f32 %v1127, 0.0
  %v1164 = vmax.f32 %v1128, 0.0
  %v1165 = vmax.f32 %v1129, 0.0
  %v1166 = vmax.f32 %v1130, 0.0
  %v1167 = vmax.f32 %v1131, 0.0
  %v1168 = vmax.f32 %v1132, 0.0
  %v1169 = vmax.f32 %v1133, 0.0
  %v1170 = vmax.f32 %v1134, 0.0
  %v1171 = vmax.f32 %v1135, 0.0
  %v1172 = vmax.f32 %v1136, 0.0
  %v1173 = vmax.f32 %v1137, 0.0
  %v1174 = vmax.f32 %v1138, 0.0
  %v1175 = vmax.f32 %v1139, 0.0
  %v1176 = vmax.f32 %v1140, 0.0
  %v1177 = vmax.f32 %v1141, 0.0
  %v1178 = vmax.f32 %v1142, 0.0
  %v1179 = vmax.f32 %v1143, 0.0
  %v1180 = vmax.f32 %v1144, 0.0
  %v1181 = vmax.f32 %v1145, 0.0
  %v1182 = vmax.f32 %v1146, 0.0
  %v1183 = vmax.f32 %v1147, 0.0
  %v1184 = vmax.f32 %v1148, 0.0
  %v1185 = vmax.f32 %v1149, 0.0
  %v1186 = vmax.f32 %v1150, 0.0
  %v1187 = vmax.f32 %v1151, 0.0
  %v1188 = vmax.f32 %v1152, 0.0
  %v1189 = vmax.f32 %v1153, 0.0
  %v1190 = vpack.c.bf16 %v1155, %v1154
  %v1191 = vpack.c.bf16 %v1157, %v1156
  %v1192 = vpack.c.bf16 %v1159, %v1158
  %v1193 = vpack.c.bf16 %v1161, %v1160
  %v1194 = vpack.c.bf16 %v1163, %v1162
  %v1195 = vpack.c.bf16 %v1165, %v1164
  %v1196 = vpack.c.bf16 %v1167, %v1166
  %v1197 = vpack.c.bf16 %v1169, %v1168
  %v1198 = vpack.c.bf16 %v1171, %v1170
  %v1199 = vpack.c.bf16 %v1173, %v1172
  %v1200 = vpack.c.bf16 %v1175, %v1174
  %v1201 = vpack.c.bf16 %v1177, %v1176
  %v1202 = vpack.c.bf16 %v1179, %v1178
  %v1203 = vpack.c.bf16 %v1181, %v1180
  %v1204 = vpack.c.bf16 %v1183, %v1182
  %v1205 = vpack.c.bf16 %v1185, %v1184
  %v1206 = vpack.c.bf16 %v1187, %v1186
  %v1207 = vpack.c.bf16 %v1189, %v1188
  %v1226 = vunpack.c.l.b16 %v1190
  %v1227 = vunpack.c.h.b16 %v1190
  %v1228 = vunpack.c.l.b16 %v1191
  %v1229 = vunpack.c.h.b16 %v1191
  %v1230 = vunpack.c.l.b16 %v1192
  %v1231 = vunpack.c.h.b16 %v1192
  %v1232 = vunpack.c.l.b16 %v1193
  %v1233 = vunpack.c.h.b16 %v1193
  %v1234 = vunpack.c.l.b16 %v1194
  %v1235 = vunpack.c.h.b16 %v1194
  %v1236 = vunpack.c.l.b16 %v1195
  %v1237 = vunpack.c.h.b16 %v1195
  %v1238 = vunpack.c.l.b16 %v1196
  %v1239 = vunpack.c.h.b16 %v1196
  %v1240 = vunpack.c.l.b16 %v1197
  %v1241 = vunpack.c.h.b16 %v1197
  %v1242 = vunpack.c.l.b16 %v1198
  %v1243 = vunpack.c.h.b16 %v1198
  %v1244 = vunpack.c.l.b16 %v1199
  %v1245 = vunpack.c.h.b16 %v1199
  %v1246 = vunpack.c.l.b16 %v1200
  %v1247 = vunpack.c.h.b16 %v1200
  %v1248 = vunpack.c.l.b16 %v1201
  %v1249 = vunpack.c.h.b16 %v1201
  %v1250 = vunpack.c.l.b16 %v1202
  %v1251 = vunpack.c.h.b16 %v1202
  %v1252 = vunpack.c.l.b16 %v1203
  %v1253 = vunpack.c.h.b16 %v1203
  %v1254 = vunpack.c.l.b16 %v1204
  %v1255 = vunpack.c.h.b16 %v1204
  %v1256 = vunpack.c.l.b16 %v1205
  %v1257 = vunpack.c.h.b16 %v1205
  %v1258 = vunpack.c.l.b16 %v1206
  %v1259 = vunpack.c.h.b16 %v1206
  %v1260 = vunpack.c.l.b16 %v1207
  %v1261 = vunpack.c.h.b16 %v1207
  %v1262 = vpack.c.b16 %v1226, %v1226
  %v1263 = vpack.c.b16 %v1227, %v1227
  %v1264 = vpack.c.b16 %v1228, %v1228
  %v1265 = vpack.c.b16 %v1229, %v1229
  %v1266 = vpack.c.b16 %v1230, %v1230
  %v1267 = vpack.c.b16 %v1231, %v1231
  %v1268 = vpack.c.b16 %v1232, %v1232
  %v1269 = vpack.c.b16 %v1233, %v1233
  %v1270 = vpack.c.b16 %v1234, %v1234
  %v1271 = vpack.c.b16 %v1235, %v1235
  %v1272 = vpack.c.b16 %v1236, %v1236
  %v1273 = vpack.c.b16 %v1237, %v1237
  %v1274 = vpack.c.b16 %v1238, %v1238
  %v1275 = vpack.c.b16 %v1239, %v1239
  %v1276 = vpack.c.b16 %v1240, %v1240
  %v1277 = vpack.c.b16 %v1241, %v1241
  %v1278 = vpack.c.b16 %v1242, %v1242
  %v1279 = vpack.c.b16 %v1243, %v1243
  %v1280 = vpack.c.b16 %v1244, %v1244
  %v1281 = vpack.c.b16 %v1245, %v1245
  %v1282 = vpack.c.b16 %v1246, %v1246
  %v1283 = vpack.c.b16 %v1247, %v1247
  %v1284 = vpack.c.b16 %v1248, %v1248
  %v1285 = vpack.c.b16 %v1249, %v1249
  %v1286 = vpack.c.b16 %v1250, %v1250
  %v1287 = vpack.c.b16 %v1251, %v1251
  %v1288 = vpack.c.b16 %v1252, %v1252
  %v1289 = vpack.c.b16 %v1253, %v1253
  %v1290 = vpack.c.b16 %v1254, %v1254
  %v1291 = vpack.c.b16 %v1255, %v1255
  %v1292 = vpack.c.b16 %v1256, %v1256
  %v1293 = vpack.c.b16 %v1257, %v1257
  %v1294 = vpack.c.b16 %v1258, %v1258
  %v1295 = vpack.c.b16 %v1259, %v1259
  %v1296 = vpack.c.b16 %v1260, %v1260
  %v1297 = vpack.c.b16 %v1261, %v1261
  %1334 = vst [vmem:[%s3] sm:$0xf] %v1262
  %1335 = vst [vmem:[%s3 + $0x4] sm:$0xf] %v1263
  %1336 = vst [vmem:[%s3 + $0x8] sm:$0xf] %v1264
  %1337 = vst [vmem:[%s3 + $0xc] sm:$0xf] %v1265
  %1338 = vst [vmem:[%s3 + $0x10] sm:$0xf] %v1266
  %1339 = vst [vmem:[%s3 + $0x14] sm:$0xf] %v1267
  %1340 = vst [vmem:[%s3 + $0x18] sm:$0xf] %v1268
  %1341 = vst [vmem:[%s3 + $0x1c] sm:$0xf] %v1269
  %1342 = vst [vmem:[%s3 + $0x20] sm:$0xf] %v1270
  %1343 = vst [vmem:[%s3 + $0x24] sm:$0xf] %v1271
  %1344 = vst [vmem:[%s3 + $0x28] sm:$0xf] %v1272
  %1345 = vst [vmem:[%s3 + $0x2c] sm:$0xf] %v1273
  %1346 = vst [vmem:[%s3 + $0x30] sm:$0xf] %v1274
  %1347 = vst [vmem:[%s3 + $0x34] sm:$0xf] %v1275
  %1348 = vst [vmem:[%s3 + $0x38] sm:$0xf] %v1276
  %1349 = vst [vmem:[%s3 + $0x3c] sm:$0xf] %v1277
  %1350 = vst [vmem:[%s3 + $0x40] sm:$0xf] %v1278
  %1351 = vst [vmem:[%s3 + $0x44] sm:$0xf] %v1279
  %1352 = vst [vmem:[%s3 + $0x48] sm:$0xf] %v1280
  %1353 = vst [vmem:[%s3 + $0x4c] sm:$0xf] %v1281
  %1354 = vst [vmem:[%s3 + $0x50] sm:$0xf] %v1282
  %1355 = vst [vmem:[%s3 + $0x54] sm:$0xf] %v1283
  %1356 = vst [vmem:[%s3 + $0x58] sm:$0xf] %v1284
  %1357 = vst [vmem:[%s3 + $0x5c] sm:$0xf] %v1285
  %1358 = vst [vmem:[%s3 + $0x60] sm:$0xf] %v1286
  %1359 = vst [vmem:[%s3 + $0x64] sm:$0xf] %v1287
  %1360 = vst [vmem:[%s3 + $0x68] sm:$0xf] %v1288
  %1361 = vst [vmem:[%s3 + $0x6c] sm:$0xf] %v1289
  %1362 = vst [vmem:[%s3 + $0x70] sm:$0xf] %v1290
  %1363 = vst [vmem:[%s3 + $0x74] sm:$0xf] %v1291
  %1364 = vst [vmem:[%s3 + $0x78] sm:$0xf] %v1292
  %1365 = vst [vmem:[%s3 + $0x7c] sm:$0xf] %v1293
  %1366 = vst [vmem:[%s3 + $0x80] sm:$0xf] %v1294
  %1367 = vst [vmem:[%s3 + $0x84] sm:$0xf] %v1295
  %1368 = vst [vmem:[%s3 + $0x88] sm:$0xf] %v1296
  %1369 = vst [vmem:[%s3 + $0x8c] sm:$0xf] %v1297
  // Predicated region
  $region14: #{net_forward.3} parent=0 // pred_check
    _
  $region15: #{net_forward.3} parent=0 // pred_check_branch
    %1371 = sbr.rel (0) target = $region17
  $region16: #{net_forward.3} parent=0 // pred_region
    _
  $region17: #{net_forward.3} parent=0 // pred_fallthru
    _
  // Predicated region
  $region18: #{net_forward.3} parent=0 // pred_check
    _
  $region19: #{net_forward.3} parent=0 // pred_check_branch
    %1373 = sbr.rel (0) target = $region21
  $region20: #{net_forward.3} parent=0 // pred_region
    _
  $region21: #{net_forward.3} parent=0 // pred_fallthru
    _

// kernel: net_forward.5
$region0: #{net_forward.5}
  #allocation0 [shape = 'u32[]', space=smem, size = 0x4, offset = 0x4, fixed_abs, tag = 'smem constant byte address 0x4 - core index']
  #allocation1 [shape = 'u32[144,128]{1,0:T(1,128)}', space=vmem, size = 0x12000, scoped, tag = 'internal scratch']
  %s0 = inlined_call_operand.vmem [shape: bf16[2,2048], index: 0, kind: input, shape index: {}]
  %s1 = inlined_call_operand.vmem [shape: bf16[2048,128], index: 1, kind: input, shape index: {}]
  %s2 = inlined_call_operand.vmem [shape: f32[1,128], index: 2, kind: input, shape index: {}]
  %s3 = inlined_call_operand.vmem [shape: bf16[128,128], index: 3, kind: input, shape index: {}]
  %s4 = inlined_call_operand.vmem [shape: f32[1,128], index: 4, kind: input, shape index: {}]
  %s5 = inlined_call_operand.hbm [shape: f32[2,128], index: 5, kind: output, shape index: {}]
  %s6 = sld [smem:[#allocation0]]
  $region30: #{net_forward.5} parent=0
    _
  %s8 = ssub.s32 1, %s6
  %s9 = scalar_select 0, %s8, %s6
  $region1: #{net_forward.5} parent=0
    #allocation2 [shape = 'u8[1024]{0}', space=vmem, size = 0x400, scoped, tag = 'output window, operand 0, single buffered']
    #allocation3 [shape = 's32[1]{0}', space=sflag, size = 0x4, scoped, tag = 'scoped memory for net_forward.5']
    %10 = vsyncpa [#allocation3], 0
    // Predicated region
    $region2: #{net_forward.5} parent=1 // pred_check
      _
    $region3: #{net_forward.5} parent=1 // pred_check_branch
      %12 = sbr.rel (0) target = $region5
    $region4: #{net_forward.5} parent=1 // pred_region
      _
    $region5: #{net_forward.5} parent=1 // pred_fallthru
      _
    // Predicated region
    $region6: #{net_forward.5} parent=1 // pred_check
      _
    $region7: #{net_forward.5} parent=1 // pred_check_branch
      %14 = sbr.rel (0) target = $region9
    $region8: #{net_forward.5} parent=1 // pred_region
      _
    $region9: #{net_forward.5} parent=1 // pred_fallthru
      _
    // Predicated region
    $region10: #{net_forward.5} parent=1 // pred_check
      _
    $region11: #{net_forward.5} parent=1 // pred_check_branch
      %16 = sbr.rel (0) target = $region13
    $region12: #{net_forward.5} parent=1 // pred_region
      _
    $region13: #{net_forward.5} parent=1 // pred_fallthru
      _
    // Predicated region
    $region14: #{net_forward.5} parent=1 // pred_check
      _
    $region15: #{net_forward.5} parent=1 // pred_check_branch
      %18 = sbr.rel (0) target = $region17
    $region16: #{net_forward.5} parent=1 // pred_region
      _
    $region17: #{net_forward.5} parent=1 // pred_fallthru
      _
    // Predicated region
    $region18: #{net_forward.5} parent=1 // pred_check
      _
    $region19: #{net_forward.5} parent=1 // pred_check_branch
      %20 = sbr.rel (0) target = $region21
    $region20: #{net_forward.5} parent=1 // pred_region
      _
    $region21: #{net_forward.5} parent=1 // pred_fallthru
      _
    %v22 = vld [vmem:[%s0] sm:$0xff]
    %v23 = vld [vmem:[%s0 + $0x8] sm:$0xff]
    %v24 = vld [vmem:[%s1] sm:$0xf]
    %v25 = vld [vmem:[%s1 + $0x4] sm:$0xf]
    %v26 = vld [vmem:[%s1 + $0x8] sm:$0xf]
    %v27 = vld [vmem:[%s1 + $0xc] sm:$0xf]
    %v28 = vld [vmem:[%s1 + $0x10] sm:$0xf]
    %v29 = vld [vmem:[%s1 + $0x14] sm:$0xf]
    %v30 = vld [vmem:[%s1 + $0x18] sm:$0xf]
    %v31 = vld [vmem:[%s1 + $0x1c] sm:$0xf]
    %v32 = vld [vmem:[%s1 + $0x20] sm:$0xf]
    %v33 = vld [vmem:[%s1 + $0x24] sm:$0xf]
    %v34 = vld [vmem:[%s1 + $0x28] sm:$0xf]
    %v35 = vld [vmem:[%s1 + $0x2c] sm:$0xf]
    %v36 = vld [vmem:[%s1 + $0x30] sm:$0xf]
    %v37 = vld [vmem:[%s1 + $0x34] sm:$0xf]
    %v38 = vld [vmem:[%s1 + $0x38] sm:$0xf]
    %v39 = vld [vmem:[%s1 + $0x3c] sm:$0xf]
    %v40 = vld [vmem:[%s1 + $0x40] sm:$0xf]
    %v41 = vld [vmem:[%s1 + $0x44] sm:$0xf]
    %v42 = vld [vmem:[%s1 + $0x48] sm:$0xf]
    %v43 = vld [vmem:[%s1 + $0x4c] sm:$0xf]
    %v44 = vld [vmem:[%s1 + $0x50] sm:$0xf]
    %v45 = vld [vmem:[%s1 + $0x54] sm:$0xf]
    %v46 = vld [vmem:[%s1 + $0x58] sm:$0xf]
    %v47 = vld [vmem:[%s1 + $0x5c] sm:$0xf]
    %v48 = vld [vmem:[%s1 + $0x60] sm:$0xf]
    %v49 = vld [vmem:[%s1 + $0x64] sm:$0xf]
    %v50 = vld [vmem:[%s1 + $0x68] sm:$0xf]
    %v51 = vld [vmem:[%s1 + $0x6c] sm:$0xf]
    %v52 = vld [vmem:[%s1 + $0x70] sm:$0xf]
    %v53 = vld [vmem:[%s1 + $0x74] sm:$0xf]
    %v54 = vld [vmem:[%s1 + $0x78] sm:$0xf]
    %v55 = vld [vmem:[%s1 + $0x7c] sm:$0xf]
    %v56 = vld [vmem:[%s1 + $0x80] sm:$0xf]
    %v57 = vld [vmem:[%s1 + $0x84] sm:$0xf]
    %v58 = vld [vmem:[%s1 + $0x88] sm:$0xf]
    %v59 = vld [vmem:[%s1 + $0x8c] sm:$0xf]
    %v60 = vld [vmem:[%s1 + $0x90] sm:$0xf]
    %v61 = vld [vmem:[%s1 + $0x94] sm:$0xf]
    %v62 = vld [vmem:[%s1 + $0x98] sm:$0xf]
    %v63 = vld [vmem:[%s1 + $0x9c] sm:$0xf]
    %v64 = vld [vmem:[%s1 + $0xa0] sm:$0xf]
    %v65 = vld [vmem:[%s1 + $0xa4] sm:$0xf]
    %v66 = vld [vmem:[%s1 + $0xa8] sm:$0xf]
    %v67 = vld [vmem:[%s1 + $0xac] sm:$0xf]
    %v68 = vld [vmem:[%s1 + $0xb0] sm:$0xf]
    %v69 = vld [vmem:[%s1 + $0xb4] sm:$0xf]
    %v70 = vld [vmem:[%s1 + $0xb8] sm:$0xf]
    %v71 = vld [vmem:[%s1 + $0xbc] sm:$0xf]
    %v72 = vld [vmem:[%s1 + $0xc0] sm:$0xf]
    %v73 = vld [vmem:[%s1 + $0xc4] sm:$0xf]
    %v74 = vld [vmem:[%s1 + $0xc8] sm:$0xf]
    %v75 = vld [vmem:[%s1 + $0xcc] sm:$0xf]
    %v76 = vld [vmem:[%s1 + $0xd0] sm:$0xf]
    %v77 = vld [vmem:[%s1 + $0xd4] sm:$0xf]
    %v78 = vld [vmem:[%s1 + $0xd8] sm:$0xf]
    %v79 = vld [vmem:[%s1 + $0xdc] sm:$0xf]
    %v80 = vld [vmem:[%s1 + $0xe0] sm:$0xf]
    %v81 = vld [vmem:[%s1 + $0xe4] sm:$0xf]
    %v82 = vld [vmem:[%s1 + $0xe8] sm:$0xf]
    %v83 = vld [vmem:[%s1 + $0xec] sm:$0xf]
    %v84 = vld [vmem:[%s1 + $0xf0] sm:$0xf]
    %v85 = vld [vmem:[%s1 + $0xf4] sm:$0xf]
    %v86 = vld [vmem:[%s1 + $0xf8] sm:$0xf]
    %v87 = vld [vmem:[%s1 + $0xfc] sm:$0xf]
    %v88 = vld [vmem:[%s1 + $0x100] sm:$0xf]
    %v89 = vld [vmem:[%s1 + $0x104] sm:$0xf]
    %v90 = vld [vmem:[%s1 + $0x108] sm:$0xf]
    %v91 = vld [vmem:[%s1 + $0x10c] sm:$0xf]
    %v92 = vld [vmem:[%s1 + $0x110] sm:$0xf]
    %v93 = vld [vmem:[%s1 + $0x114] sm:$0xf]
    %v94 = vld [vmem:[%s1 + $0x118] sm:$0xf]
    %v95 = vld [vmem:[%s1 + $0x11c] sm:$0xf]
    %v96 = vld [vmem:[%s1 + $0x120] sm:$0xf]
    %v97 = vld [vmem:[%s1 + $0x124] sm:$0xf]
    %v98 = vld [vmem:[%s1 + $0x128] sm:$0xf]
    %v99 = vld [vmem:[%s1 + $0x12c] sm:$0xf]
    %v100 = vld [vmem:[%s1 + $0x130] sm:$0xf]
    %v101 = vld [vmem:[%s1 + $0x134] sm:$0xf]
    %v102 = vld [vmem:[%s1 + $0x138] sm:$0xf]
    %v103 = vld [vmem:[%s1 + $0x13c] sm:$0xf]
    %v104 = vld [vmem:[%s1 + $0x140] sm:$0xf]
    %v105 = vld [vmem:[%s1 + $0x144] sm:$0xf]
    %v106 = vld [vmem:[%s1 + $0x148] sm:$0xf]
    %v107 = vld [vmem:[%s1 + $0x14c] sm:$0xf]
    %v108 = vld [vmem:[%s1 + $0x150] sm:$0xf]
    %v109 = vld [vmem:[%s1 + $0x154] sm:$0xf]
    %v110 = vld [vmem:[%s1 + $0x158] sm:$0xf]
    %v111 = vld [vmem:[%s1 + $0x15c] sm:$0xf]
    %v112 = vld [vmem:[%s1 + $0x160] sm:$0xf]
    %v113 = vld [vmem:[%s1 + $0x164] sm:$0xf]
    %v114 = vld [vmem:[%s1 + $0x168] sm:$0xf]
    %v115 = vld [vmem:[%s1 + $0x16c] sm:$0xf]
    %v116 = vld [vmem:[%s1 + $0x170] sm:$0xf]
    %v117 = vld [vmem:[%s1 + $0x174] sm:$0xf]
    %v118 = vld [vmem:[%s1 + $0x178] sm:$0xf]
    %v119 = vld [vmem:[%s1 + $0x17c] sm:$0xf]
    %v120 = vld [vmem:[%s1 + $0x180] sm:$0xf]
    %v121 = vld [vmem:[%s1 + $0x184] sm:$0xf]
    %v122 = vld [vmem:[%s1 + $0x188] sm:$0xf]
    %v123 = vld [vmem:[%s1 + $0x18c] sm:$0xf]
    %v124 = vld [vmem:[%s1 + $0x190] sm:$0xf]
    %v125 = vld [vmem:[%s1 + $0x194] sm:$0xf]
    %v126 = vld [vmem:[%s1 + $0x198] sm:$0xf]
    %v127 = vld [vmem:[%s1 + $0x19c] sm:$0xf]
    %v128 = vld [vmem:[%s1 + $0x1a0] sm:$0xf]
    %v129 = vld [vmem:[%s1 + $0x1a4] sm:$0xf]
    %v130 = vld [vmem:[%s1 + $0x1a8] sm:$0xf]
    %v131 = vld [vmem:[%s1 + $0x1ac] sm:$0xf]
    %v132 = vld [vmem:[%s1 + $0x1b0] sm:$0xf]
    %v133 = vld [vmem:[%s1 + $0x1b4] sm:$0xf]
    %v134 = vld [vmem:[%s1 + $0x1b8] sm:$0xf]
    %v135 = vld [vmem:[%s1 + $0x1bc] sm:$0xf]
    %v136 = vld [vmem:[%s1 + $0x1c0] sm:$0xf]
    %v137 = vld [vmem:[%s1 + $0x1c4] sm:$0xf]
    %v138 = vld [vmem:[%s1 + $0x1c8] sm:$0xf]
    %v139 = vld [vmem:[%s1 + $0x1cc] sm:$0xf]
    %v140 = vld [vmem:[%s1 + $0x1d0] sm:$0xf]
    %v141 = vld [vmem:[%s1 + $0x1d4] sm:$0xf]
    %v142 = vld [vmem:[%s1 + $0x1d8] sm:$0xf]
    %v143 = vld [vmem:[%s1 + $0x1dc] sm:$0xf]
    %v144 = vld [vmem:[%s1 + $0x1e0] sm:$0xf]
    %v145 = vld [vmem:[%s1 + $0x1e4] sm:$0xf]
    %v146 = vld [vmem:[%s1 + $0x1e8] sm:$0xf]
    %v147 = vld [vmem:[%s1 + $0x1ec] sm:$0xf]
    %v148 = vld [vmem:[%s1 + $0x1f0] sm:$0xf]
    %v149 = vld [vmem:[%s1 + $0x1f4] sm:$0xf]
    %v150 = vld [vmem:[%s1 + $0x1f8] sm:$0xf]
    %v151 = vld [vmem:[%s1 + $0x1fc] sm:$0xf]
    %v152 = vld [vmem:[%s1 + $0x200] sm:$0xf]
    %v153 = vld [vmem:[%s1 + $0x204] sm:$0xf]
    %v154 = vld [vmem:[%s1 + $0x208] sm:$0xf]
    %v155 = vld [vmem:[%s1 + $0x20c] sm:$0xf]
    %v156 = vld [vmem:[%s1 + $0x210] sm:$0xf]
    %v157 = vld [vmem:[%s1 + $0x214] sm:$0xf]
    %v158 = vld [vmem:[%s1 + $0x218] sm:$0xf]
    %v159 = vld [vmem:[%s1 + $0x21c] sm:$0xf]
    %v160 = vld [vmem:[%s1 + $0x220] sm:$0xf]
    %v161 = vld [vmem:[%s1 + $0x224] sm:$0xf]
    %v162 = vld [vmem:[%s1 + $0x228] sm:$0xf]
    %v163 = vld [vmem:[%s1 + $0x22c] sm:$0xf]
    %v164 = vld [vmem:[%s1 + $0x230] sm:$0xf]
    %v165 = vld [vmem:[%s1 + $0x234] sm:$0xf]
    %v166 = vld [vmem:[%s1 + $0x238] sm:$0xf]
    %v167 = vld [vmem:[%s1 + $0x23c] sm:$0xf]
    %v168 = vld [vmem:[%s1 + $0x240] sm:$0xf]
    %v169 = vld [vmem:[%s1 + $0x244] sm:$0xf]
    %v170 = vld [vmem:[%s1 + $0x248] sm:$0xf]
    %v171 = vld [vmem:[%s1 + $0x24c] sm:$0xf]
    %v172 = vld [vmem:[%s1 + $0x250] sm:$0xf]
    %v173 = vld [vmem:[%s1 + $0x254] sm:$0xf]
    %v174 = vld [vmem:[%s1 + $0x258] sm:$0xf]
    %v175 = vld [vmem:[%s1 + $0x25c] sm:$0xf]
    %v176 = vld [vmem:[%s1 + $0x260] sm:$0xf]
    %v177 = vld [vmem:[%s1 + $0x264] sm:$0xf]
    %v178 = vld [vmem:[%s1 + $0x268] sm:$0xf]
    %v179 = vld [vmem:[%s1 + $0x26c] sm:$0xf]
    %v180 = vld [vmem:[%s1 + $0x270] sm:$0xf]
    %v181 = vld [vmem:[%s1 + $0x274] sm:$0xf]
    %v182 = vld [vmem:[%s1 + $0x278] sm:$0xf]
    %v183 = vld [vmem:[%s1 + $0x27c] sm:$0xf]
    %v184 = vld [vmem:[%s1 + $0x280] sm:$0xf]
    %v185 = vld [vmem:[%s1 + $0x284] sm:$0xf]
    %v186 = vld [vmem:[%s1 + $0x288] sm:$0xf]
    %v187 = vld [vmem:[%s1 + $0x28c] sm:$0xf]
    %v188 = vld [vmem:[%s1 + $0x290] sm:$0xf]
    %v189 = vld [vmem:[%s1 + $0x294] sm:$0xf]
    %v190 = vld [vmem:[%s1 + $0x298] sm:$0xf]
    %v191 = vld [vmem:[%s1 + $0x29c] sm:$0xf]
    %v192 = vld [vmem:[%s1 + $0x2a0] sm:$0xf]
    %v193 = vld [vmem:[%s1 + $0x2a4] sm:$0xf]
    %v194 = vld [vmem:[%s1 + $0x2a8] sm:$0xf]
    %v195 = vld [vmem:[%s1 + $0x2ac] sm:$0xf]
    %v196 = vld [vmem:[%s1 + $0x2b0] sm:$0xf]
    %v197 = vld [vmem:[%s1 + $0x2b4] sm:$0xf]
    %v198 = vld [vmem:[%s1 + $0x2b8] sm:$0xf]
    %v199 = vld [vmem:[%s1 + $0x2bc] sm:$0xf]
    %v200 = vld [vmem:[%s1 + $0x2c0] sm:$0xf]
    %v201 = vld [vmem:[%s1 + $0x2c4] sm:$0xf]
    %v202 = vld [vmem:[%s1 + $0x2c8] sm:$0xf]
    %v203 = vld [vmem:[%s1 + $0x2cc] sm:$0xf]
    %v204 = vld [vmem:[%s1 + $0x2d0] sm:$0xf]
    %v205 = vld [vmem:[%s1 + $0x2d4] sm:$0xf]
    %v206 = vld [vmem:[%s1 + $0x2d8] sm:$0xf]
    %v207 = vld [vmem:[%s1 + $0x2dc] sm:$0xf]
    %v208 = vld [vmem:[%s1 + $0x2e0] sm:$0xf]
    %v209 = vld [vmem:[%s1 + $0x2e4] sm:$0xf]
    %v210 = vld [vmem:[%s1 + $0x2e8] sm:$0xf]
    %v211 = vld [vmem:[%s1 + $0x2ec] sm:$0xf]
    %v212 = vld [vmem:[%s1 + $0x2f0] sm:$0xf]
    %v213 = vld [vmem:[%s1 + $0x2f4] sm:$0xf]
    %v214 = vld [vmem:[%s1 + $0x2f8] sm:$0xf]
    %v215 = vld [vmem:[%s1 + $0x2fc] sm:$0xf]
    %v216 = vld [vmem:[%s1 + $0x300] sm:$0xf]
    %v217 = vld [vmem:[%s1 + $0x304] sm:$0xf]
    %v218 = vld [vmem:[%s1 + $0x308] sm:$0xf]
    %v219 = vld [vmem:[%s1 + $0x30c] sm:$0xf]
    %v220 = vld [vmem:[%s1 + $0x310] sm:$0xf]
    %v221 = vld [vmem:[%s1 + $0x314] sm:$0xf]
    %v222 = vld [vmem:[%s1 + $0x318] sm:$0xf]
    %v223 = vld [vmem:[%s1 + $0x31c] sm:$0xf]
    %v224 = vld [vmem:[%s1 + $0x320] sm:$0xf]
    %v225 = vld [vmem:[%s1 + $0x324] sm:$0xf]
    %v226 = vld [vmem:[%s1 + $0x328] sm:$0xf]
    %v227 = vld [vmem:[%s1 + $0x32c] sm:$0xf]
    %v228 = vld [vmem:[%s1 + $0x330] sm:$0xf]
    %v229 = vld [vmem:[%s1 + $0x334] sm:$0xf]
    %v230 = vld [vmem:[%s1 + $0x338] sm:$0xf]
    %v231 = vld [vmem:[%s1 + $0x33c] sm:$0xf]
    %v232 = vld [vmem:[%s1 + $0x340] sm:$0xf]
    %v233 = vld [vmem:[%s1 + $0x344] sm:$0xf]
    %v234 = vld [vmem:[%s1 + $0x348] sm:$0xf]
    %v235 = vld [vmem:[%s1 + $0x34c] sm:$0xf]
    %v236 = vld [vmem:[%s1 + $0x350] sm:$0xf]
    %v237 = vld [vmem:[%s1 + $0x354] sm:$0xf]
    %v238 = vld [vmem:[%s1 + $0x358] sm:$0xf]
    %v239 = vld [vmem:[%s1 + $0x35c] sm:$0xf]
    %v240 = vld [vmem:[%s1 + $0x360] sm:$0xf]
    %v241 = vld [vmem:[%s1 + $0x364] sm:$0xf]
    %v242 = vld [vmem:[%s1 + $0x368] sm:$0xf]
    %v243 = vld [vmem:[%s1 + $0x36c] sm:$0xf]
    %v244 = vld [vmem:[%s1 + $0x370] sm:$0xf]
    %v245 = vld [vmem:[%s1 + $0x374] sm:$0xf]
    %v246 = vld [vmem:[%s1 + $0x378] sm:$0xf]
    %v247 = vld [vmem:[%s1 + $0x37c] sm:$0xf]
    %v248 = vld [vmem:[%s1 + $0x380] sm:$0xf]
    %v249 = vld [vmem:[%s1 + $0x384] sm:$0xf]
    %v250 = vld [vmem:[%s1 + $0x388] sm:$0xf]
    %v251 = vld [vmem:[%s1 + $0x38c] sm:$0xf]
    %v252 = vld [vmem:[%s1 + $0x390] sm:$0xf]
    %v253 = vld [vmem:[%s1 + $0x394] sm:$0xf]
    %v254 = vld [vmem:[%s1 + $0x398] sm:$0xf]
    %v255 = vld [vmem:[%s1 + $0x39c] sm:$0xf]
    %v256 = vld [vmem:[%s1 + $0x3a0] sm:$0xf]
    %v257 = vld [vmem:[%s1 + $0x3a4] sm:$0xf]
    %v258 = vld [vmem:[%s1 + $0x3a8] sm:$0xf]
    %v259 = vld [vmem:[%s1 + $0x3ac] sm:$0xf]
    %v260 = vld [vmem:[%s1 + $0x3b0] sm:$0xf]
    %v261 = vld [vmem:[%s1 + $0x3b4] sm:$0xf]
    %v262 = vld [vmem:[%s1 + $0x3b8] sm:$0xf]
    %v263 = vld [vmem:[%s1 + $0x3bc] sm:$0xf]
    %v264 = vld [vmem:[%s1 + $0x3c0] sm:$0xf]
    %v265 = vld [vmem:[%s1 + $0x3c4] sm:$0xf]
    %v266 = vld [vmem:[%s1 + $0x3c8] sm:$0xf]
    %v267 = vld [vmem:[%s1 + $0x3cc] sm:$0xf]
    %v268 = vld [vmem:[%s1 + $0x3d0] sm:$0xf]
    %v269 = vld [vmem:[%s1 + $0x3d4] sm:$0xf]
    %v270 = vld [vmem:[%s1 + $0x3d8] sm:$0xf]
    %v271 = vld [vmem:[%s1 + $0x3dc] sm:$0xf]
    %v272 = vld [vmem:[%s1 + $0x3e0] sm:$0xf]
    %v273 = vld [vmem:[%s1 + $0x3e4] sm:$0xf]
    %v274 = vld [vmem:[%s1 + $0x3e8] sm:$0xf]
    %v275 = vld [vmem:[%s1 + $0x3ec] sm:$0xf]
    %v276 = vld [vmem:[%s1 + $0x3f0] sm:$0xf]
    %v277 = vld [vmem:[%s1 + $0x3f4] sm:$0xf]
    %v278 = vld [vmem:[%s1 + $0x3f8] sm:$0xf]
    %v279 = vld [vmem:[%s1 + $0x3fc] sm:$0xf]
    %v280 = vld [vmem:[%s2] sm:$0x1]
    %v282 = vlaneseq
    %v283 = vshrl.u32 %v282, 7
    %v284 = vsub.s32 0, %v283
    %v285 = vrot.slane %v280, %v284
    %v289 = vcombine.high %v22, %v22
    %v291 = vunpack.c.l.s4 1966171168
    %v292 = vunpack.c.0.s8 %v291
    %v293 = vlaneseq
    %v294 = vshrl.u32 %v293, 7
    %v295 = vsub.s32 %v292, %v294
    %v296 = vrot.slane %v22, %v295
    %v298 = vunpack.c.l.s4 1966171168
    %v299 = vunpack.c.0.s8 %v298
    %v300 = vlaneseq
    %v301 = vshrl.u32 %v300, 7
    %v302 = vsub.s32 %v299, %v301
    %v303 = vrot.slane %v289, %v302
    %v304 = vcombine.high %v296, %v296
    %v305 = vcombine.high %v303, %v303
    %v307 = vunpack.c.l.s4 1966171168
    %v308 = vunpack.c.0.s8 %v307
    %v309 = vlaneseq
    %v310 = vshrl.u32 %v309, 7
    %v311 = vsub.s32 %v308, %v310
    %v312 = vrot.slane %v296, %v311
    %v314 = vunpack.c.l.s4 1966171168
    %v315 = vunpack.c.0.s8 %v314
    %v316 = vlaneseq
    %v317 = vshrl.u32 %v316, 7
    %v318 = vsub.s32 %v315, %v317
    %v319 = vrot.slane %v303, %v318
    %v321 = vunpack.c.l.s4 1966171168
    %v322 = vunpack.c.0.s8 %v321
    %v323 = vlaneseq
    %v324 = vshrl.u32 %v323, 7
    %v325 = vsub.s32 %v322, %v324
    %v326 = vrot.slane %v304, %v325
    %v328 = vunpack.c.l.s4 1966171168
    %v329 = vunpack.c.0.s8 %v328
    %v330 = vlaneseq
    %v331 = vshrl.u32 %v330, 7
    %v332 = vsub.s32 %v329, %v331
    %v333 = vrot.slane %v305, %v332
    %v334 = vcombine.high %v312, %v312
    %v335 = vcombine.high %v319, %v319
    %v336 = vcombine.high %v326, %v326
    %v337 = vcombine.high %v333, %v333
    %v338 = vcombine.high %v23, %v23
    %v340 = vunpack.c.l.s4 1966171168
    %v341 = vunpack.c.0.s8 %v340
    %v342 = vlaneseq
    %v343 = vshrl.u32 %v342, 7
    %v344 = vsub.s32 %v341, %v343
    %v345 = vrot.slane %v23, %v344
    %v347 = vunpack.c.l.s4 1966171168
    %v348 = vunpack.c.0.s8 %v347
    %v349 = vlaneseq
    %v350 = vshrl.u32 %v349, 7
    %v351 = vsub.s32 %v348, %v350
    %v352 = vrot.slane %v338, %v351
    %v353 = vcombine.high %v345, %v345
    %v354 = vcombine.high %v352, %v352
    %v356 = vunpack.c.l.s4 1966171168
    %v357 = vunpack.c.0.s8 %v356
    %v358 = vlaneseq
    %v359 = vshrl.u32 %v358, 7
    %v360 = vsub.s32 %v357, %v359
    %v361 = vrot.slane %v345, %v360
    %v363 = vunpack.c.l.s4 1966171168
    %v364 = vunpack.c.0.s8 %v363
    %v365 = vlaneseq
    %v366 = vshrl.u32 %v365, 7
    %v367 = vsub.s32 %v364, %v366
    %v368 = vrot.slane %v352, %v367
    %v370 = vunpack.c.l.s4 1966171168
    %v371 = vunpack.c.0.s8 %v370
    %v372 = vlaneseq
    %v373 = vshrl.u32 %v372, 7
    %v374 = vsub.s32 %v371, %v373
    %v375 = vrot.slane %v353, %v374
    %v377 = vunpack.c.l.s4 1966171168
    %v378 = vunpack.c.0.s8 %v377
    %v379 = vlaneseq
    %v380 = vshrl.u32 %v379, 7
    %v381 = vsub.s32 %v378, %v380
    %v382 = vrot.slane %v354, %v381
    %v383 = vcombine.high %v361, %v361
    %v384 = vcombine.high %v368, %v368
    %v385 = vcombine.high %v375, %v375
    %v386 = vcombine.high %v382, %v382
    %v659 = vunpack.c.l.b16 %v24
    %v660 = vunpack.c.l.b16 %v25
    %v661 = vunpack.c.l.b16 %v26
    %v662 = vunpack.c.l.b16 %v27
    %v663 = vunpack.c.l.b16 %v28
    %v664 = vunpack.c.l.b16 %v29
    %v665 = vunpack.c.l.b16 %v30
    %v666 = vunpack.c.l.b16 %v31
    %v667 = vunpack.c.l.b16 %v32
    %v668 = vunpack.c.l.b16 %v33
    %v669 = vunpack.c.l.b16 %v34
    %v670 = vunpack.c.l.b16 %v35
    %v671 = vunpack.c.l.b16 %v36
    %v672 = vunpack.c.l.b16 %v37
    %v673 = vunpack.c.l.b16 %v38
    %v674 = vunpack.c.l.b16 %v39
    %v675 = vunpack.c.l.b16 %v40
    %v676 = vunpack.c.l.b16 %v41
    %v677 = vunpack.c.l.b16 %v42
    %v678 = vunpack.c.l.b16 %v43
    %v679 = vunpack.c.l.b16 %v44
    %v680 = vunpack.c.l.b16 %v45
    %v681 = vunpack.c.l.b16 %v46
    %v682 = vunpack.c.l.b16 %v47
    %v683 = vunpack.c.l.b16 %v48
    %v684 = vunpack.c.l.b16 %v49
    %v685 = vunpack.c.l.b16 %v50
    %v686 = vunpack.c.l.b16 %v51
    %v687 = vunpack.c.l.b16 %v52
    %v688 = vunpack.c.l.b16 %v53
    %v689 = vunpack.c.l.b16 %v54
    %v690 = vunpack.c.l.b16 %v55
    %v691 = vunpack.c.l.b16 %v56
    %v692 = vunpack.c.l.b16 %v57
    %v693 = vunpack.c.l.b16 %v58
    %v694 = vunpack.c.l.b16 %v59
    %v695 = vunpack.c.l.b16 %v60
    %v696 = vunpack.c.l.b16 %v61
    %v697 = vunpack.c.l.b16 %v62
    %v698 = vunpack.c.l.b16 %v63
    %v699 = vunpack.c.l.b16 %v64
    %v700 = vunpack.c.l.b16 %v65
    %v701 = vunpack.c.l.b16 %v66
    %v702 = vunpack.c.l.b16 %v67
    %v703 = vunpack.c.l.b16 %v68
    %v704 = vunpack.c.l.b16 %v69
    %v705 = vunpack.c.l.b16 %v70
    %v706 = vunpack.c.l.b16 %v71
    %v707 = vunpack.c.l.b16 %v72
    %v708 = vunpack.c.l.b16 %v73
    %v709 = vunpack.c.l.b16 %v74
    %v710 = vunpack.c.l.b16 %v75
    %v711 = vunpack.c.l.b16 %v76
    %v712 = vunpack.c.l.b16 %v77
    %v713 = vunpack.c.l.b16 %v78
    %v714 = vunpack.c.l.b16 %v79
    %v715 = vunpack.c.l.b16 %v80
    %v716 = vunpack.c.l.b16 %v81
    %v717 = vunpack.c.l.b16 %v82
    %v718 = vunpack.c.l.b16 %v83
    %v719 = vunpack.c.l.b16 %v84
    %v720 = vunpack.c.l.b16 %v85
    %v721 = vunpack.c.l.b16 %v86
    %v722 = vunpack.c.l.b16 %v87
    %v723 = vunpack.c.l.b16 %v88
    %v724 = vunpack.c.l.b16 %v89
    %v725 = vunpack.c.l.b16 %v90
    %v726 = vunpack.c.l.b16 %v91
    %v727 = vunpack.c.l.b16 %v92
    %v728 = vunpack.c.l.b16 %v93
    %v729 = vunpack.c.l.b16 %v94
    %v730 = vunpack.c.l.b16 %v95
    %v731 = vunpack.c.l.b16 %v96
    %v732 = vunpack.c.l.b16 %v97
    %v733 = vunpack.c.l.b16 %v98
    %v734 = vunpack.c.l.b16 %v99
    %v735 = vunpack.c.l.b16 %v100
    %v736 = vunpack.c.l.b16 %v101
    %v737 = vunpack.c.l.b16 %v102
    %v738 = vunpack.c.l.b16 %v103
    %v739 = vunpack.c.l.b16 %v104
    %v740 = vunpack.c.l.b16 %v105
    %v741 = vunpack.c.l.b16 %v106
    %v742 = vunpack.c.l.b16 %v107
    %v743 = vunpack.c.l.b16 %v108
    %v744 = vunpack.c.l.b16 %v109
    %v745 = vunpack.c.l.b16 %v110
    %v746 = vunpack.c.l.b16 %v111
    %v747 = vunpack.c.l.b16 %v112
    %v748 = vunpack.c.l.b16 %v113
    %v749 = vunpack.c.l.b16 %v114
    %v750 = vunpack.c.l.b16 %v115
    %v751 = vunpack.c.l.b16 %v116
    %v752 = vunpack.c.l.b16 %v117
    %v753 = vunpack.c.l.b16 %v118
    %v754 = vunpack.c.l.b16 %v119
    %v755 = vunpack.c.l.b16 %v120
    %v756 = vunpack.c.l.b16 %v121
    %v757 = vunpack.c.l.b16 %v122
    %v758 = vunpack.c.l.b16 %v123
    %v759 = vunpack.c.l.b16 %v124
    %v760 = vunpack.c.l.b16 %v125
    %v761 = vunpack.c.l.b16 %v126
    %v762 = vunpack.c.l.b16 %v127
    %v763 = vunpack.c.l.b16 %v128
    %v764 = vunpack.c.l.b16 %v129
    %v765 = vunpack.c.l.b16 %v130
    %v766 = vunpack.c.l.b16 %v131
    %v767 = vunpack.c.l.b16 %v132
    %v768 = vunpack.c.l.b16 %v133
    %v769 = vunpack.c.l.b16 %v134
    %v770 = vunpack.c.l.b16 %v135
    %v771 = vunpack.c.l.b16 %v136
    %v772 = vunpack.c.l.b16 %v137
    %v773 = vunpack.c.l.b16 %v138
    %v774 = vunpack.c.l.b16 %v139
    %v775 = vunpack.c.l.b16 %v140
    %v776 = vunpack.c.l.b16 %v141
    %v777 = vunpack.c.l.b16 %v142
    %v778 = vunpack.c.l.b16 %v143
    %v779 = vunpack.c.l.b16 %v144
    %v780 = vunpack.c.l.b16 %v145
    %v781 = vunpack.c.l.b16 %v146
    %v782 = vunpack.c.l.b16 %v147
    %v783 = vunpack.c.l.b16 %v148
    %v784 = vunpack.c.l.b16 %v149
    %v785 = vunpack.c.l.b16 %v150
    %v786 = vunpack.c.l.b16 %v151
    %v787 = vunpack.c.l.b16 %v152
    %v788 = vunpack.c.l.b16 %v153
    %v789 = vunpack.c.l.b16 %v154
    %v790 = vunpack.c.l.b16 %v155
    %v791 = vunpack.c.l.b16 %v156
    %v792 = vunpack.c.l.b16 %v157
    %v793 = vunpack.c.l.b16 %v158
    %v794 = vunpack.c.l.b16 %v159
    %v795 = vunpack.c.l.b16 %v160
    %v796 = vunpack.c.l.b16 %v161
    %v797 = vunpack.c.l.b16 %v162
    %v798 = vunpack.c.l.b16 %v163
    %v799 = vunpack.c.l.b16 %v164
    %v800 = vunpack.c.l.b16 %v165
    %v801 = vunpack.c.l.b16 %v166
    %v802 = vunpack.c.l.b16 %v167
    %v803 = vunpack.c.l.b16 %v168
    %v804 = vunpack.c.l.b16 %v169
    %v805 = vunpack.c.l.b16 %v170
    %v806 = vunpack.c.l.b16 %v171
    %v807 = vunpack.c.l.b16 %v172
    %v808 = vunpack.c.l.b16 %v173
    %v809 = vunpack.c.l.b16 %v174
    %v810 = vunpack.c.l.b16 %v175
    %v811 = vunpack.c.l.b16 %v176
    %v812 = vunpack.c.l.b16 %v177
    %v813 = vunpack.c.l.b16 %v178
    %v814 = vunpack.c.l.b16 %v179
    %v815 = vunpack.c.l.b16 %v180
    %v816 = vunpack.c.l.b16 %v181
    %v817 = vunpack.c.l.b16 %v182
    %v818 = vunpack.c.l.b16 %v183
    %v819 = vunpack.c.l.b16 %v184
    %v820 = vunpack.c.l.b16 %v185
    %v821 = vunpack.c.l.b16 %v186
    %v822 = vunpack.c.l.b16 %v187
    %v823 = vunpack.c.l.b16 %v188
    %v824 = vunpack.c.l.b16 %v189
    %v825 = vunpack.c.l.b16 %v190
    %v826 = vunpack.c.l.b16 %v191
    %v827 = vunpack.c.l.b16 %v192
    %v828 = vunpack.c.l.b16 %v193
    %v829 = vunpack.c.l.b16 %v194
    %v830 = vunpack.c.l.b16 %v195
    %v831 = vunpack.c.l.b16 %v196
    %v832 = vunpack.c.l.b16 %v197
    %v833 = vunpack.c.l.b16 %v198
    %v834 = vunpack.c.l.b16 %v199
    %v835 = vunpack.c.l.b16 %v200
    %v836 = vunpack.c.l.b16 %v201
    %v837 = vunpack.c.l.b16 %v202
    %v838 = vunpack.c.l.b16 %v203
    %v839 = vunpack.c.l.b16 %v204
    %v840 = vunpack.c.l.b16 %v205
    %v841 = vunpack.c.l.b16 %v206
    %v842 = vunpack.c.l.b16 %v207
    %v843 = vunpack.c.l.b16 %v208
    %v844 = vunpack.c.l.b16 %v209
    %v845 = vunpack.c.l.b16 %v210
    %v846 = vunpack.c.l.b16 %v211
    %v847 = vunpack.c.l.b16 %v212
    %v848 = vunpack.c.l.b16 %v213
    %v849 = vunpack.c.l.b16 %v214
    %v850 = vunpack.c.l.b16 %v215
    %v851 = vunpack.c.l.b16 %v216
    %v852 = vunpack.c.l.b16 %v217
    %v853 = vunpack.c.l.b16 %v218
    %v854 = vunpack.c.l.b16 %v219
    %v855 = vunpack.c.l.b16 %v220
    %v856 = vunpack.c.l.b16 %v221
    %v857 = vunpack.c.l.b16 %v222
    %v858 = vunpack.c.l.b16 %v223
    %v859 = vunpack.c.l.b16 %v224
    %v860 = vunpack.c.l.b16 %v225
    %v861 = vunpack.c.l.b16 %v226
    %v862 = vunpack.c.l.b16 %v227
    %v863 = vunpack.c.l.b16 %v228
    %v864 = vunpack.c.l.b16 %v229
    %v865 = vunpack.c.l.b16 %v230
    %v866 = vunpack.c.l.b16 %v231
    %v867 = vunpack.c.l.b16 %v232
    %v868 = vunpack.c.l.b16 %v233
    %v869 = vunpack.c.l.b16 %v234
    %v870 = vunpack.c.l.b16 %v235
    %v871 = vunpack.c.l.b16 %v236
    %v872 = vunpack.c.l.b16 %v237
    %v873 = vunpack.c.l.b16 %v238
    %v874 = vunpack.c.l.b16 %v239
    %v875 = vunpack.c.l.b16 %v240
    %v876 = vunpack.c.l.b16 %v241
    %v877 = vunpack.c.l.b16 %v242
    %v878 = vunpack.c.l.b16 %v243
    %v879 = vunpack.c.l.b16 %v244
    %v880 = vunpack.c.l.b16 %v245
    %v881 = vunpack.c.l.b16 %v246
    %v882 = vunpack.c.l.b16 %v247
    %v883 = vunpack.c.l.b16 %v248
    %v884 = vunpack.c.l.b16 %v249
    %v885 = vunpack.c.l.b16 %v250
    %v886 = vunpack.c.l.b16 %v251
    %v887 = vunpack.c.l.b16 %v252
    %v888 = vunpack.c.l.b16 %v253
    %v889 = vunpack.c.l.b16 %v254
    %v890 = vunpack.c.l.b16 %v255
    %v891 = vunpack.c.l.b16 %v256
    %v892 = vunpack.c.l.b16 %v257
    %v893 = vunpack.c.l.b16 %v258
    %v894 = vunpack.c.l.b16 %v259
    %v895 = vunpack.c.l.b16 %v260
    %v896 = vunpack.c.l.b16 %v261
    %v897 = vunpack.c.l.b16 %v262
    %v898 = vunpack.c.l.b16 %v263
    %v899 = vunpack.c.l.b16 %v264
    %v900 = vunpack.c.l.b16 %v265
    %v901 = vunpack.c.l.b16 %v266
    %v902 = vunpack.c.l.b16 %v267
    %v903 = vunpack.c.l.b16 %v268
    %v904 = vunpack.c.l.b16 %v269
    %v905 = vunpack.c.l.b16 %v270
    %v906 = vunpack.c.l.b16 %v271
    %v907 = vunpack.c.l.b16 %v272
    %v908 = vunpack.c.l.b16 %v273
    %v909 = vunpack.c.l.b16 %v274
    %v910 = vunpack.c.l.b16 %v275
    %v911 = vunpack.c.l.b16 %v276
    %v912 = vunpack.c.l.b16 %v277
    %v913 = vunpack.c.l.b16 %v278
    %v914 = vunpack.c.l.b16 %v279
    %v915 = vpack.c.b16 %v660, %v659
    %v916 = vpack.c.b16 %v662, %v661
    %v917 = vpack.c.b16 %v664, %v663
    %v918 = vpack.c.b16 %v666, %v665
    %v919 = vpack.c.b16 %v668, %v667
    %v920 = vpack.c.b16 %v670, %v669
    %v921 = vpack.c.b16 %v672, %v671
    %v922 = vpack.c.b16 %v674, %v673
    %v923 = vpack.c.b16 %v676, %v675
    %v924 = vpack.c.b16 %v678, %v677
    %v925 = vpack.c.b16 %v680, %v679
    %v926 = vpack.c.b16 %v682, %v681
    %v927 = vpack.c.b16 %v684, %v683
    %v928 = vpack.c.b16 %v686, %v685
    %v929 = vpack.c.b16 %v688, %v687
    %v930 = vpack.c.b16 %v690, %v689
    %v931 = vpack.c.b16 %v692, %v691
    %v932 = vpack.c.b16 %v694, %v693
    %v933 = vpack.c.b16 %v696, %v695
    %v934 = vpack.c.b16 %v698, %v697
    %v935 = vpack.c.b16 %v700, %v699
    %v936 = vpack.c.b16 %v702, %v701
    %v937 = vpack.c.b16 %v704, %v703
    %v938 = vpack.c.b16 %v706, %v705
    %v939 = vpack.c.b16 %v708, %v707
    %v940 = vpack.c.b16 %v710, %v709
    %v941 = vpack.c.b16 %v712, %v711
    %v942 = vpack.c.b16 %v714, %v713
    %v943 = vpack.c.b16 %v716, %v715
    %v944 = vpack.c.b16 %v718, %v717
    %v945 = vpack.c.b16 %v720, %v719
    %v946 = vpack.c.b16 %v722, %v721
    %v947 = vpack.c.b16 %v724, %v723
    %v948 = vpack.c.b16 %v726, %v725
    %v949 = vpack.c.b16 %v728, %v727
    %v950 = vpack.c.b16 %v730, %v729
    %v951 = vpack.c.b16 %v732, %v731
    %v952 = vpack.c.b16 %v734, %v733
    %v953 = vpack.c.b16 %v736, %v735
    %v954 = vpack.c.b16 %v738, %v737
    %v955 = vpack.c.b16 %v740, %v739
    %v956 = vpack.c.b16 %v742, %v741
    %v957 = vpack.c.b16 %v744, %v743
    %v958 = vpack.c.b16 %v746, %v745
    %v959 = vpack.c.b16 %v748, %v747
    %v960 = vpack.c.b16 %v750, %v749
    %v961 = vpack.c.b16 %v752, %v751
    %v962 = vpack.c.b16 %v754, %v753
    %v963 = vpack.c.b16 %v756, %v755
    %v964 = vpack.c.b16 %v758, %v757
    %v965 = vpack.c.b16 %v760, %v759
    %v966 = vpack.c.b16 %v762, %v761
    %v967 = vpack.c.b16 %v764, %v763
    %v968 = vpack.c.b16 %v766, %v765
    %v969 = vpack.c.b16 %v768, %v767
    %v970 = vpack.c.b16 %v770, %v769
    %v971 = vpack.c.b16 %v772, %v771
    %v972 = vpack.c.b16 %v774, %v773
    %v973 = vpack.c.b16 %v776, %v775
    %v974 = vpack.c.b16 %v778, %v777
    %v975 = vpack.c.b16 %v780, %v779
    %v976 = vpack.c.b16 %v782, %v781
    %v977 = vpack.c.b16 %v784, %v783
    %v978 = vpack.c.b16 %v786, %v785
    %v979 = vpack.c.b16 %v788, %v787
    %v980 = vpack.c.b16 %v790, %v789
    %v981 = vpack.c.b16 %v792, %v791
    %v982 = vpack.c.b16 %v794, %v793
    %v983 = vpack.c.b16 %v796, %v795
    %v984 = vpack.c.b16 %v798, %v797
    %v985 = vpack.c.b16 %v800, %v799
    %v986 = vpack.c.b16 %v802, %v801
    %v987 = vpack.c.b16 %v804, %v803
    %v988 = vpack.c.b16 %v806, %v805
    %v989 = vpack.c.b16 %v808, %v807
    %v990 = vpack.c.b16 %v810, %v809
    %v991 = vpack.c.b16 %v812, %v811
    %v992 = vpack.c.b16 %v814, %v813
    %v993 = vpack.c.b16 %v816, %v815
    %v994 = vpack.c.b16 %v818, %v817
    %v995 = vpack.c.b16 %v820, %v819
    %v996 = vpack.c.b16 %v822, %v821
    %v997 = vpack.c.b16 %v824, %v823
    %v998 = vpack.c.b16 %v826, %v825
    %v999 = vpack.c.b16 %v828, %v827
    %v1000 = vpack.c.b16 %v830, %v829
    %v1001 = vpack.c.b16 %v832, %v831
    %v1002 = vpack.c.b16 %v834, %v833
    %v1003 = vpack.c.b16 %v836, %v835
    %v1004 = vpack.c.b16 %v838, %v837
    %v1005 = vpack.c.b16 %v840, %v839
    %v1006 = vpack.c.b16 %v842, %v841
    %v1007 = vpack.c.b16 %v844, %v843
    %v1008 = vpack.c.b16 %v846, %v845
    %v1009 = vpack.c.b16 %v848, %v847
    %v1010 = vpack.c.b16 %v850, %v849
    %v1011 = vpack.c.b16 %v852, %v851
    %v1012 = vpack.c.b16 %v854, %v853
    %v1013 = vpack.c.b16 %v856, %v855
    %v1014 = vpack.c.b16 %v858, %v857
    %v1015 = vpack.c.b16 %v860, %v859
    %v1016 = vpack.c.b16 %v862, %v861
    %v1017 = vpack.c.b16 %v864, %v863
    %v1018 = vpack.c.b16 %v866, %v865
    %v1019 = vpack.c.b16 %v868, %v867
    %v1020 = vpack.c.b16 %v870, %v869
    %v1021 = vpack.c.b16 %v872, %v871
    %v1022 = vpack.c.b16 %v874, %v873
    %v1023 = vpack.c.b16 %v876, %v875
    %v1024 = vpack.c.b16 %v878, %v877
    %v1025 = vpack.c.b16 %v880, %v879
    %v1026 = vpack.c.b16 %v882, %v881
    %v1027 = vpack.c.b16 %v884, %v883
    %v1028 = vpack.c.b16 %v886, %v885
    %v1029 = vpack.c.b16 %v888, %v887
    %v1030 = vpack.c.b16 %v890, %v889
    %v1031 = vpack.c.b16 %v892, %v891
    %v1032 = vpack.c.b16 %v894, %v893
    %v1033 = vpack.c.b16 %v896, %v895
    %v1034 = vpack.c.b16 %v898, %v897
    %v1035 = vpack.c.b16 %v900, %v899
    %v1036 = vpack.c.b16 %v902, %v901
    %v1037 = vpack.c.b16 %v904, %v903
    %v1038 = vpack.c.b16 %v906, %v905
    %v1039 = vpack.c.b16 %v908, %v907
    %v1040 = vpack.c.b16 %v910, %v909
    %v1041 = vpack.c.b16 %v912, %v911
    %v1042 = vpack.c.b16 %v914, %v913
    %1171 = vmatprep.subr.bf16.mxu0 0
    %1172 = vmatpush1.bf16.msra.mxu0 %v915
    %1173 = vmatprep.subr.bf16.mxu0 0
    %1174 = vmatpush1.bf16.msra.mxu0 %v916
    %1175 = vmatprep.subr.bf16.mxu0 0
    %1176 = vmatpush1.bf16.msra.mxu0 %v917
    %1177 = vmatprep.subr.bf16.mxu0 0
    %1178 = vmatpush1.bf16.msra.mxu0 %v918
    %1179 = vmatprep.subr.bf16.mxu0 0
    %1180 = vmatpush1.bf16.msra.mxu0 %v919
    %1181 = vmatprep.subr.bf16.mxu0 0
    %1182 = vmatpush1.bf16.msra.mxu0 %v920
    %1183 = vmatprep.subr.bf16.mxu0 0
    %1184 = vmatpush1.bf16.msra.mxu0 %v921
    %1185 = vmatprep.subr.bf16.mxu0 0
    %1186 = vmatpush1.bf16.msra.mxu0 %v922
    %1187 = vmatprep.subr.bf16.mxu0 0
    %1188 = vmatpush1.bf16.msra.mxu0 %v923
    %1189 = vmatprep.subr.bf16.mxu0 0
    %1190 = vmatpush1.bf16.msra.mxu0 %v924
    %1191 = vmatprep.subr.bf16.mxu0 0
    %1192 = vmatpush1.bf16.msra.mxu0 %v925
    %1193 = vmatprep.subr.bf16.mxu0 0
    %1194 = vmatpush1.bf16.msra.mxu0 %v926
    %1195 = vmatprep.subr.bf16.mxu0 0
    %1196 = vmatpush1.bf16.msra.mxu0 %v927
    %1197 = vmatprep.subr.bf16.mxu0 0
    %1198 = vmatpush1.bf16.msra.mxu0 %v928
    %1199 = vmatprep.subr.bf16.mxu0 0
    %1200 = vmatpush1.bf16.msra.mxu0 %v929
    %1201 = vmatprep.subr.bf16.mxu0 0
    %1202 = vmatpush1.bf16.msra.mxu0 %v930
    %1203 = vmatprep.mubr.bf16.mxu0 %v326
    %1204 = vmatmul.mubr.bf16.gmra.mrb[0].mxu0 %v312
    %v1205 = vpop.f32.mrb[0].mxu0
    %v1206 = vadd.f32 %v285, %v1205
    %v1207 = vpop.f32.mrb[0].mxu0
    %v1208 = vpop.f32.mrb[0].mxu0
    %v1209 = vpop.f32.mrb[0].mxu0
    %1210 = vdwg.mxu0
    %1211 = vmatprep.subr.bf16.mxu0 0
    %1212 = vmatpush1.bf16.msra.mxu0 %v931
    %1213 = vmatprep.subr.bf16.mxu0 0
    %1214 = vmatpush1.bf16.msra.mxu0 %v932
    %1215 = vmatprep.subr.bf16.mxu0 0
    %1216 = vmatpush1.bf16.msra.mxu0 %v933
    %1217 = vmatprep.subr.bf16.mxu0 0
    %1218 = vmatpush1.bf16.msra.mxu0 %v934
    %1219 = vmatprep.subr.bf16.mxu0 0
    %1220 = vmatpush1.bf16.msra.mxu0 %v935
    %1221 = vmatprep.subr.bf16.mxu0 0
    %1222 = vmatpush1.bf16.msra.mxu0 %v936
    %1223 = vmatprep.subr.bf16.mxu0 0
    %1224 = vmatpush1.bf16.msra.mxu0 %v937
    %1225 = vmatprep.subr.bf16.mxu0 0
    %1226 = vmatpush1.bf16.msra.mxu0 %v938
    %1227 = vmatprep.subr.bf16.mxu0 0
    %1228 = vmatpush1.bf16.msra.mxu0 %v939
    %1229 = vmatprep.subr.bf16.mxu0 0
    %1230 = vmatpush1.bf16.msra.mxu0 %v940
    %1231 = vmatprep.subr.bf16.mxu0 0
    %1232 = vmatpush1.bf16.msra.mxu0 %v941
    %1233 = vmatprep.subr.bf16.mxu0 0
    %1234 = vmatpush1.bf16.msra.mxu0 %v942
    %1235 = vmatprep.subr.bf16.mxu0 0
    %1236 = vmatpush1.bf16.msra.mxu0 %v943
    %1237 = vmatprep.subr.bf16.mxu0 0
    %1238 = vmatpush1.bf16.msra.mxu0 %v944
    %1239 = vmatprep.subr.bf16.mxu0 0
    %1240 = vmatpush1.bf16.msra.mxu0 %v945
    %1241 = vmatprep.subr.bf16.mxu0 0
    %1242 = vmatpush1.bf16.msra.mxu0 %v946
    %1243 = vmatprep.mubr.bf16.mxu0 %v336
    %1244 = vmatmul.mubr.bf16.gmra.mrb[0].mxu0 %v334
    %v1245 = vpop.f32.mrb[0].mxu0
    %v1246 = vadd.f32 %v1206, %v1245
    %v1247 = vpop.f32.mrb[0].mxu0
    %v1248 = vpop.f32.mrb[0].mxu0
    %v1249 = vpop.f32.mrb[0].mxu0
    %1250 = vdwg.mxu0
    %1251 = vmatprep.subr.bf16.mxu0 0
    %1252 = vmatpush1.bf16.msra.mxu0 %v947
    %1253 = vmatprep.subr.bf16.mxu0 0
    %1254 = vmatpush1.bf16.msra.mxu0 %v948
    %1255 = vmatprep.subr.bf16.mxu0 0
    %1256 = vmatpush1.bf16.msra.mxu0 %v949
    %1257 = vmatprep.subr.bf16.mxu0 0
    %1258 = vmatpush1.bf16.msra.mxu0 %v950
    %1259 = vmatprep.subr.bf16.mxu0 0
    %1260 = vmatpush1.bf16.msra.mxu0 %v951
    %1261 = vmatprep.subr.bf16.mxu0 0
    %1262 = vmatpush1.bf16.msra.mxu0 %v952
    %1263 = vmatprep.subr.bf16.mxu0 0
    %1264 = vmatpush1.bf16.msra.mxu0 %v953
    %1265 = vmatprep.subr.bf16.mxu0 0
    %1266 = vmatpush1.bf16.msra.mxu0 %v954
    %1267 = vmatprep.subr.bf16.mxu0 0
    %1268 = vmatpush1.bf16.msra.mxu0 %v955
    %1269 = vmatprep.subr.bf16.mxu0 0
    %1270 = vmatpush1.bf16.msra.mxu0 %v956
    %1271 = vmatprep.subr.bf16.mxu0 0
    %1272 = vmatpush1.bf16.msra.mxu0 %v957
    %1273 = vmatprep.subr.bf16.mxu0 0
    %1274 = vmatpush1.bf16.msra.mxu0 %v958
    %1275 = vmatprep.subr.bf16.mxu0 0
    %1276 = vmatpush1.bf16.msra.mxu0 %v959
    %1277 = vmatprep.subr.bf16.mxu0 0
    %1278 = vmatpush1.bf16.msra.mxu0 %v960
    %1279 = vmatprep.subr.bf16.mxu0 0
    %1280 = vmatpush1.bf16.msra.mxu0 %v961
    %1281 = vmatprep.subr.bf16.mxu0 0
    %1282 = vmatpush1.bf16.msra.mxu0 %v962
    %1283 = vmatprep.mubr.bf16.mxu0 %v333
    %1284 = vmatmul.mubr.bf16.gmra.mrb[0].mxu0 %v319
    %v1285 = vpop.f32.mrb[0].mxu0
    %v1286 = vadd.f32 %v1246, %v1285
    %v1287 = vpop.f32.mrb[0].mxu0
    %v1288 = vpop.f32.mrb[0].mxu0
    %v1289 = vpop.f32.mrb[0].mxu0
    %1290 = vdwg.mxu0
    %1291 = vmatprep.subr.bf16.mxu0 0
    %1292 = vmatpush1.bf16.msra.mxu0 %v963
    %1293 = vmatprep.subr.bf16.mxu0 0
    %1294 = vmatpush1.bf16.msra.mxu0 %v964
    %1295 = vmatprep.subr.bf16.mxu0 0
    %1296 = vmatpush1.bf16.msra.mxu0 %v965
    %1297 = vmatprep.subr.bf16.mxu0 0
    %1298 = vmatpush1.bf16.msra.mxu0 %v966
    %1299 = vmatprep.subr.bf16.mxu0 0
    %1300 = vmatpush1.bf16.msra.mxu0 %v967
    %1301 = vmatprep.subr.bf16.mxu0 0
    %1302 = vmatpush1.bf16.msra.mxu0 %v968
    %1303 = vmatprep.subr.bf16.mxu0 0
    %1304 = vmatpush1.bf16.msra.mxu0 %v969
    %1305 = vmatprep.subr.bf16.mxu0 0
    %1306 = vmatpush1.bf16.msra.mxu0 %v970
    %1307 = vmatprep.subr.bf16.mxu0 0
    %1308 = vmatpush1.bf16.msra.mxu0 %v971
    %1309 = vmatprep.subr.bf16.mxu0 0
    %1310 = vmatpush1.bf16.msra.mxu0 %v972
    %1311 = vmatprep.subr.bf16.mxu0 0
    %1312 = vmatpush1.bf16.msra.mxu0 %v973
    %1313 = vmatprep.subr.bf16.mxu0 0
    %1314 = vmatpush1.bf16.msra.mxu0 %v974
    %1315 = vmatprep.subr.bf16.mxu0 0
    %1316 = vmatpush1.bf16.msra.mxu0 %v975
    %1317 = vmatprep.subr.bf16.mxu0 0
    %1318 = vmatpush1.bf16.msra.mxu0 %v976
    %1319 = vmatprep.subr.bf16.mxu0 0
    %1320 = vmatpush1.bf16.msra.mxu0 %v977
    %1321 = vmatprep.subr.bf16.mxu0 0
    %1322 = vmatpush1.bf16.msra.mxu0 %v978
    %1323 = vmatprep.mubr.bf16.mxu0 %v337
    %1324 = vmatmul.mubr.bf16.gmra.mrb[0].mxu0 %v335
    %v1325 = vpop.f32.mrb[0].mxu0
    %v1326 = vadd.f32 %v1286, %v1325
    %v1327 = vpop.f32.mrb[0].mxu0
    %v1328 = vpop.f32.mrb[0].mxu0
    %v1329 = vpop.f32.mrb[0].mxu0
    %1330 = vdwg.mxu0
    %1331 = vmatprep.subr.bf16.mxu0 0
    %1332 = vmatpush1.bf16.msra.mxu0 %v979
    %1333 = vmatprep.subr.bf16.mxu0 0
    %1334 = vmatpush1.bf16.msra.mxu0 %v980
    %1335 = vmatprep.subr.bf16.mxu0 0
    %1336 = vmatpush1.bf16.msra.mxu0 %v981
    %1337 = vmatprep.subr.bf16.mxu0 0
    %1338 = vmatpush1.bf16.msra.mxu0 %v982
    %1339 = vmatprep.subr.bf16.mxu0 0
    %1340 = vmatpush1.bf16.msra.mxu0 %v983
    %1341 = vmatprep.subr.bf16.mxu0 0
    %1342 = vmatpush1.bf16.msra.mxu0 %v984
    %1343 = vmatprep.subr.bf16.mxu0 0
    %1344 = vmatpush1.bf16.msra.mxu0 %v985
    %1345 = vmatprep.subr.bf16.mxu0 0
    %1346 = vmatpush1.bf16.msra.mxu0 %v986
    %1347 = vmatprep.subr.bf16.mxu0 0
    %1348 = vmatpush1.bf16.msra.mxu0 %v987
    %1349 = vmatprep.subr.bf16.mxu0 0
    %1350 = vmatpush1.bf16.msra.mxu0 %v988
    %1351 = vmatprep.subr.bf16.mxu0 0
    %1352 = vmatpush1.bf16.msra.mxu0 %v989
    %1353 = vmatprep.subr.bf16.mxu0 0
    %1354 = vmatpush1.bf16.msra.mxu0 %v990
    %1355 = vmatprep.subr.bf16.mxu0 0
    %1356 = vmatpush1.bf16.msra.mxu0 %v991
    %1357 = vmatprep.subr.bf16.mxu0 0
    %1358 = vmatpush1.bf16.msra.mxu0 %v992
    %1359 = vmatprep.subr.bf16.mxu0 0
    %1360 = vmatpush1.bf16.msra.mxu0 %v993
    %1361 = vmatprep.subr.bf16.mxu0 0
    %1362 = vmatpush1.bf16.msra.mxu0 %v994
    %1363 = vmatprep.mubr.bf16.mxu0 %v375
    %1364 = vmatmul.mubr.bf16.gmra.mrb[0].mxu0 %v361
    %v1365 = vpop.f32.mrb[0].mxu0
    %v1366 = vadd.f32 %v1326, %v1365
    %v1367 = vpop.f32.mrb[0].mxu0
    %v1368 = vpop.f32.mrb[0].mxu0
    %v1369 = vpop.f32.mrb[0].mxu0
    %1370 = vdwg.mxu0
    %1371 = vmatprep.subr.bf16.mxu0 0
    %1372 = vmatpush1.bf16.msra.mxu0 %v995
    %1373 = vmatprep.subr.bf16.mxu0 0
    %1374 = vmatpush1.bf16.msra.mxu0 %v996
    %1375 = vmatprep.subr.bf16.mxu0 0
    %1376 = vmatpush1.bf16.msra.mxu0 %v997
    %1377 = vmatprep.subr.bf16.mxu0 0
    %1378 = vmatpush1.bf16.msra.mxu0 %v998
    %1379 = vmatprep.subr.bf16.mxu0 0
    %1380 = vmatpush1.bf16.msra.mxu0 %v999
    %1381 = vmatprep.subr.bf16.mxu0 0
    %1382 = vmatpush1.bf16.msra.mxu0 %v1000
    %1383 = vmatprep.subr.bf16.mxu0 0
    %1384 = vmatpush1.bf16.msra.mxu0 %v1001
    %1385 = vmatprep.subr.bf16.mxu0 0
    %1386 = vmatpush1.bf16.msra.mxu0 %v1002
    %1387 = vmatprep.subr.bf16.mxu0 0
    %1388 = vmatpush1.bf16.msra.mxu0 %v1003
    %1389 = vmatprep.subr.bf16.mxu0 0
    %1390 = vmatpush1.bf16.msra.mxu0 %v1004
    %1391 = vmatprep.subr.bf16.mxu0 0
    %1392 = vmatpush1.bf16.msra.mxu0 %v1005
    %1393 = vmatprep.subr.bf16.mxu0 0
    %1394 = vmatpush1.bf16.msra.mxu0 %v1006
    %1395 = vmatprep.subr.bf16.mxu0 0
    %1396 = vmatpush1.bf16.msra.mxu0 %v1007
    %1397 = vmatprep.subr.bf16.mxu0 0
    %1398 = vmatpush1.bf16.msra.mxu0 %v1008
    %1399 = vmatprep.subr.bf16.mxu0 0
    %1400 = vmatpush1.bf16.msra.mxu0 %v1009
    %1401 = vmatprep.subr.bf16.mxu0 0
    %1402 = vmatpush1.bf16.msra.mxu0 %v1010
    %1403 = vmatprep.mubr.bf16.mxu0 %v385
    %1404 = vmatmul.mubr.bf16.gmra.mrb[0].mxu0 %v383
    %v1405 = vpop.f32.mrb[0].mxu0
    %v1406 = vadd.f32 %v1366, %v1405
    %v1407 = vpop.f32.mrb[0].mxu0
    %v1408 = vpop.f32.mrb[0].mxu0
    %v1409 = vpop.f32.mrb[0].mxu0
    %1410 = vdwg.mxu0
    %1411 = vmatprep.subr.bf16.mxu0 0
    %1412 = vmatpush1.bf16.msra.mxu0 %v1011
    %1413 = vmatprep.subr.bf16.mxu0 0
    %1414 = vmatpush1.bf16.msra.mxu0 %v1012
    %1415 = vmatprep.subr.bf16.mxu0 0
    %1416 = vmatpush1.bf16.msra.mxu0 %v1013
    %1417 = vmatprep.subr.bf16.mxu0 0
    %1418 = vmatpush1.bf16.msra.mxu0 %v1014
    %1419 = vmatprep.subr.bf16.mxu0 0
    %1420 = vmatpush1.bf16.msra.mxu0 %v1015
    %1421 = vmatprep.subr.bf16.mxu0 0
    %1422 = vmatpush1.bf16.msra.mxu0 %v1016
    %1423 = vmatprep.subr.bf16.mxu0 0
    %1424 = vmatpush1.bf16.msra.mxu0 %v1017
    %1425 = vmatprep.subr.bf16.mxu0 0
    %1426 = vmatpush1.bf16.msra.mxu0 %v1018
    %1427 = vmatprep.subr.bf16.mxu0 0
    %1428 = vmatpush1.bf16.msra.mxu0 %v1019
    %1429 = vmatprep.subr.bf16.mxu0 0
    %1430 = vmatpush1.bf16.msra.mxu0 %v1020
    %1431 = vmatprep.subr.bf16.mxu0 0
    %1432 = vmatpush1.bf16.msra.mxu0 %v1021
    %1433 = vmatprep.subr.bf16.mxu0 0
    %1434 = vmatpush1.bf16.msra.mxu0 %v1022
    %1435 = vmatprep.subr.bf16.mxu0 0
    %1436 = vmatpush1.bf16.msra.mxu0 %v1023
    %1437 = vmatprep.subr.bf16.mxu0 0
    %1438 = vmatpush1.bf16.msra.mxu0 %v1024
    %1439 = vmatprep.subr.bf16.mxu0 0
    %1440 = vmatpush1.bf16.msra.mxu0 %v1025
    %1441 = vmatprep.subr.bf16.mxu0 0
    %1442 = vmatpush1.bf16.msra.mxu0 %v1026
    %1443 = vmatprep.mubr.bf16.mxu0 %v382
    %1444 = vmatmul.mubr.bf16.gmra.mrb[0].mxu0 %v368
    %v1445 = vpop.f32.mrb[0].mxu0
    %v1446 = vadd.f32 %v1406, %v1445
    %v1447 = vpop.f32.mrb[0].mxu0
    %v1448 = vpop.f32.mrb[0].mxu0
    %v1449 = vpop.f32.mrb[0].mxu0
    %1450 = vdwg.mxu0
    %1451 = vmatprep.subr.bf16.mxu0 0
    %1452 = vmatpush1.bf16.msra.mxu0 %v1027
    %1453 = vmatprep.subr.bf16.mxu0 0
    %1454 = vmatpush1.bf16.msra.mxu0 %v1028
    %1455 = vmatprep.subr.bf16.mxu0 0
    %1456 = vmatpush1.bf16.msra.mxu0 %v1029
    %1457 = vmatprep.subr.bf16.mxu0 0
    %1458 = vmatpush1.bf16.msra.mxu0 %v1030
    %1459 = vmatprep.subr.bf16.mxu0 0
    %1460 = vmatpush1.bf16.msra.mxu0 %v1031
    %1461 = vmatprep.subr.bf16.mxu0 0
    %1462 = vmatpush1.bf16.msra.mxu0 %v1032
    %1463 = vmatprep.subr.bf16.mxu0 0
    %1464 = vmatpush1.bf16.msra.mxu0 %v1033
    %1465 = vmatprep.subr.bf16.mxu0 0
    %1466 = vmatpush1.bf16.msra.mxu0 %v1034
    %1467 = vmatprep.subr.bf16.mxu0 0
    %1468 = vmatpush1.bf16.msra.mxu0 %v1035
    %1469 = vmatprep.subr.bf16.mxu0 0
    %1470 = vmatpush1.bf16.msra.mxu0 %v1036
    %1471 = vmatprep.subr.bf16.mxu0 0
    %1472 = vmatpush1.bf16.msra.mxu0 %v1037
    %1473 = vmatprep.subr.bf16.mxu0 0
    %1474 = vmatpush1.bf16.msra.mxu0 %v1038
    %1475 = vmatprep.subr.bf16.mxu0 0
    %1476 = vmatpush1.bf16.msra.mxu0 %v1039
    %1477 = vmatprep.subr.bf16.mxu0 0
    %1478 = vmatpush1.bf16.msra.mxu0 %v1040
    %1479 = vmatprep.subr.bf16.mxu0 0
    %1480 = vmatpush1.bf16.msra.mxu0 %v1041
    %1481 = vmatprep.subr.bf16.mxu0 0
    %1482 = vmatpush1.bf16.msra.mxu0 %v1042
    %1483 = vmatprep.mubr.bf16.mxu0 %v386
    %1484 = vmatmul.mubr.bf16.gmra.mrb[0].mxu0 %v384
    %v1485 = vpop.f32.mrb[0].mxu0
    %v1486 = vadd.f32 %v1446, %v1485
    %v1487 = vpop.f32.mrb[0].mxu0
    %v1488 = vpop.f32.mrb[0].mxu0
    %v1489 = vpop.f32.mrb[0].mxu0
    %1490 = vdwg.mxu0
    %v1491 = vmax.f32 %v1486, 0.0
    %v1492 = vpack.c.bf16 %v1491, %v1491
    %v1493 = vld [vmem:[%s3] sm:$0xf]
    %v1494 = vld [vmem:[%s3 + $0x4] sm:$0xf]
    %v1495 = vld [vmem:[%s3 + $0x8] sm:$0xf]
    %v1496 = vld [vmem:[%s3 + $0xc] sm:$0xf]
    %v1497 = vld [vmem:[%s3 + $0x10] sm:$0xf]
    %v1498 = vld [vmem:[%s3 + $0x14] sm:$0xf]
    %v1499 = vld [vmem:[%s3 + $0x18] sm:$0xf]
    %v1500 = vld [vmem:[%s3 + $0x1c] sm:$0xf]
    %v1501 = vld [vmem:[%s3 + $0x20] sm:$0xf]
    %v1502 = vld [vmem:[%s3 + $0x24] sm:$0xf]
    %v1503 = vld [vmem:[%s3 + $0x28] sm:$0xf]
    %v1504 = vld [vmem:[%s3 + $0x2c] sm:$0xf]
    %v1505 = vld [vmem:[%s3 + $0x30] sm:$0xf]
    %v1506 = vld [vmem:[%s3 + $0x34] sm:$0xf]
    %v1507 = vld [vmem:[%s3 + $0x38] sm:$0xf]
    %v1508 = vld [vmem:[%s3 + $0x3c] sm:$0xf]
    %v1509 = vld [vmem:[%s4] sm:$0x1]
    %v1511 = vlaneseq
    %v1512 = vshrl.u32 %v1511, 7
    %v1513 = vsub.s32 0, %v1512
    %v1514 = vrot.slane %v1509, %v1513
    %v1532 = vunpack.c.l.b16 %v1493
    %v1533 = vunpack.c.l.b16 %v1494
    %v1534 = vunpack.c.l.b16 %v1495
    %v1535 = vunpack.c.l.b16 %v1496
    %v1536 = vunpack.c.l.b16 %v1497
    %v1537 = vunpack.c.l.b16 %v1498
    %v1538 = vunpack.c.l.b16 %v1499
    %v1539 = vunpack.c.l.b16 %v1500
    %v1540 = vunpack.c.l.b16 %v1501
    %v1541 = vunpack.c.l.b16 %v1502
    %v1542 = vunpack.c.l.b16 %v1503
    %v1543 = vunpack.c.l.b16 %v1504
    %v1544 = vunpack.c.l.b16 %v1505
    %v1545 = vunpack.c.l.b16 %v1506
    %v1546 = vunpack.c.l.b16 %v1507
    %v1547 = vunpack.c.l.b16 %v1508
    %v1548 = vpack.c.b16 %v1533, %v1532
    %v1549 = vpack.c.b16 %v1535, %v1534
    %v1550 = vpack.c.b16 %v1537, %v1536
    %v1551 = vpack.c.b16 %v1539, %v1538
    %v1552 = vpack.c.b16 %v1541, %v1540
    %v1553 = vpack.c.b16 %v1543, %v1542
    %v1554 = vpack.c.b16 %v1545, %v1544
    %v1555 = vpack.c.b16 %v1547, %v1546
    %1564 = vmatprep.subr.bf16.mxu0 0
    %1565 = vmatpush1.bf16.msra.mxu0 %v1548
    %1566 = vmatprep.subr.bf16.mxu0 0
    %1567 = vmatpush1.bf16.msra.mxu0 %v1549
    %1568 = vmatprep.subr.bf16.mxu0 0
    %1569 = vmatpush1.bf16.msra.mxu0 %v1550
    %1570 = vmatprep.subr.bf16.mxu0 0
    %1571 = vmatpush1.bf16.msra.mxu0 %v1551
    %1572 = vmatprep.subr.bf16.mxu0 0
    %1573 = vmatpush1.bf16.msra.mxu0 %v1552
    %1574 = vmatprep.subr.bf16.mxu0 0
    %1575 = vmatpush1.bf16.msra.mxu0 %v1553
    %1576 = vmatprep.subr.bf16.mxu0 0
    %1577 = vmatpush1.bf16.msra.mxu0 %v1554
    %1578 = vmatprep.subr.bf16.mxu0 0
    %1579 = vmatpush1.bf16.msra.mxu0 %v1555
    %1580 = vmatprep.subr.bf16.mxu0 0
    %1581 = vmatpush1.bf16.msra.mxu0 0
    %1582 = vmatprep.subr.bf16.mxu0 0
    %1583 = vmatpush1.bf16.msra.mxu0 0
    %1584 = vmatprep.subr.bf16.mxu0 0
    %1585 = vmatpush1.bf16.msra.mxu0 0
    %1586 = vmatprep.subr.bf16.mxu0 0
    %1587 = vmatpush1.bf16.msra.mxu0 0
    %1588 = vmatprep.subr.bf16.mxu0 0
    %1589 = vmatpush1.bf16.msra.mxu0 0
    %1590 = vmatprep.subr.bf16.mxu0 0
    %1591 = vmatpush1.bf16.msra.mxu0 0
    %1592 = vmatprep.subr.bf16.mxu0 0
    %1593 = vmatpush1.bf16.msra.mxu0 0
    %1594 = vmatprep.subr.bf16.mxu0 0
    %1595 = vmatpush1.bf16.msra.mxu0 0
    %1596 = vmatprep.mubr.bf16.mxu0 0
    %1597 = vmatmul.mubr.bf16.gmra.mrb[0].mxu0 %v1492
    %v1598 = vpop.f32.mrb[0].mxu0
    %v1599 = vadd.f32 %v1514, %v1598
    %v1600 = vpop.f32.mrb[0].mxu0
    %v1601 = vpop.f32.mrb[0].mxu0
    %v1602 = vpop.f32.mrb[0].mxu0
    %1603 = vdwg.mxu0
    %vm1604 = vcmask 1041408
    %v1605 = vsel %vm1604, %v1599, -inf
    %v1606 = vrot.slane %v1605, 4
    %v1607 = vmax.f32 %v1605, %v1606
    %v1608 = vrot.slane %v1607, 2
    %v1609 = vmax.f32 %v1607, %v1608
    %v1610 = vrot.slane %v1609, 1
    %v1611 = vmax.f32 %v1609, %v1610
    %v1612 = vsub.f32 %v1599, %v1611
    %v1613 = vmul.f32 %v1612, 1.442695
    %v1614 = vpow.pop %v1613
    %v1615 = vsel %vm1604, %v1614, 0.0
    %v1616 = vrot.slane %v1615, 4
    %v1617 = vadd.f32 %v1615, %v1616
    %v1618 = vrot.slane %v1617, 2
    %v1619 = vadd.f32 %v1617, %v1618
    %v1620 = vrot.slane %v1619, 1
    %v1621 = vadd.f32 %v1619, %v1620
    %v1622 = vlog2.pop %v1621
    %v1623 = vmul.f32 %v1622, 0.6931472
    %v1624 = vadd.f32 %v1611, %v1623
    %v1625 = vsub.f32 %v1599, %v1624
    %1626 = vst [vmem:[#allocation2] sm:$0x3] %v1625
    // Predicated region
    $region22: #{net_forward.5} parent=1 // pred_check
      _
    $region23: #{net_forward.5} parent=1 // pred_check_branch
      %1628 = sbr.rel (0) target = $region25
    $region24: #{net_forward.5} parent=1 // pred_region
      %s1630 = ssub.s32 32, 32
      %1631 = vsyncadd [#allocation3], %s1630
      %s1633 = sshll.u32 [#allocation2], 4
      %s1634 = int_to_ptr.vmem [resolvable:$true] %s1633
      %1636 = dma.vmem_to_hbm [thread:$0]  %s1634, 32, %s5, [#allocation3]
    $region25: #{net_forward.5} parent=1 // pred_fallthru
      _
    // Predicated region
    $region26: #{net_forward.5} parent=1 // pred_check
      _
    $region27: #{net_forward.5} parent=1 // pred_check_branch
      %1638 = sbr.rel (0) target = $region29
    $region28: #{net_forward.5} parent=1 // pred_region
      %1639 = dma.done [#allocation3], 32
    $region29: #{net_forward.5} parent=1 // pred_fallthru
      _
    %1640 = vsyncpa [#allocation3], 1

// kernel: net_forward.4
$region0: #{net_forward.4}
  #allocation0 [shape = 'u32[]', space=smem, size = 0x4, offset = 0x4, fixed_abs, tag = 'smem constant byte address 0x4 - core index']
  #allocation1 [shape = 'u32[144,128]{1,0:T(1,128)}', space=vmem, size = 0x12000, scoped, tag = 'internal scratch']
  %s0 = inlined_call_operand.vmem [shape: bf16[32,360], index: 0, kind: input, shape index: {}]
  %s1 = inlined_call_operand.vmem [shape: bf16[4,360,128], index: 1, kind: input, shape index: {}]
  %s2 = inlined_call_operand.vmem [shape: f32[1,128], index: 2, kind: input, shape index: {}]
  %s3 = inlined_call_operand.vmem [shape: bf16[32,128], index: 3, kind: output, shape index: {}]
  %s4 = sld [smem:[#allocation0]]
  $region22: #{net_forward.4} parent=0
    _
  %s6 = ssub.s32 1, %s4
  %s7 = scalar_select 0, %s6, %s4
  // Predicated region
  $region2: #{net_forward.4} parent=0 // pred_check
    _
  $region3: #{net_forward.4} parent=0 // pred_check_branch
    %9 = sbr.rel (0) target = $region5
  $region4: #{net_forward.4} parent=0 // pred_region
    _
  $region5: #{net_forward.4} parent=0 // pred_fallthru
    _
  // Predicated region
  $region6: #{net_forward.4} parent=0 // pred_check
    _
  $region7: #{net_forward.4} parent=0 // pred_check_branch
    %11 = sbr.rel (0) target = $region9
  $region8: #{net_forward.4} parent=0 // pred_region
    _
  $region9: #{net_forward.4} parent=0 // pred_fallthru
    _
  // Predicated region
  $region10: #{net_forward.4} parent=0 // pred_check
    _
  $region11: #{net_forward.4} parent=0 // pred_check_branch
    %13 = sbr.rel (0) target = $region13
  $region12: #{net_forward.4} parent=0 // pred_region
    _
  $region13: #{net_forward.4} parent=0 // pred_fallthru
    _
  %v15 = vld [vmem:[%s0] sm:$0xff]
  %v16 = vld [vmem:[%s0 + $0x8] sm:$0xf]
  %v17 = vld [vmem:[%s0 + $0xc] sm:$0xff]
  %v18 = vld [vmem:[%s0 + $0x14] sm:$0xf]
  %v19 = vld [vmem:[%s0 + $0x18] sm:$0xff]
  %v20 = vld [vmem:[%s0 + $0x20] sm:$0xf]
  %v21 = vld [vmem:[%s0 + $0x24] sm:$0xff]
  %v22 = vld [vmem:[%s0 + $0x2c] sm:$0xf]
  %v23 = vld [vmem:[%s1] sm:$0xf]
  %v24 = vld [vmem:[%s1 + $0x4] sm:$0xf]
  %v25 = vld [vmem:[%s1 + $0x8] sm:$0xf]
  %v26 = vld [vmem:[%s1 + $0xc] sm:$0xf]
  %v27 = vld [vmem:[%s1 + $0x10] sm:$0xf]
  %v28 = vld [vmem:[%s1 + $0x14] sm:$0xf]
  %v29 = vld [vmem:[%s1 + $0x18] sm:$0xf]
  %v30 = vld [vmem:[%s1 + $0x1c] sm:$0xf]
  %v31 = vld [vmem:[%s1 + $0x20] sm:$0xf]
  %v32 = vld [vmem:[%s1 + $0x24] sm:$0xf]
  %v33 = vld [vmem:[%s1 + $0x28] sm:$0xf]
  %v34 = vld [vmem:[%s1 + $0x2c] sm:$0xf]
  %v35 = vld [vmem:[%s1 + $0x30] sm:$0xf]
  %v36 = vld [vmem:[%s1 + $0x34] sm:$0xf]
  %v37 = vld [vmem:[%s1 + $0x38] sm:$0xf]
  %v38 = vld [vmem:[%s1 + $0x3c] sm:$0xf]
  %v39 = vld [vmem:[%s1 + $0x40] sm:$0xf]
  %v40 = vld [vmem:[%s1 + $0x44] sm:$0xf]
  %v41 = vld [vmem:[%s1 + $0x48] sm:$0xf]
  %v42 = vld [vmem:[%s1 + $0x4c] sm:$0xf]
  %v43 = vld [vmem:[%s1 + $0x50] sm:$0xf]
  %v44 = vld [vmem:[%s1 + $0x54] sm:$0xf]
  %v45 = vld [vmem:[%s1 + $0x58] sm:$0xf]
  %v46 = vld [vmem:[%s1 + $0x5c] sm:$0xf]
  %v47 = vld [vmem:[%s1 + $0x60] sm:$0xf]
  %v48 = vld [vmem:[%s1 + $0x64] sm:$0xf]
  %v49 = vld [vmem:[%s1 + $0x68] sm:$0xf]
  %v50 = vld [vmem:[%s1 + $0x6c] sm:$0xf]
  %v51 = vld [vmem:[%s1 + $0x70] sm:$0xf]
  %v52 = vld [vmem:[%s1 + $0x74] sm:$0xf]
  %v53 = vld [vmem:[%s1 + $0x78] sm:$0xf]
  %v54 = vld [vmem:[%s1 + $0x7c] sm:$0xf]
  %v55 = vld [vmem:[%s1 + $0x80] sm:$0xf]
  %v56 = vld [vmem:[%s1 + $0x84] sm:$0xf]
  %v57 = vld [vmem:[%s1 + $0x88] sm:$0xf]
  %v58 = vld [vmem:[%s1 + $0x8c] sm:$0xf]
  %v59 = vld [vmem:[%s1 + $0x90] sm:$0xf]
  %v60 = vld [vmem:[%s1 + $0x94] sm:$0xf]
  %v61 = vld [vmem:[%s1 + $0x98] sm:$0xf]
  %v62 = vld [vmem:[%s1 + $0x9c] sm:$0xf]
  %v63 = vld [vmem:[%s1 + $0xa0] sm:$0xf]
  %v64 = vld [vmem:[%s1 + $0xa4] sm:$0xf]
  %v65 = vld [vmem:[%s1 + $0xa8] sm:$0xf]
  %v66 = vld [vmem:[%s1 + $0xac] sm:$0xf]
  %v67 = vld [vmem:[%s1 + $0xb0] sm:$0xf]
  %v76 = vunpack.c.l.b16 %v15
  %v77 = vunpack.c.h.b16 %v15
  %v78 = vunpack.c.l.b16 %v16
  %v79 = vunpack.c.l.b16 %v17
  %v80 = vunpack.c.h.b16 %v17
  %v81 = vunpack.c.l.b16 %v18
  %v82 = vunpack.c.l.b16 %v19
  %v83 = vunpack.c.h.b16 %v19
  %v84 = vunpack.c.l.b16 %v20
  %v85 = vunpack.c.l.b16 %v21
  %v86 = vunpack.c.h.b16 %v21
  %v87 = vunpack.c.l.b16 %v22
  %v88 = vpack.c.b16 %v79, %v76
  %v89 = vpack.c.b16 %v80, %v77
  %v90 = vpack.c.b16 %v81, %v78
  %v91 = vpack.c.b16 %v85, %v82
  %v92 = vpack.c.b16 %v86, %v83
  %v93 = vpack.c.b16 %v87, %v84
  %v143 = vunpack.c.l.b16 %v23
  %v144 = vunpack.c.l.b16 %v24
  %v145 = vunpack.c.l.b16 %v25
  %v146 = vunpack.c.l.b16 %v26
  %v147 = vunpack.c.l.b16 %v27
  %v148 = vunpack.c.l.b16 %v28
  %v149 = vunpack.c.l.b16 %v29
  %v150 = vunpack.c.l.b16 %v30
  %v151 = vunpack.c.l.b16 %v31
  %v152 = vunpack.c.l.b16 %v32
  %v153 = vunpack.c.l.b16 %v33
  %v154 = vunpack.c.l.b16 %v34
  %v155 = vunpack.c.l.b16 %v35
  %v156 = vunpack.c.l.b16 %v36
  %v157 = vunpack.c.l.b16 %v37
  %v158 = vunpack.c.l.b16 %v38
  %v159 = vunpack.c.l.b16 %v39
  %v160 = vunpack.c.l.b16 %v40
  %v161 = vunpack.c.l.b16 %v41
  %v162 = vunpack.c.l.b16 %v42
  %v163 = vunpack.c.l.b16 %v43
  %v164 = vunpack.c.l.b16 %v44
  %v165 = vunpack.c.l.b16 %v45
  %v166 = vunpack.c.l.b16 %v46
  %v167 = vunpack.c.l.b16 %v47
  %v168 = vunpack.c.l.b16 %v48
  %v169 = vunpack.c.l.b16 %v49
  %v170 = vunpack.c.l.b16 %v50
  %v171 = vunpack.c.l.b16 %v51
  %v172 = vunpack.c.l.b16 %v52
  %v173 = vunpack.c.l.b16 %v53
  %v174 = vunpack.c.l.b16 %v54
  %v175 = vunpack.c.l.b16 %v55
  %v176 = vunpack.c.l.b16 %v56
  %v177 = vunpack.c.l.b16 %v57
  %v178 = vunpack.c.l.b16 %v58
  %v179 = vunpack.c.l.b16 %v59
  %v180 = vunpack.c.l.b16 %v60
  %v181 = vunpack.c.l.b16 %v61
  %v182 = vunpack.c.l.b16 %v62
  %v183 = vunpack.c.l.b16 %v63
  %v184 = vunpack.c.l.b16 %v64
  %v185 = vunpack.c.l.b16 %v65
  %v186 = vunpack.c.l.b16 %v66
  %v187 = vunpack.c.l.b16 %v67
  %v188 = vpack.c.b16 %v144, %v143
  %v189 = vpack.c.b16 %v146, %v145
  %v190 = vpack.c.b16 %v148, %v147
  %v191 = vpack.c.b16 %v150, %v149
  %v192 = vpack.c.b16 %v152, %v151
  %v193 = vpack.c.b16 %v154, %v153
  %v194 = vpack.c.b16 %v156, %v155
  %v195 = vpack.c.b16 %v158, %v157
  %v196 = vpack.c.b16 %v160, %v159
  %v197 = vpack.c.b16 %v162, %v161
  %v198 = vpack.c.b16 %v164, %v163
  %v199 = vpack.c.b16 %v166, %v165
  %v200 = vpack.c.b16 %v168, %v167
  %v201 = vpack.c.b16 %v170, %v169
  %v202 = vpack.c.b16 %v172, %v171
  %v203 = vpack.c.b16 %v174, %v173
  %v204 = vpack.c.b16 %v176, %v175
  %v205 = vpack.c.b16 %v178, %v177
  %v206 = vpack.c.b16 %v180, %v179
  %v207 = vpack.c.b16 %v182, %v181
  %v208 = vpack.c.b16 %v184, %v183
  %v209 = vpack.c.b16 %v186, %v185
  %v210 = vpack.c.b16 %v187, %v187
  %vm233 = vcmask 850944
  %v235 = vsel %vm233, %v90, 0
  %v238 = vsel %vm233, %v93, 0
  %vm240 = vcmask 1043456
  %v242 = vsel %vm240, %v210, 0
  %244 = vmatprep.subr.bf16.mxu0 0
  %245 = vmatpush1.bf16.msra.mxu0 %v188
  %246 = vmatprep.subr.bf16.mxu0 0
  %247 = vmatpush1.bf16.msra.mxu0 %v189
  %248 = vmatprep.subr.bf16.mxu0 0
  %249 = vmatpush1.bf16.msra.mxu0 %v190
  %250 = vmatprep.subr.bf16.mxu0 0
  %251 = vmatpush1.bf16.msra.mxu0 %v191
  %252 = vmatprep.subr.bf16.mxu0 0
  %253 = vmatpush1.bf16.msra.mxu0 %v192
  %254 = vmatprep.subr.bf16.mxu0 0
  %255 = vmatpush1.bf16.msra.mxu0 %v193
  %256 = vmatprep.subr.bf16.mxu0 0
  %257 = vmatpush1.bf16.msra.mxu0 %v194
  %258 = vmatprep.subr.bf16.mxu0 0
  %259 = vmatpush1.bf16.msra.mxu0 %v195
  %260 = vmatprep.subr.bf16.mxu0 0
  %261 = vmatpush1.bf16.msra.mxu0 %v196
  %262 = vmatprep.subr.bf16.mxu0 0
  %263 = vmatpush1.bf16.msra.mxu0 %v197
  %264 = vmatprep.subr.bf16.mxu0 0
  %265 = vmatpush1.bf16.msra.mxu0 %v198
  %266 = vmatprep.subr.bf16.mxu0 0
  %267 = vmatpush1.bf16.msra.mxu0 %v199
  %268 = vmatprep.subr.bf16.mxu0 0
  %269 = vmatpush1.bf16.msra.mxu0 %v200
  %270 = vmatprep.subr.bf16.mxu0 0
  %271 = vmatpush1.bf16.msra.mxu0 %v201
  %272 = vmatprep.subr.bf16.mxu0 0
  %273 = vmatpush1.bf16.msra.mxu0 %v202
  %274 = vmatprep.subr.bf16.mxu0 0
  %275 = vmatpush1.bf16.msra.mxu0 %v203
  %276 = vmatprep.mubr.bf16.mxu0 %v89
  %277 = vmatmul.mubr.bf16.gmra.mrb[0].mxu0 %v88
  %v278 = vpop.f32.mrb[0].mxu0
  %v279 = vadd.f32 0.0, %v278
  %v280 = vpop.f32.mrb[0].mxu0
  %v281 = vpop.f32.mrb[0].mxu0
  %v282 = vadd.f32 0.0, %v281
  %v283 = vpop.f32.mrb[0].mxu0
  %284 = vmatprep.mubr.bf16.mxu0 %v92
  %285 = vmatmul.mubr.bf16.gmra.mrb[0].mxu0 %v91
  %v286 = vpop.f32.mrb[0].mxu0
  %v287 = vadd.f32 0.0, %v286
  %v288 = vpop.f32.mrb[0].mxu0
  %v289 = vpop.f32.mrb[0].mxu0
  %v290 = vadd.f32 0.0, %v289
  %v291 = vpop.f32.mrb[0].mxu0
  %292 = vdwg.mxu0
  %293 = vmatprep.subr.bf16.mxu0 0
  %294 = vmatpush1.bf16.msra.mxu0 %v204
  %295 = vmatprep.subr.bf16.mxu0 0
  %296 = vmatpush1.bf16.msra.mxu0 %v205
  %297 = vmatprep.subr.bf16.mxu0 0
  %298 = vmatpush1.bf16.msra.mxu0 %v206
  %299 = vmatprep.subr.bf16.mxu0 0
  %300 = vmatpush1.bf16.msra.mxu0 %v207
  %301 = vmatprep.subr.bf16.mxu0 0
  %302 = vmatpush1.bf16.msra.mxu0 %v208
  %303 = vmatprep.subr.bf16.mxu0 0
  %304 = vmatpush1.bf16.msra.mxu0 %v209
  %305 = vmatprep.subr.bf16.mxu0 0
  %306 = vmatpush1.bf16.msra.mxu0 %v242
  %307 = vmatprep.subr.bf16.mxu0 0
  %308 = vmatpush1.bf16.msra.mxu0 0
  %309 = vmatprep.subr.bf16.mxu0 0
  %310 = vmatpush1.bf16.msra.mxu0 0
  %311 = vmatprep.subr.bf16.mxu0 0
  %312 = vmatpush1.bf16.msra.mxu0 0
  %313 = vmatprep.subr.bf16.mxu0 0
  %314 = vmatpush1.bf16.msra.mxu0 0
  %315 = vmatprep.subr.bf16.mxu0 0
  %316 = vmatpush1.bf16.msra.mxu0 0
  %317 = vmatprep.subr.bf16.mxu0 0
  %318 = vmatpush1.bf16.msra.mxu0 0
  %319 = vmatprep.subr.bf16.mxu0 0
  %320 = vmatpush1.bf16.msra.mxu0 0
  %321 = vmatprep.subr.bf16.mxu0 0
  %322 = vmatpush1.bf16.msra.mxu0 0
  %323 = vmatprep.subr.bf16.mxu0 0
  %324 = vmatpush1.bf16.msra.mxu0 0
  %325 = vmatprep.mubr.bf16.mxu0 0
  %326 = vmatmul.mubr.bf16.gmra.mrb[0].mxu0 %v235
  %v327 = vpop.f32.mrb[0].mxu0
  %v328 = vadd.f32 %v279, %v327
  %v329 = vpop.f32.mrb[0].mxu0
  %v330 = vpop.f32.mrb[0].mxu0
  %v331 = vadd.f32 %v282, %v330
  %v332 = vpop.f32.mrb[0].mxu0
  %333 = vmatprep.mubr.bf16.mxu0 0
  %334 = vmatmul.mubr.bf16.gmra.mrb[0].mxu0 %v238
  %v335 = vpop.f32.mrb[0].mxu0
  %v336 = vadd.f32 %v287, %v335
  %v337 = vpop.f32.mrb[0].mxu0
  %v338 = vpop.f32.mrb[0].mxu0
  %v339 = vadd.f32 %v290, %v338
  %v340 = vpop.f32.mrb[0].mxu0
  %341 = vdwg.mxu0
  %s342 = scalar_lea.vmem %s1, 180
  %v343 = vld [vmem:[%s342] sm:$0xf]
  %v344 = vld [vmem:[%s342 + $0x4] sm:$0xf]
  %v345 = vld [vmem:[%s342 + $0x8] sm:$0xf]
  %v346 = vld [vmem:[%s342 + $0xc] sm:$0xf]
  %v347 = vld [vmem:[%s342 + $0x10] sm:$0xf]
  %v348 = vld [vmem:[%s342 + $0x14] sm:$0xf]
  %v349 = vld [vmem:[%s342 + $0x18] sm:$0xf]
  %v350 = vld [vmem:[%s342 + $0x1c] sm:$0xf]
  %v351 = vld [vmem:[%s342 + $0x20] sm:$0xf]
  %v352 = vld [vmem:[%s342 + $0x24] sm:$0xf]
  %v353 = vld [vmem:[%s342 + $0x28] sm:$0xf]
  %v354 = vld [vmem:[%s342 + $0x2c] sm:$0xf]
  %v355 = vld [vmem:[%s342 + $0x30] sm:$0xf]
  %v356 = vld [vmem:[%s342 + $0x34] sm:$0xf]
  %v357 = vld [vmem:[%s342 + $0x38] sm:$0xf]
  %v358 = vld [vmem:[%s342 + $0x3c] sm:$0xf]
  %v359 = vld [vmem:[%s342 + $0x40] sm:$0xf]
  %v360 = vld [vmem:[%s342 + $0x44] sm:$0xf]
  %v361 = vld [vmem:[%s342 + $0x48] sm:$0xf]
  %v362 = vld [vmem:[%s342 + $0x4c] sm:$0xf]
  %v363 = vld [vmem:[%s342 + $0x50] sm:$0xf]
  %v364 = vld [vmem:[%s342 + $0x54] sm:$0xf]
  %v365 = vld [vmem:[%s342 + $0x58] sm:$0xf]
  %v366 = vld [vmem:[%s342 + $0x5c] sm:$0xf]
  %v367 = vld [vmem:[%s342 + $0x60] sm:$0xf]
  %v368 = vld [vmem:[%s342 + $0x64] sm:$0xf]
  %v369 = vld [vmem:[%s342 + $0x68] sm:$0xf]
  %v370 = vld [vmem:[%s342 + $0x6c] sm:$0xf]
  %v371 = vld [vmem:[%s342 + $0x70] sm:$0xf]
  %v372 = vld [vmem:[%s342 + $0x74] sm:$0xf]
  %v373 = vld [vmem:[%s342 + $0x78] sm:$0xf]
  %v374 = vld [vmem:[%s342 + $0x7c] sm:$0xf]
  %v375 = vld [vmem:[%s342 + $0x80] sm:$0xf]
  %v376 = vld [vmem:[%s342 + $0x84] sm:$0xf]
  %v377 = vld [vmem:[%s342 + $0x88] sm:$0xf]
  %v378 = vld [vmem:[%s342 + $0x8c] sm:$0xf]
  %v379 = vld [vmem:[%s342 + $0x90] sm:$0xf]
  %v380 = vld [vmem:[%s342 + $0x94] sm:$0xf]
  %v381 = vld [vmem:[%s342 + $0x98] sm:$0xf]
  %v382 = vld [vmem:[%s342 + $0x9c] sm:$0xf]
  %v383 = vld [vmem:[%s342 + $0xa0] sm:$0xf]
  %v384 = vld [vmem:[%s342 + $0xa4] sm:$0xf]
  %v385 = vld [vmem:[%s342 + $0xa8] sm:$0xf]
  %v386 = vld [vmem:[%s342 + $0xac] sm:$0xf]
  %v387 = vld [vmem:[%s342 + $0xb0] sm:$0xf]
  %v433 = vunpack.c.l.b16 %v343
  %v434 = vunpack.c.l.b16 %v344
  %v435 = vunpack.c.l.b16 %v345
  %v436 = vunpack.c.l.b16 %v346
  %v437 = vunpack.c.l.b16 %v347
  %v438 = vunpack.c.l.b16 %v348
  %v439 = vunpack.c.l.b16 %v349
  %v440 = vunpack.c.l.b16 %v350
  %v441 = vunpack.c.l.b16 %v351
  %v442 = vunpack.c.l.b16 %v352
  %v443 = vunpack.c.l.b16 %v353
  %v444 = vunpack.c.l.b16 %v354
  %v445 = vunpack.c.l.b16 %v355
  %v446 = vunpack.c.l.b16 %v356
  %v447 = vunpack.c.l.b16 %v357
  %v448 = vunpack.c.l.b16 %v358
  %v449 = vunpack.c.l.b16 %v359
  %v450 = vunpack.c.l.b16 %v360
  %v451 = vunpack.c.l.b16 %v361
  %v452 = vunpack.c.l.b16 %v362
  %v453 = vunpack.c.l.b16 %v363
  %v454 = vunpack.c.l.b16 %v364
  %v455 = vunpack.c.l.b16 %v365
  %v456 = vunpack.c.l.b16 %v366
  %v457 = vunpack.c.l.b16 %v367
  %v458 = vunpack.c.l.b16 %v368
  %v459 = vunpack.c.l.b16 %v369
  %v460 = vunpack.c.l.b16 %v370
  %v461 = vunpack.c.l.b16 %v371
  %v462 = vunpack.c.l.b16 %v372
  %v463 = vunpack.c.l.b16 %v373
  %v464 = vunpack.c.l.b16 %v374
  %v465 = vunpack.c.l.b16 %v375
  %v466 = vunpack.c.l.b16 %v376
  %v467 = vunpack.c.l.b16 %v377
  %v468 = vunpack.c.l.b16 %v378
  %v469 = vunpack.c.l.b16 %v379
  %v470 = vunpack.c.l.b16 %v380
  %v471 = vunpack.c.l.b16 %v381
  %v472 = vunpack.c.l.b16 %v382
  %v473 = vunpack.c.l.b16 %v383
  %v474 = vunpack.c.l.b16 %v384
  %v475 = vunpack.c.l.b16 %v385
  %v476 = vunpack.c.l.b16 %v386
  %v477 = vunpack.c.l.b16 %v387
  %v478 = vpack.c.b16 %v434, %v433
  %v479 = vpack.c.b16 %v436, %v435
  %v480 = vpack.c.b16 %v438, %v437
  %v481 = vpack.c.b16 %v440, %v439
  %v482 = vpack.c.b16 %v442, %v441
  %v483 = vpack.c.b16 %v444, %v443
  %v484 = vpack.c.b16 %v446, %v445
  %v485 = vpack.c.b16 %v448, %v447
  %v486 = vpack.c.b16 %v450, %v449
  %v487 = vpack.c.b16 %v452, %v451
  %v488 = vpack.c.b16 %v454, %v453
  %v489 = vpack.c.b16 %v456, %v455
  %v490 = vpack.c.b16 %v458, %v457
  %v491 = vpack.c.b16 %v460, %v459
  %v492 = vpack.c.b16 %v462, %v461
  %v493 = vpack.c.b16 %v464, %v463
  %v494 = vpack.c.b16 %v466, %v465
  %v495 = vpack.c.b16 %v468, %v467
  %v496 = vpack.c.b16 %v470, %v469
  %v497 = vpack.c.b16 %v472, %v471
  %v498 = vpack.c.b16 %v474, %v473
  %v499 = vpack.c.b16 %v476, %v475
  %v500 = vpack.c.b16 %v477, %v477
  %v524 = vsel %vm240, %v500, 0
  %526 = vmatprep.subr.bf16.mxu0 0
  %527 = vmatpush1.bf16.msra.mxu0 %v478
  %528 = vmatprep.subr.bf16.mxu0 0
  %529 = vmatpush1.bf16.msra.mxu0 %v479
  %530 = vmatprep.subr.bf16.mxu0 0
  %531 = vmatpush1.bf16.msra.mxu0 %v480
  %532 = vmatprep.subr.bf16.mxu0 0
  %533 = vmatpush1.bf16.msra.mxu0 %v481
  %534 = vmatprep.subr.bf16.mxu0 0
  %535 = vmatpush1.bf16.msra.mxu0 %v482
  %536 = vmatprep.subr.bf16.mxu0 0
  %537 = vmatpush1.bf16.msra.mxu0 %v483
  %538 = vmatprep.subr.bf16.mxu0 0
  %539 = vmatpush1.bf16.msra.mxu0 %v484
  %540 = vmatprep.subr.bf16.mxu0 0
  %541 = vmatpush1.bf16.msra.mxu0 %v485
  %542 = vmatprep.subr.bf16.mxu0 0
  %543 = vmatpush1.bf16.msra.mxu0 %v486
  %544 = vmatprep.subr.bf16.mxu0 0
  %545 = vmatpush1.bf16.msra.mxu0 %v487
  %546 = vmatprep.subr.bf16.mxu0 0
  %547 = vmatpush1.bf16.msra.mxu0 %v488
  %548 = vmatprep.subr.bf16.mxu0 0
  %549 = vmatpush1.bf16.msra.mxu0 %v489
  %550 = vmatprep.subr.bf16.mxu0 0
  %551 = vmatpush1.bf16.msra.mxu0 %v490
  %552 = vmatprep.subr.bf16.mxu0 0
  %553 = vmatpush1.bf16.msra.mxu0 %v491
  %554 = vmatprep.subr.bf16.mxu0 0
  %555 = vmatpush1.bf16.msra.mxu0 %v492
  %556 = vmatprep.subr.bf16.mxu0 0
  %557 = vmatpush1.bf16.msra.mxu0 %v493
  %558 = vmatprep.mubr.bf16.mxu0 %v89
  %559 = vmatmul.mubr.bf16.gmra.mrb[0].mxu0 %v88
  %v560 = vpop.f32.mrb[0].mxu0
  %v561 = vadd.f32 0.0, %v560
  %v562 = vpop.f32.mrb[0].mxu0
  %v563 = vpop.f32.mrb[0].mxu0
  %v564 = vadd.f32 0.0, %v563
  %v565 = vpop.f32.mrb[0].mxu0
  %566 = vmatprep.mubr.bf16.mxu0 %v92
  %567 = vmatmul.mubr.bf16.gmra.mrb[0].mxu0 %v91
  %v568 = vpop.f32.mrb[0].mxu0
  %v569 = vadd.f32 0.0, %v568
  %v570 = vpop.f32.mrb[0].mxu0
  %v571 = vpop.f32.mrb[0].mxu0
  %v572 = vadd.f32 0.0, %v571
  %v573 = vpop.f32.mrb[0].mxu0
  %574 = vdwg.mxu0
  %575 = vmatprep.subr.bf16.mxu0 0
  %576 = vmatpush1.bf16.msra.mxu0 %v494
  %577 = vmatprep.subr.bf16.mxu0 0
  %578 = vmatpush1.bf16.msra.mxu0 %v495
  %579 = vmatprep.subr.bf16.mxu0 0
  %580 = vmatpush1.bf16.msra.mxu0 %v496
  %581 = vmatprep.subr.bf16.mxu0 0
  %582 = vmatpush1.bf16.msra.mxu0 %v497
  %583 = vmatprep.subr.bf16.mxu0 0
  %584 = vmatpush1.bf16.msra.mxu0 %v498
  %585 = vmatprep.subr.bf16.mxu0 0
  %586 = vmatpush1.bf16.msra.mxu0 %v499
  %587 = vmatprep.subr.bf16.mxu0 0
  %588 = vmatpush1.bf16.msra.mxu0 %v524
  %589 = vmatprep.subr.bf16.mxu0 0
  %590 = vmatpush1.bf16.msra.mxu0 0
  %591 = vmatprep.subr.bf16.mxu0 0
  %592 = vmatpush1.bf16.msra.mxu0 0
  %593 = vmatprep.subr.bf16.mxu0 0
  %594 = vmatpush1.bf16.msra.mxu0 0
  %595 = vmatprep.subr.bf16.mxu0 0
  %596 = vmatpush1.bf16.msra.mxu0 0
  %597 = vmatprep.subr.bf16.mxu0 0
  %598 = vmatpush1.bf16.msra.mxu0 0
  %599 = vmatprep.subr.bf16.mxu0 0
  %600 = vmatpush1.bf16.msra.mxu0 0
  %601 = vmatprep.subr.bf16.mxu0 0
  %602 = vmatpush1.bf16.msra.mxu0 0
  %603 = vmatprep.subr.bf16.mxu0 0
  %604 = vmatpush1.bf16.msra.mxu0 0
  %605 = vmatprep.subr.bf16.mxu0 0
  %606 = vmatpush1.bf16.msra.mxu0 0
  %607 = vmatprep.mubr.bf16.mxu0 0
  %608 = vmatmul.mubr.bf16.gmra.mrb[0].mxu0 %v235
  %v609 = vpop.f32.mrb[0].mxu0
  %v610 = vadd.f32 %v561, %v609
  %v611 = vpop.f32.mrb[0].mxu0
  %v612 = vpop.f32.mrb[0].mxu0
  %v613 = vadd.f32 %v564, %v612
  %v614 = vpop.f32.mrb[0].mxu0
  %615 = vmatprep.mubr.bf16.mxu0 0
  %616 = vmatmul.mubr.bf16.gmra.mrb[0].mxu0 %v238
  %v617 = vpop.f32.mrb[0].mxu0
  %v618 = vadd.f32 %v569, %v617
  %v619 = vpop.f32.mrb[0].mxu0
  %v620 = vpop.f32.mrb[0].mxu0
  %v621 = vadd.f32 %v572, %v620
  %v622 = vpop.f32.mrb[0].mxu0
  %623 = vdwg.mxu0
  %v624 = vmax.f32 %v328, %v610
  %v625 = vmax.f32 %v331, %v613
  %v626 = vmax.f32 %v336, %v618
  %v627 = vmax.f32 %v339, %v621
  %s628 = scalar_lea.vmem %s1, 360
  %v629 = vld [vmem:[%s628] sm:$0xf]
  %v630 = vld [vmem:[%s628 + $0x4] sm:$0xf]
  %v631 = vld [vmem:[%s628 + $0x8] sm:$0xf]
  %v632 = vld [vmem:[%s628 + $0xc] sm:$0xf]
  %v633 = vld [vmem:[%s628 + $0x10] sm:$0xf]
  %v634 = vld [vmem:[%s628 + $0x14] sm:$0xf]
  %v635 = vld [vmem:[%s628 + $0x18] sm:$0xf]
  %v636 = vld [vmem:[%s628 + $0x1c] sm:$0xf]
  %v637 = vld [vmem:[%s628 + $0x20] sm:$0xf]
  %v638 = vld [vmem:[%s628 + $0x24] sm:$0xf]
  %v639 = vld [vmem:[%s628 + $0x28] sm:$0xf]
  %v640 = vld [vmem:[%s628 + $0x2c] sm:$0xf]
  %v641 = vld [vmem:[%s628 + $0x30] sm:$0xf]
  %v642 = vld [vmem:[%s628 + $0x34] sm:$0xf]
  %v643 = vld [vmem:[%s628 + $0x38] sm:$0xf]
  %v644 = vld [vmem:[%s628 + $0x3c] sm:$0xf]
  %v645 = vld [vmem:[%s628 + $0x40] sm:$0xf]
  %v646 = vld [vmem:[%s628 + $0x44] sm:$0xf]
  %v647 = vld [vmem:[%s628 + $0x48] sm:$0xf]
  %v648 = vld [vmem:[%s628 + $0x4c] sm:$0xf]
  %v649 = vld [vmem:[%s628 + $0x50] sm:$0xf]
  %v650 = vld [vmem:[%s628 + $0x54] sm:$0xf]
  %v651 = vld [vmem:[%s628 + $0x58] sm:$0xf]
  %v652 = vld [vmem:[%s628 + $0x5c] sm:$0xf]
  %v653 = vld [vmem:[%s628 + $0x60] sm:$0xf]
  %v654 = vld [vmem:[%s628 + $0x64] sm:$0xf]
  %v655 = vld [vmem:[%s628 + $0x68] sm:$0xf]
  %v656 = vld [vmem:[%s628 + $0x6c] sm:$0xf]
  %v657 = vld [vmem:[%s628 + $0x70] sm:$0xf]
  %v658 = vld [vmem:[%s628 + $0x74] sm:$0xf]
  %v659 = vld [vmem:[%s628 + $0x78] sm:$0xf]
  %v660 = vld [vmem:[%s628 + $0x7c] sm:$0xf]
  %v661 = vld [vmem:[%s628 + $0x80] sm:$0xf]
  %v662 = vld [vmem:[%s628 + $0x84] sm:$0xf]
  %v663 = vld [vmem:[%s628 + $0x88] sm:$0xf]
  %v664 = vld [vmem:[%s628 + $0x8c] sm:$0xf]
  %v665 = vld [vmem:[%s628 + $0x90] sm:$0xf]
  %v666 = vld [vmem:[%s628 + $0x94] sm:$0xf]
  %v667 = vld [vmem:[%s628 + $0x98] sm:$0xf]
  %v668 = vld [vmem:[%s628 + $0x9c] sm:$0xf]
  %v669 = vld [vmem:[%s628 + $0xa0] sm:$0xf]
  %v670 = vld [vmem:[%s628 + $0xa4] sm:$0xf]
  %v671 = vld [vmem:[%s628 + $0xa8] sm:$0xf]
  %v672 = vld [vmem:[%s628 + $0xac] sm:$0xf]
  %v673 = vld [vmem:[%s628 + $0xb0] sm:$0xf]
  %v719 = vunpack.c.l.b16 %v629
  %v720 = vunpack.c.l.b16 %v630
  %v721 = vunpack.c.l.b16 %v631
  %v722 = vunpack.c.l.b16 %v632
  %v723 = vunpack.c.l.b16 %v633
  %v724 = vunpack.c.l.b16 %v634
  %v725 = vunpack.c.l.b16 %v635
  %v726 = vunpack.c.l.b16 %v636
  %v727 = vunpack.c.l.b16 %v637
  %v728 = vunpack.c.l.b16 %v638
  %v729 = vunpack.c.l.b16 %v639
  %v730 = vunpack.c.l.b16 %v640
  %v731 = vunpack.c.l.b16 %v641
  %v732 = vunpack.c.l.b16 %v642
  %v733 = vunpack.c.l.b16 %v643
  %v734 = vunpack.c.l.b16 %v644
  %v735 = vunpack.c.l.b16 %v645
  %v736 = vunpack.c.l.b16 %v646
  %v737 = vunpack.c.l.b16 %v647
  %v738 = vunpack.c.l.b16 %v648
  %v739 = vunpack.c.l.b16 %v649
  %v740 = vunpack.c.l.b16 %v650
  %v741 = vunpack.c.l.b16 %v651
  %v742 = vunpack.c.l.b16 %v652
  %v743 = vunpack.c.l.b16 %v653
  %v744 = vunpack.c.l.b16 %v654
  %v745 = vunpack.c.l.b16 %v655
  %v746 = vunpack.c.l.b16 %v656
  %v747 = vunpack.c.l.b16 %v657
  %v748 = vunpack.c.l.b16 %v658
  %v749 = vunpack.c.l.b16 %v659
  %v750 = vunpack.c.l.b16 %v660
  %v751 = vunpack.c.l.b16 %v661
  %v752 = vunpack.c.l.b16 %v662
  %v753 = vunpack.c.l.b16 %v663
  %v754 = vunpack.c.l.b16 %v664
  %v755 = vunpack.c.l.b16 %v665
  %v756 = vunpack.c.l.b16 %v666
  %v757 = vunpack.c.l.b16 %v667
  %v758 = vunpack.c.l.b16 %v668
  %v759 = vunpack.c.l.b16 %v669
  %v760 = vunpack.c.l.b16 %v670
  %v761 = vunpack.c.l.b16 %v671
  %v762 = vunpack.c.l.b16 %v672
  %v763 = vunpack.c.l.b16 %v673
  %v764 = vpack.c.b16 %v720, %v719
  %v765 = vpack.c.b16 %v722, %v721
  %v766 = vpack.c.b16 %v724, %v723
  %v767 = vpack.c.b16 %v726, %v725
  %v768 = vpack.c.b16 %v728, %v727
  %v769 = vpack.c.b16 %v730, %v729
  %v770 = vpack.c.b16 %v732, %v731
  %v771 = vpack.c.b16 %v734, %v733
  %v772 = vpack.c.b16 %v736, %v735
  %v773 = vpack.c.b16 %v738, %v737
  %v774 = vpack.c.b16 %v740, %v739
  %v775 = vpack.c.b16 %v742, %v741
  %v776 = vpack.c.b16 %v744, %v743
  %v777 = vpack.c.b16 %v746, %v745
  %v778 = vpack.c.b16 %v748, %v747
  %v779 = vpack.c.b16 %v750, %v749
  %v780 = vpack.c.b16 %v752, %v751
  %v781 = vpack.c.b16 %v754, %v753
  %v782 = vpack.c.b16 %v756, %v755
  %v783 = vpack.c.b16 %v758, %v757
  %v784 = vpack.c.b16 %v760, %v759
  %v785 = vpack.c.b16 %v762, %v761
  %v786 = vpack.c.b16 %v763, %v763
  %v810 = vsel %vm240, %v786, 0
  %812 = vmatprep.subr.bf16.mxu0 0
  %813 = vmatpush1.bf16.msra.mxu0 %v764
  %814 = vmatprep.subr.bf16.mxu0 0
  %815 = vmatpush1.bf16.msra.mxu0 %v765
  %816 = vmatprep.subr.bf16.mxu0 0
  %817 = vmatpush1.bf16.msra.mxu0 %v766
  %818 = vmatprep.subr.bf16.mxu0 0
  %819 = vmatpush1.bf16.msra.mxu0 %v767
  %820 = vmatprep.subr.bf16.mxu0 0
  %821 = vmatpush1.bf16.msra.mxu0 %v768
  %822 = vmatprep.subr.bf16.mxu0 0
  %823 = vmatpush1.bf16.msra.mxu0 %v769
  %824 = vmatprep.subr.bf16.mxu0 0
  %825 = vmatpush1.bf16.msra.mxu0 %v770
  %826 = vmatprep.subr.bf16.mxu0 0
  %827 = vmatpush1.bf16.msra.mxu0 %v771
  %828 = vmatprep.subr.bf16.mxu0 0
  %829 = vmatpush1.bf16.msra.mxu0 %v772
  %830 = vmatprep.subr.bf16.mxu0 0
  %831 = vmatpush1.bf16.msra.mxu0 %v773
  %832 = vmatprep.subr.bf16.mxu0 0
  %833 = vmatpush1.bf16.msra.mxu0 %v774
  %834 = vmatprep.subr.bf16.mxu0 0
  %835 = vmatpush1.bf16.msra.mxu0 %v775
  %836 = vmatprep.subr.bf16.mxu0 0
  %837 = vmatpush1.bf16.msra.mxu0 %v776
  %838 = vmatprep.subr.bf16.mxu0 0
  %839 = vmatpush1.bf16.msra.mxu0 %v777
  %840 = vmatprep.subr.bf16.mxu0 0
  %841 = vmatpush1.bf16.msra.mxu0 %v778
  %842 = vmatprep.subr.bf16.mxu0 0
  %843 = vmatpush1.bf16.msra.mxu0 %v779
  %844 = vmatprep.mubr.bf16.mxu0 %v89
  %845 = vmatmul.mubr.bf16.gmra.mrb[0].mxu0 %v88
  %v846 = vpop.f32.mrb[0].mxu0
  %v847 = vadd.f32 0.0, %v846
  %v848 = vpop.f32.mrb[0].mxu0
  %v849 = vpop.f32.mrb[0].mxu0
  %v850 = vadd.f32 0.0, %v849
  %v851 = vpop.f32.mrb[0].mxu0
  %852 = vmatprep.mubr.bf16.mxu0 %v92
  %853 = vmatmul.mubr.bf16.gmra.mrb[0].mxu0 %v91
  %v854 = vpop.f32.mrb[0].mxu0
  %v855 = vadd.f32 0.0, %v854
  %v856 = vpop.f32.mrb[0].mxu0
  %v857 = vpop.f32.mrb[0].mxu0
  %v858 = vadd.f32 0.0, %v857
  %v859 = vpop.f32.mrb[0].mxu0
  %860 = vdwg.mxu0
  %861 = vmatprep.subr.bf16.mxu0 0
  %862 = vmatpush1.bf16.msra.mxu0 %v780
  %863 = vmatprep.subr.bf16.mxu0 0
  %864 = vmatpush1.bf16.msra.mxu0 %v781
  %865 = vmatprep.subr.bf16.mxu0 0
  %866 = vmatpush1.bf16.msra.mxu0 %v782
  %867 = vmatprep.subr.bf16.mxu0 0
  %868 = vmatpush1.bf16.msra.mxu0 %v783
  %869 = vmatprep.subr.bf16.mxu0 0
  %870 = vmatpush1.bf16.msra.mxu0 %v784
  %871 = vmatprep.subr.bf16.mxu0 0
  %872 = vmatpush1.bf16.msra.mxu0 %v785
  %873 = vmatprep.subr.bf16.mxu0 0
  %874 = vmatpush1.bf16.msra.mxu0 %v810
  %875 = vmatprep.subr.bf16.mxu0 0
  %876 = vmatpush1.bf16.msra.mxu0 0
  %877 = vmatprep.subr.bf16.mxu0 0
  %878 = vmatpush1.bf16.msra.mxu0 0
  %879 = vmatprep.subr.bf16.mxu0 0
  %880 = vmatpush1.bf16.msra.mxu0 0
  %881 = vmatprep.subr.bf16.mxu0 0
  %882 = vmatpush1.bf16.msra.mxu0 0
  %883 = vmatprep.subr.bf16.mxu0 0
  %884 = vmatpush1.bf16.msra.mxu0 0
  %885 = vmatprep.subr.bf16.mxu0 0
  %886 = vmatpush1.bf16.msra.mxu0 0
  %887 = vmatprep.subr.bf16.mxu0 0
  %888 = vmatpush1.bf16.msra.mxu0 0
  %889 = vmatprep.subr.bf16.mxu0 0
  %890 = vmatpush1.bf16.msra.mxu0 0
  %891 = vmatprep.subr.bf16.mxu0 0
  %892 = vmatpush1.bf16.msra.mxu0 0
  %893 = vmatprep.mubr.bf16.mxu0 0
  %894 = vmatmul.mubr.bf16.gmra.mrb[0].mxu0 %v235
  %v895 = vpop.f32.mrb[0].mxu0
  %v896 = vadd.f32 %v847, %v895
  %v897 = vpop.f32.mrb[0].mxu0
  %v898 = vpop.f32.mrb[0].mxu0
  %v899 = vadd.f32 %v850, %v898
  %v900 = vpop.f32.mrb[0].mxu0
  %901 = vmatprep.mubr.bf16.mxu0 0
  %902 = vmatmul.mubr.bf16.gmra.mrb[0].mxu0 %v238
  %v903 = vpop.f32.mrb[0].mxu0
  %v904 = vadd.f32 %v855, %v903
  %v905 = vpop.f32.mrb[0].mxu0
  %v906 = vpop.f32.mrb[0].mxu0
  %v907 = vadd.f32 %v858, %v906
  %v908 = vpop.f32.mrb[0].mxu0
  %909 = vdwg.mxu0
  %v910 = vmax.f32 %v624, %v896
  %v911 = vmax.f32 %v625, %v899
  %v912 = vmax.f32 %v626, %v904
  %v913 = vmax.f32 %v627, %v907
  %s914 = scalar_lea.vmem %s1, 540
  %v915 = vld [vmem:[%s914] sm:$0xf]
  %v916 = vld [vmem:[%s914 + $0x4] sm:$0xf]
  %v917 = vld [vmem:[%s914 + $0x8] sm:$0xf]
  %v918 = vld [vmem:[%s914 + $0xc] sm:$0xf]
  %v919 = vld [vmem:[%s914 + $0x10] sm:$0xf]
  %v920 = vld [vmem:[%s914 + $0x14] sm:$0xf]
  %v921 = vld [vmem:[%s914 + $0x18] sm:$0xf]
  %v922 = vld [vmem:[%s914 + $0x1c] sm:$0xf]
  %v923 = vld [vmem:[%s914 + $0x20] sm:$0xf]
  %v924 = vld [vmem:[%s914 + $0x24] sm:$0xf]
  %v925 = vld [vmem:[%s914 + $0x28] sm:$0xf]
  %v926 = vld [vmem:[%s914 + $0x2c] sm:$0xf]
  %v927 = vld [vmem:[%s914 + $0x30] sm:$0xf]
  %v928 = vld [vmem:[%s914 + $0x34] sm:$0xf]
  %v929 = vld [vmem:[%s914 + $0x38] sm:$0xf]
  %v930 = vld [vmem:[%s914 + $0x3c] sm:$0xf]
  %v931 = vld [vmem:[%s914 + $0x40] sm:$0xf]
  %v932 = vld [vmem:[%s914 + $0x44] sm:$0xf]
  %v933 = vld [vmem:[%s914 + $0x48] sm:$0xf]
  %v934 = vld [vmem:[%s914 + $0x4c] sm:$0xf]
  %v935 = vld [vmem:[%s914 + $0x50] sm:$0xf]
  %v936 = vld [vmem:[%s914 + $0x54] sm:$0xf]
  %v937 = vld [vmem:[%s914 + $0x58] sm:$0xf]
  %v938 = vld [vmem:[%s914 + $0x5c] sm:$0xf]
  %v939 = vld [vmem:[%s914 + $0x60] sm:$0xf]
  %v940 = vld [vmem:[%s914 + $0x64] sm:$0xf]
  %v941 = vld [vmem:[%s914 + $0x68] sm:$0xf]
  %v942 = vld [vmem:[%s914 + $0x6c] sm:$0xf]
  %v943 = vld [vmem:[%s914 + $0x70] sm:$0xf]
  %v944 = vld [vmem:[%s914 + $0x74] sm:$0xf]
  %v945 = vld [vmem:[%s914 + $0x78] sm:$0xf]
  %v946 = vld [vmem:[%s914 + $0x7c] sm:$0xf]
  %v947 = vld [vmem:[%s914 + $0x80] sm:$0xf]
  %v948 = vld [vmem:[%s914 + $0x84] sm:$0xf]
  %v949 = vld [vmem:[%s914 + $0x88] sm:$0xf]
  %v950 = vld [vmem:[%s914 + $0x8c] sm:$0xf]
  %v951 = vld [vmem:[%s914 + $0x90] sm:$0xf]
  %v952 = vld [vmem:[%s914 + $0x94] sm:$0xf]
  %v953 = vld [vmem:[%s914 + $0x98] sm:$0xf]
  %v954 = vld [vmem:[%s914 + $0x9c] sm:$0xf]
  %v955 = vld [vmem:[%s914 + $0xa0] sm:$0xf]
  %v956 = vld [vmem:[%s914 + $0xa4] sm:$0xf]
  %v957 = vld [vmem:[%s914 + $0xa8] sm:$0xf]
  %v958 = vld [vmem:[%s914 + $0xac] sm:$0xf]
  %v959 = vld [vmem:[%s914 + $0xb0] sm:$0xf]
  %v1005 = vunpack.c.l.b16 %v915
  %v1006 = vunpack.c.l.b16 %v916
  %v1007 = vunpack.c.l.b16 %v917
  %v1008 = vunpack.c.l.b16 %v918
  %v1009 = vunpack.c.l.b16 %v919
  %v1010 = vunpack.c.l.b16 %v920
  %v1011 = vunpack.c.l.b16 %v921
  %v1012 = vunpack.c.l.b16 %v922
  %v1013 = vunpack.c.l.b16 %v923
  %v1014 = vunpack.c.l.b16 %v924
  %v1015 = vunpack.c.l.b16 %v925
  %v1016 = vunpack.c.l.b16 %v926
  %v1017 = vunpack.c.l.b16 %v927
  %v1018 = vunpack.c.l.b16 %v928
  %v1019 = vunpack.c.l.b16 %v929
  %v1020 = vunpack.c.l.b16 %v930
  %v1021 = vunpack.c.l.b16 %v931
  %v1022 = vunpack.c.l.b16 %v932
  %v1023 = vunpack.c.l.b16 %v933
  %v1024 = vunpack.c.l.b16 %v934
  %v1025 = vunpack.c.l.b16 %v935
  %v1026 = vunpack.c.l.b16 %v936
  %v1027 = vunpack.c.l.b16 %v937
  %v1028 = vunpack.c.l.b16 %v938
  %v1029 = vunpack.c.l.b16 %v939
  %v1030 = vunpack.c.l.b16 %v940
  %v1031 = vunpack.c.l.b16 %v941
  %v1032 = vunpack.c.l.b16 %v942
  %v1033 = vunpack.c.l.b16 %v943
  %v1034 = vunpack.c.l.b16 %v944
  %v1035 = vunpack.c.l.b16 %v945
  %v1036 = vunpack.c.l.b16 %v946
  %v1037 = vunpack.c.l.b16 %v947
  %v1038 = vunpack.c.l.b16 %v948
  %v1039 = vunpack.c.l.b16 %v949
  %v1040 = vunpack.c.l.b16 %v950
  %v1041 = vunpack.c.l.b16 %v951
  %v1042 = vunpack.c.l.b16 %v952
  %v1043 = vunpack.c.l.b16 %v953
  %v1044 = vunpack.c.l.b16 %v954
  %v1045 = vunpack.c.l.b16 %v955
  %v1046 = vunpack.c.l.b16 %v956
  %v1047 = vunpack.c.l.b16 %v957
  %v1048 = vunpack.c.l.b16 %v958
  %v1049 = vunpack.c.l.b16 %v959
  %v1050 = vpack.c.b16 %v1006, %v1005
  %v1051 = vpack.c.b16 %v1008, %v1007
  %v1052 = vpack.c.b16 %v1010, %v1009
  %v1053 = vpack.c.b16 %v1012, %v1011
  %v1054 = vpack.c.b16 %v1014, %v1013
  %v1055 = vpack.c.b16 %v1016, %v1015
  %v1056 = vpack.c.b16 %v1018, %v1017
  %v1057 = vpack.c.b16 %v1020, %v1019
  %v1058 = vpack.c.b16 %v1022, %v1021
  %v1059 = vpack.c.b16 %v1024, %v1023
  %v1060 = vpack.c.b16 %v1026, %v1025
  %v1061 = vpack.c.b16 %v1028, %v1027
  %v1062 = vpack.c.b16 %v1030, %v1029
  %v1063 = vpack.c.b16 %v1032, %v1031
  %v1064 = vpack.c.b16 %v1034, %v1033
  %v1065 = vpack.c.b16 %v1036, %v1035
  %v1066 = vpack.c.b16 %v1038, %v1037
  %v1067 = vpack.c.b16 %v1040, %v1039
  %v1068 = vpack.c.b16 %v1042, %v1041
  %v1069 = vpack.c.b16 %v1044, %v1043
  %v1070 = vpack.c.b16 %v1046, %v1045
  %v1071 = vpack.c.b16 %v1048, %v1047
  %v1072 = vpack.c.b16 %v1049, %v1049
  %v1096 = vsel %vm240, %v1072, 0
  %1098 = vmatprep.subr.bf16.mxu0 0
  %1099 = vmatpush1.bf16.msra.mxu0 %v1050
  %1100 = vmatprep.subr.bf16.mxu0 0
  %1101 = vmatpush1.bf16.msra.mxu0 %v1051
  %1102 = vmatprep.subr.bf16.mxu0 0
  %1103 = vmatpush1.bf16.msra.mxu0 %v1052
  %1104 = vmatprep.subr.bf16.mxu0 0
  %1105 = vmatpush1.bf16.msra.mxu0 %v1053
  %1106 = vmatprep.subr.bf16.mxu0 0
  %1107 = vmatpush1.bf16.msra.mxu0 %v1054
  %1108 = vmatprep.subr.bf16.mxu0 0
  %1109 = vmatpush1.bf16.msra.mxu0 %v1055
  %1110 = vmatprep.subr.bf16.mxu0 0
  %1111 = vmatpush1.bf16.msra.mxu0 %v1056
  %1112 = vmatprep.subr.bf16.mxu0 0
  %1113 = vmatpush1.bf16.msra.mxu0 %v1057
  %1114 = vmatprep.subr.bf16.mxu0 0
  %1115 = vmatpush1.bf16.msra.mxu0 %v1058
  %1116 = vmatprep.subr.bf16.mxu0 0
  %1117 = vmatpush1.bf16.msra.mxu0 %v1059
  %1118 = vmatprep.subr.bf16.mxu0 0
  %1119 = vmatpush1.bf16.msra.mxu0 %v1060
  %1120 = vmatprep.subr.bf16.mxu0 0
  %1121 = vmatpush1.bf16.msra.mxu0 %v1061
  %1122 = vmatprep.subr.bf16.mxu0 0
  %1123 = vmatpush1.bf16.msra.mxu0 %v1062
  %1124 = vmatprep.subr.bf16.mxu0 0
  %1125 = vmatpush1.bf16.msra.mxu0 %v1063
  %1126 = vmatprep.subr.bf16.mxu0 0
  %1127 = vmatpush1.bf16.msra.mxu0 %v1064
  %1128 = vmatprep.subr.bf16.mxu0 0
  %1129 = vmatpush1.bf16.msra.mxu0 %v1065
  %1130 = vmatprep.mubr.bf16.mxu0 %v89
  %1131 = vmatmul.mubr.bf16.gmra.mrb[0].mxu0 %v88
  %v1132 = vpop.f32.mrb[0].mxu0
  %v1133 = vadd.f32 0.0, %v1132
  %v1134 = vpop.f32.mrb[0].mxu0
  %v1135 = vpop.f32.mrb[0].mxu0
  %v1136 = vadd.f32 0.0, %v1135
  %v1137 = vpop.f32.mrb[0].mxu0
  %1138 = vmatprep.mubr.bf16.mxu0 %v92
  %1139 = vmatmul.mubr.bf16.gmra.mrb[0].mxu0 %v91
  %v1140 = vpop.f32.mrb[0].mxu0
  %v1141 = vadd.f32 0.0, %v1140
  %v1142 = vpop.f32.mrb[0].mxu0
  %v1143 = vpop.f32.mrb[0].mxu0
  %v1144 = vadd.f32 0.0, %v1143
  %v1145 = vpop.f32.mrb[0].mxu0
  %1146 = vdwg.mxu0
  %1147 = vmatprep.subr.bf16.mxu0 0
  %1148 = vmatpush1.bf16.msra.mxu0 %v1066
  %1149 = vmatprep.subr.bf16.mxu0 0
  %1150 = vmatpush1.bf16.msra.mxu0 %v1067
  %1151 = vmatprep.subr.bf16.mxu0 0
  %1152 = vmatpush1.bf16.msra.mxu0 %v1068
  %1153 = vmatprep.subr.bf16.mxu0 0
  %1154 = vmatpush1.bf16.msra.mxu0 %v1069
  %1155 = vmatprep.subr.bf16.mxu0 0
  %1156 = vmatpush1.bf16.msra.mxu0 %v1070
  %1157 = vmatprep.subr.bf16.mxu0 0
  %1158 = vmatpush1.bf16.msra.mxu0 %v1071
  %1159 = vmatprep.subr.bf16.mxu0 0
  %1160 = vmatpush1.bf16.msra.mxu0 %v1096
  %1161 = vmatprep.subr.bf16.mxu0 0
  %1162 = vmatpush1.bf16.msra.mxu0 0
  %1163 = vmatprep.subr.bf16.mxu0 0
  %1164 = vmatpush1.bf16.msra.mxu0 0
  %1165 = vmatprep.subr.bf16.mxu0 0
  %1166 = vmatpush1.bf16.msra.mxu0 0
  %1167 = vmatprep.subr.bf16.mxu0 0
  %1168 = vmatpush1.bf16.msra.mxu0 0
  %1169 = vmatprep.subr.bf16.mxu0 0
  %1170 = vmatpush1.bf16.msra.mxu0 0
  %1171 = vmatprep.subr.bf16.mxu0 0
  %1172 = vmatpush1.bf16.msra.mxu0 0
  %1173 = vmatprep.subr.bf16.mxu0 0
  %1174 = vmatpush1.bf16.msra.mxu0 0
  %1175 = vmatprep.subr.bf16.mxu0 0
  %1176 = vmatpush1.bf16.msra.mxu0 0
  %1177 = vmatprep.subr.bf16.mxu0 0
  %1178 = vmatpush1.bf16.msra.mxu0 0
  %1179 = vmatprep.mubr.bf16.mxu0 0
  %1180 = vmatmul.mubr.bf16.gmra.mrb[0].mxu0 %v235
  %v1181 = vpop.f32.mrb[0].mxu0
  %v1182 = vadd.f32 %v1133, %v1181
  %v1183 = vpop.f32.mrb[0].mxu0
  %v1184 = vpop.f32.mrb[0].mxu0
  %v1185 = vadd.f32 %v1136, %v1184
  %v1186 = vpop.f32.mrb[0].mxu0
  %1187 = vmatprep.mubr.bf16.mxu0 0
  %1188 = vmatmul.mubr.bf16.gmra.mrb[0].mxu0 %v238
  %v1189 = vpop.f32.mrb[0].mxu0
  %v1190 = vadd.f32 %v1141, %v1189
  %v1191 = vpop.f32.mrb[0].mxu0
  %v1192 = vpop.f32.mrb[0].mxu0
  %v1193 = vadd.f32 %v1144, %v1192
  %v1194 = vpop.f32.mrb[0].mxu0
  %1195 = vdwg.mxu0
  %v1196 = vmax.f32 %v910, %v1182
  %v1197 = vmax.f32 %v911, %v1185
  %v1198 = vmax.f32 %v912, %v1190
  %v1199 = vmax.f32 %v913, %v1193
  %v1200 = vld [vmem:[%s2] sm:$0x1]
  %v1202 = vlaneseq
  %v1203 = vshrl.u32 %v1202, 7
  %v1204 = vsub.s32 0, %v1203
  %v1205 = vrot.slane %v1200, %v1204
  %v1207 = vadd.f32 %v1196, %v1205
  %v1208 = vadd.f32 %v1197, %v1205
  %v1209 = vadd.f32 %v1198, %v1205
  %v1210 = vadd.f32 %v1199, %v1205
  %v1211 = vmax.f32 %v1207, 0.0
  %v1212 = vmax.f32 %v1208, 0.0
  %v1213 = vmax.f32 %v1209, 0.0
  %v1214 = vmax.f32 %v1210, 0.0
  %v1215 = vpack.c.bf16 %v1212, %v1211
  %v1216 = vpack.c.bf16 %v1214, %v1213
  %v1219 = vunpack.c.l.b16 %v1215
  %v1220 = vunpack.c.h.b16 %v1215
  %v1221 = vunpack.c.l.b16 %v1216
  %v1222 = vunpack.c.h.b16 %v1216
  %v1223 = vpack.c.b16 %v1219, %v1219
  %v1224 = vpack.c.b16 %v1220, %v1220
  %v1225 = vpack.c.b16 %v1221, %v1221
  %v1226 = vpack.c.b16 %v1222, %v1222
  %1231 = vst [vmem:[%s3] sm:$0xf] %v1223
  %1232 = vst [vmem:[%s3 + $0x4] sm:$0xf] %v1224
  %1233 = vst [vmem:[%s3 + $0x8] sm:$0xf] %v1225
  %1234 = vst [vmem:[%s3 + $0xc] sm:$0xf] %v1226
  // Predicated region
  $region14: #{net_forward.4} parent=0 // pred_check
    _
  $region15: #{net_forward.4} parent=0 // pred_check_branch
    %1236 = sbr.rel (0) target = $region17
  $region16: #{net_forward.4} parent=0 // pred_region
    _
  $region17: #{net_forward.4} parent=0 // pred_fallthru
    _
  // Predicated region
  $region18: #{net_forward.4} parent=0 // pred_check
    _
  $region19: #{net_forward.4} parent=0 // pred_check_branch
    %1238 = sbr.rel (0) target = $region21
  $region20: #{net_forward.4} parent=0 // pred_region
    _
  $region21: #{net_forward.4} parent=0 // pred_fallthru
    _

</llo_original>
